<compile_context>
chip_gen: v7x
topology: tpu7x:2x2x1
jax: 0.10.0
libtpu: 0.0.40
codegen_flags: <defaults>
</compile_context>

<pallas_src>
import functools
import numpy as np
import jax
import jax.numpy as jnp
from jax.experimental import pallas as pl
from jax.experimental.pallas import tpu as pltpu

LANE = 128  # TPU lane width; every logical feature dim is zero-padded to this
_VMEM = pl.BlockSpec(memory_space=pltpu.MemorySpace.VMEM)


def _mm(a, b):
    # MXU matmul with f32 accumulation.
    return jnp.dot(a, b, preferred_element_type=jnp.float32)


# ----------------------- shared forward math (kernel body + pure-JAX reference) -----------------------

def _forward(wb, fb, pack2, *, n_layers, n_nodes, n_edges):
    """Lane-padded GraphTransformerNet forward.

    wb(name)   -> bf16 weight / incidence window from the weight slab
    fb(name)   -> f32 window from the feature/bias/BN slab
    pack2(a,b) -> bf16 [rows, 256] with `a` in lanes 0:128 and `b` in lanes 128:256

    Activations are [rows, 128] f32; logical features live in the low lanes, padded lanes are
    exact zeros and stay zero through every matmul / bias / BN / residual.
    """
    bf16 = jnp.bfloat16
    S, D, DT, PPT = wb('S'), wb('D'), wb('DT'), wb('PPT')

    # input_linear (float-feature path); in_feat_dropout = identity (eval)
    h = _mm(fb('h0').astype(bf16), wb('in_lin')) + fb('in_lin_b')
    e = fb('e0')

    for li in range(n_layers):
        k = lambda s: f'L{li}_{s}'
        h_in1 = h
        # fused Q|K|V projection (1/sqrt(d_head) pre-folded into the Q block; use_bias=False)
        qkv = _mm(h.astype(bf16), wb(k('Wqkv')))                       # [N, 3*128]
        q, kv = qkv[:, :LANE], qkv[:, LANE:]
        # fused proj_e | e_input_proj of this layer's edge input (bias only on the latter)
        ep = _mm(e.astype(bf16), wb(k('Wep')))                         # [E, 2*128]
        pe = ep[:, :LANE]                                              # proj_e(e)
        e_res = ep[:, LANE:] + fb(k('b_eres'))                         # e_input_proj(e_in1)
        # gather node projections onto edges via one-hot incidence (MXU)
        kv_src = _mm(S[:, :n_nodes], kv.astype(bf16))                  # [E, 2*128] = K_src|V_src
        q_dst = _mm(D[:, :n_nodes], q.astype(bf16))                    # [E, 128]
        k_src, v_src = kv_src[:, :LANE], kv_src[:, LANE:]
        # score = exp(clamp(per-head-sum(K_src*Q_dst/sqrt(d) * proj_e), -5, 5)), head-broadcast
        s = k_src * q_dst * pe
        sb = jnp.exp(jnp.clip(_mm(s.astype(bf16), PPT), -5.0, 5.0))    # [E, 128]
        m = v_src * sb                                                 # weighted messages
        # fused destination scatter-sum:  [wV | z] = D^T @ [m | score]
        agg = _mm(DT[:, :n_edges], pack2(m, sb))                       # [N, 2*128]
        wV, zb = agg[:, :LANE], agg[:, LANE:]
        h_attn = wV / (zb + 1e-6)          # exact division, as in the reference
        e_attn = pe                        # e_out = proj_e   (out_edge_features('proj_e'))
        # O_h / O_e + residual + eval-mode BatchNorm (folded scale/shift)
        h = _mm(h_attn.astype(bf16), wb(k('WOh'))) + fb(k('bOh'))
        en = _mm(e_attn.astype(bf16), wb(k('WOe'))) + fb(k('bOe'))
        h = (h_in1 + h) * fb(k('bn1h_s')) + fb(k('bn1h_b'))
        e = (e_res + en) * fb(k('bn1e_s')) + fb(k('bn1e_b'))
        h_in2, e_in2 = h, e
        # FFN (h): Linear -> ReLU -> Linear, residual, BN
        t = jnp.maximum(_mm(h.astype(bf16), wb(k('Wh1'))) + fb(k('bh1')), 0.0)
        h = _mm(t.astype(bf16), wb(k('Wh2'))) + fb(k('bh2'))
        h = (h_in2 + h) * fb(k('bn2h_s')) + fb(k('bn2h_b'))
        # FFN (e)
        t = jnp.maximum(_mm(e.astype(bf16), wb(k('We1'))) + fb(k('be1')), 0.0)
        e = _mm(t.astype(bf16), wb(k('We2'))) + fb(k('be2'))
        e = (e_in2 + e) * fb(k('bn2e_s')) + fb(k('bn2e_b'))

    # NodeClassificationMLP([hidden, n_classes]): embedding = h, output = Linear(h)
    logits = _mm(h.astype(bf16), wb('mlp')) + fb('mlp_b')
    return h, logits


# ----------------------------------- the Pallas kernel -----------------------------------

def _gt_net_kernel(w_ref, f_ref, out_ref, msb_ref, *, widx, fidx, n_layers, n_nodes, n_edges):
    def wb(name):
        r, c, nr, nc = widx[name]
        return w_ref[r:r + nr, c:c + nc]

    def fb(name):
        r, c, nr, nc = fidx[name]
        return f_ref[r:r + nr, c:c + nc]

    def pack2(a, b):
        # 128-lane-aligned halves staged in a VMEM scratch slab (no jnp.concatenate copy)
        msb_ref[:, :LANE] = a.astype(jnp.bfloat16)
        msb_ref[:, LANE:] = b.astype(jnp.bfloat16)
        return msb_ref[...]

    emb, logits = _forward(wb, fb, pack2, n_layers=n_layers, n_nodes=n_nodes, n_edges=n_edges)
    # lane-dense output slab: unmasked 128-lane stores
    out_ref[:, :LANE] = emb          # lanes [:hidden] valid
    out_ref[:, LANE:] = logits       # lanes [:n_classes] valid


def graph_transformer_net_forward(wslab, fslab, widx, fidx, *, n_layers, n_nodes, n_edges,
                                  hidden, n_classes):
    kern = functools.partial(_gt_net_kernel, widx=widx, fidx=fidx, n_layers=n_layers,
                             n_nodes=n_nodes, n_edges=n_edges)
    out = pl.pallas_call(
        kern,
        out_shape=jax.ShapeDtypeStruct((n_nodes, 2 * LANE), jnp.float32),
        in_specs=[_VMEM, _VMEM],
        out_specs=_VMEM,
        scratch_shapes=[pltpu.VMEM((n_edges, 2 * LANE), jnp.bfloat16)],
    )(wslab, fslab)
    return out[:, :hidden], out[:, LANE:LANE + n_classes]


def _reference_forward(wslab, fslab, widx, fidx, *, n_layers, n_nodes, n_edges):
    # Pure-JAX twin of the kernel body (same slabs, same op sequence) to validate lowering.
    def wb(name):
        r, c, nr, nc = widx[name]
        return wslab[r:r + nr, c:c + nc]

    def fb(name):
        r, c, nr, nc = fidx[name]
        return fslab[r:r + nr, c:c + nc]

    def pack2(a, b):
        return jnp.concatenate([a.astype(jnp.bfloat16), b.astype(jnp.bfloat16)], axis=-1)

    return _forward(wb, fb, pack2, n_layers=n_layers, n_nodes=n_nodes, n_edges=n_edges)


# ----------------------------------- slab packing -----------------------------------

def _pad2(a, rows, cols):
    a = jnp.asarray(a, jnp.float32)
    assert a.shape[0] <= rows and a.shape[1] <= cols, (a.shape, rows, cols)
    return jnp.pad(a, ((0, rows - a.shape[0]), (0, cols - a.shape[1])))


class _SlabPacker:
    """Packs named 2-D blocks into one [rows, width] slab.

    Blocks in one `add_stripe` call sit side by side along lanes (column offsets multiples
    of 128); stripes stack along rows (row offsets multiples of 8).  The index maps
    name -> (row_off, col_off, padded_rows, padded_cols) static Python ints.
    """

    def __init__(self, width, dtype):
        self.width, self.dtype = width, dtype
        self.stripes, self.index, self.nrows = [], {}, 0

    def add_stripe(self, blocks):
        height = -(-max(r for _, _, r, _ in blocks) // 8) * 8
        col, parts = 0, []
        for name, arr, r, c in blocks:
            self.index[name] = (self.nrows, col, r, c)
            parts.append(_pad2(arr, height, c))
            col += c
        assert col <= self.width
        stripe = jnp.concatenate(parts, axis=1) if len(parts) > 1 else parts[0]
        if col < self.width:
            stripe = jnp.pad(stripe, ((0, 0), (0, self.width - col)))
        self.stripes.append(stripe)
        self.nrows += height

    def finalize(self):
        return jnp.concatenate(self.stripes, axis=0).astype(self.dtype)


# ----------------------------------- deterministic init -----------------------------------

def _dense(key, din, dout, bias=True):
    kw, kb = jax.random.split(key)
    w = jax.random.normal(kw, (din, dout), jnp.float32) / np.sqrt(din)
    b = 0.1 * jax.random.normal(kb, (dout,), jnp.float32) if bias else jnp.zeros((dout,), jnp.float32)
    return w, b.reshape(1, dout)


def _bn(key, d):
    # eval-mode BatchNorm1d: running_mean=0, running_var=1, random affine -> scale/shift
    kg, kb = jax.random.split(key)
    gamma = 1.0 + 0.1 * jax.random.normal(kg, (d,), jnp.float32)
    beta = 0.1 * jax.random.normal(kb, (d,), jnp.float32)
    scale = gamma / jnp.sqrt(jnp.ones((d,)) + 1e-5)
    shift = beta - jnp.zeros((d,)) * scale
    return scale.reshape(1, d), shift.reshape(1, d)


def build_model(key, *, n_nodes, n_edges, in_dim, hidden, heads, edge_dim, n_classes, n_layers):
    d_head = hidden // heads
    kparam, kgraph, kh, ke = jax.random.split(key, 4)

    # graph: random edges -> one-hot incidence; PPT does per-head sum + broadcast in one pass
    ks, kd = jax.random.split(kgraph)
    src = jax.random.randint(ks, (n_edges,), 0, n_nodes)
    dst = jax.random.randint(kd, (n_edges,), 0, n_nodes)
    S = jax.nn.one_hot(src, n_nodes, dtype=jnp.float32)                    # [E, N]
    D = jax.nn.one_hot(dst, n_nodes, dtype=jnp.float32)                    # [E, N]
    P = jnp.repeat(jnp.eye(heads, dtype=jnp.float32), d_head, axis=0)      # [hidden, H]
    PPT = P @ P.T                                                          # [hidden, hidden], 0/1

    h0 = jax.random.normal(kh, (n_nodes, in_dim), jnp.float32)
    e0 = jax.random.normal(ke, (n_edges, edge_dim), jnp.float32)

    lk = jax.random.split(kparam, n_layers + 2)
    in_w, in_b = _dense(lk[0], in_dim, hidden)
    mlp_w, mlp_b = _dense(lk[1], hidden, n_classes)

    wp = _SlabPacker(3 * LANE, jnp.bfloat16)   # MXU operands: weights + incidence (bf16, 0/1 exact)
    fp = _SlabPacker(LANE, jnp.float32)        # f32: features, biases, folded BN scale/shift

    wp.add_stripe([('in_lin', in_w, LANE, LANE), ('mlp', mlp_w, LANE, LANE), ('PPT', PPT, LANE, LANE)])
    wp.add_stripe([('S', S, n_edges, LANE), ('D', D, n_edges, LANE)])
    wp.add_stripe([('DT', D.T, n_nodes, LANE)])

    fp.add_stripe([('h0', h0, n_nodes, LANE)])
    fp.add_stripe([('e0', e0, n_edges, LANE)])
    fp.add_stripe([('in_lin_b', in_b, 1, LANE)])
    fp.add_stripe([('mlp_b', mlp_b, 1, LANE)])

    for li in range(n_layers):
        in_edge = edge_dim if li == 0 else hidden
        kk = iter(jax.random.split(lk[2 + li], 16))
        wq, _ = _dense(next(kk), hidden, hidden, bias=False)
        wk, _ = _dense(next(kk), hidden, hidden, bias=False)
        wv, _ = _dense(next(kk), hidden, hidden, bias=False)
        wpe, _ = _dense(next(kk), in_edge, hidden, bias=False)     # proj_e (use_bias=False)
        wres, bres = _dense(next(kk), in_edge, hidden)             # e_input_proj (has bias)
        woh, boh = _dense(next(kk), hidden, hidden)
        woe, boe = _dense(next(kk), hidden, hidden)
        wh1, bh1 = _dense(next(kk), hidden, 2 * hidden)
        wh2, bh2 = _dense(next(kk), 2 * hidden, hidden)
        we1, be1 = _dense(next(kk), hidden, 2 * hidden)
        we2, be2 = _dense(next(kk), 2 * hidden, hidden)
        bn1h = _bn(next(kk), hidden); bn1e = _bn(next(kk), hidden)
        bn2h = _bn(next(kk), hidden); bn2e = _bn(next(kk), hidden)

        # fused Q|K|V (1/sqrt(d_head) folded into Q), each block padded to a 128-lane boundary
        wqkv = jnp.concatenate([_pad2(wq / np.sqrt(d_head), LANE, LANE),
                                _pad2(wk, LANE, LANE), _pad2(wv, LANE, LANE)], axis=1)
        # fused proj_e | e_input_proj
        wep = jnp.concatenate([_pad2(wpe, LANE, LANE), _pad2(wres, LANE, LANE)], axis=1)

        p = f'L{li}_'
        wp.add_stripe([(p + 'Wqkv', wqkv, LANE, 3 * LANE)])
        wp.add_stripe([(p + 'Wep', wep, LANE, 2 * LANE), (p + 'WOe', woe, LANE, LANE)])
        wp.add_stripe([(p + 'WOh', woh, LANE, LANE), (p + 'Wh1', wh1, LANE, LANE),
                       (p + 'Wh2', wh2, LANE, LANE)])
        wp.add_stripe([(p + 'We1', we1, LANE, LANE), (p + 'We2', we2, LANE, LANE)])

        for name, row in [('b_eres', bres), ('bOh', boh), ('bOe', boe),
                          ('bh1', bh1), ('bh2', bh2), ('be1', be1), ('be2', be2),
                          ('bn1h_s', bn1h[0]), ('bn1h_b', bn1h[1]),
                          ('bn1e_s', bn1e[0]), ('bn1e_b', bn1e[1]),
                          ('bn2h_s', bn2h[0]), ('bn2h_b', bn2h[1]),
                          ('bn2e_s', bn2e[0]), ('bn2e_b', bn2e[1])]:
            fp.add_stripe([(p + name, row, 1, LANE)])

    return wp.finalize(), fp.finalize(), wp.index, fp.index


# ----------------------------------- main -----------------------------------

if __name__ == "__main__":
    N, E = 16, 48                              # nodes, edges
    IN_DIM, HIDDEN, N_HEADS = 16, 32, 4        # in_dim, hidden_dim(=out_dim), num_heads
    EDGE_DIM, N_CLASSES, N_LAYERS = 8, 4, 2    # edge_feat_dim, n_classes, L

    wslab, fslab, widx, fidx = build_model(
        jax.random.PRNGKey(0), n_nodes=N, n_edges=E, in_dim=IN_DIM, hidden=HIDDEN,
        heads=N_HEADS, edge_dim=EDGE_DIM, n_classes=N_CLASSES, n_layers=N_LAYERS)

    fwd = jax.jit(lambda w, f: graph_transformer_net_forward(
        w, f, widx, fidx, n_layers=N_LAYERS, n_nodes=N, n_edges=E,
        hidden=HIDDEN, n_classes=N_CLASSES))
    embedding, output = fwd(wslab, fslab)
    jax.block_until_ready((embedding, output))

    # pure-JAX twin on the same slabs (validates the Pallas lowering numerically)
    ref_fn = jax.jit(lambda w, f: _reference_forward(
        w, f, widx, fidx, n_layers=N_LAYERS, n_nodes=N, n_edges=E))
    emb_ref, log_ref = ref_fn(wslab, fslab)
    emb_ref, log_ref = emb_ref[:, :HIDDEN], log_ref[:, :N_CLASSES]

    assert embedding.shape == (N, HIDDEN) and output.shape == (N, N_CLASSES)
    assert bool(jnp.isfinite(embedding).all()) and bool(jnp.isfinite(output).all())
    assert bool(jnp.allclose(embedding, emb_ref, atol=5e-2, rtol=5e-2))
    assert bool(jnp.allclose(output, log_ref, atol=5e-2, rtol=5e-2))
    print("KERNEL_OK")
</pallas_src>

<mosaic_0001>
module attributes {stable_mosaic.version = 11 : i64} {
  func.func @_gt_net_kernel(%arg0: memref<1216x384xbf16, #tpu.memory_space<vmem>>, %arg1: memref<320x128xf32, #tpu.memory_space<vmem>>, %arg2: memref<16x256xf32, #tpu.memory_space<vmem>>, %arg3: memref<48x256xbf16, #tpu.memory_space<vmem>>) attributes {dimension_semantics = [], scalar_prefetch = 0 : i64, scratch_operands = 1 : i64, tpu.core_type = #tpu.core_type<tc>} {
    %c128 = arith.constant 128 : index
    %c0 = arith.constant 0 : index
    %0 = vector.load %arg0[%c128, %c0] : memref<1216x384xbf16, #tpu.memory_space<vmem>>, vector<48x128xbf16>
    %c128_0 = arith.constant 128 : index
    %c128_1 = arith.constant 128 : index
    %1 = vector.load %arg0[%c128_0, %c128_1] : memref<1216x384xbf16, #tpu.memory_space<vmem>>, vector<48x128xbf16>
    %c176 = arith.constant 176 : index
    %c0_2 = arith.constant 0 : index
    %2 = vector.load %arg0[%c176, %c0_2] : memref<1216x384xbf16, #tpu.memory_space<vmem>>, vector<16x128xbf16>
    %c0_3 = arith.constant 0 : index
    %c256 = arith.constant 256 : index
    %3 = vector.load %arg0[%c0_3, %c256] : memref<1216x384xbf16, #tpu.memory_space<vmem>>, vector<128x128xbf16>
    %c0_4 = arith.constant 0 : index
    %c0_5 = arith.constant 0 : index
    %4 = vector.load %arg1[%c0_4, %c0_5] : memref<320x128xf32, #tpu.memory_space<vmem>>, vector<16x128xf32>
    %5 = arith.truncf %4 : vector<16x128xf32> to vector<16x128xbf16>
    %c0_6 = arith.constant 0 : index
    %c0_7 = arith.constant 0 : index
    %6 = vector.load %arg0[%c0_6, %c0_7] : memref<1216x384xbf16, #tpu.memory_space<vmem>>, vector<128x128xbf16>
    %cst = arith.constant dense<0.000000e+00> : vector<16x128xf32>
    %7 = tpu.matmul %5, %6, %cst {dimension_numbers = #tpu.dot_dimension_numbers<[1], [0], [0], [1], [0, 0, 1, 1], [], []>} : vector<16x128xbf16>, vector<128x128xbf16>, vector<16x128xf32> -> vector<16x128xf32>
    %c64 = arith.constant 64 : index
    %c0_8 = arith.constant 0 : index
    %8 = vector.load %arg1[%c64, %c0_8] : memref<320x128xf32, #tpu.memory_space<vmem>>, vector<1x128xf32>
    %9 = vector.broadcast %8 : vector<1x128xf32> to vector<16x128xf32>
    %10 = arith.addf %7, %9 : vector<16x128xf32>
    %c16 = arith.constant 16 : index
    %c0_9 = arith.constant 0 : index
    %11 = vector.load %arg1[%c16, %c0_9] : memref<320x128xf32, #tpu.memory_space<vmem>>, vector<48x128xf32>
    %12 = arith.truncf %10 : vector<16x128xf32> to vector<16x128xbf16>
    %c192 = arith.constant 192 : index
    %c0_10 = arith.constant 0 : index
    %13 = vector.load %arg0[%c192, %c0_10] : memref<1216x384xbf16, #tpu.memory_space<vmem>>, vector<128x384xbf16>
    %cst_11 = arith.constant dense<0.000000e+00> : vector<16x384xf32>
    %14 = tpu.matmul %12, %13, %cst_11 {dimension_numbers = #tpu.dot_dimension_numbers<[1], [0], [0], [1], [0, 0, 1, 1], [], []>} : vector<16x128xbf16>, vector<128x384xbf16>, vector<16x384xf32> -> vector<16x384xf32>
    %15 = vector.extract_strided_slice %14 {offsets = [0, 0], sizes = [16, 128], strides = [1, 1]} : vector<16x384xf32> to vector<16x128xf32>
    %16 = vector.extract_strided_slice %14 {offsets = [0, 128], sizes = [16, 256], strides = [1, 1]} : vector<16x384xf32> to vector<16x256xf32>
    %17 = arith.truncf %11 : vector<48x128xf32> to vector<48x128xbf16>
    %c320 = arith.constant 320 : index
    %c0_12 = arith.constant 0 : index
    %18 = vector.load %arg0[%c320, %c0_12] : memref<1216x384xbf16, #tpu.memory_space<vmem>>, vector<128x256xbf16>
    %cst_13 = arith.constant dense<0.000000e+00> : vector<48x256xf32>
    %19 = tpu.matmul %17, %18, %cst_13 {dimension_numbers = #tpu.dot_dimension_numbers<[1], [0], [0], [1], [0, 0, 1, 1], [], []>} : vector<48x128xbf16>, vector<128x256xbf16>, vector<48x256xf32> -> vector<48x256xf32>
    %20 = vector.extract_strided_slice %19 {offsets = [0, 0], sizes = [48, 128], strides = [1, 1]} : vector<48x256xf32> to vector<48x128xf32>
    %21 = vector.extract_strided_slice %19 {offsets = [0, 128], sizes = [48, 128], strides = [1, 1]} : vector<48x256xf32> to vector<48x128xf32>
    %c80 = arith.constant 80 : index
    %c0_14 = arith.constant 0 : index
    %22 = vector.load %arg1[%c80, %c0_14] : memref<320x128xf32, #tpu.memory_space<vmem>>, vector<1x128xf32>
    %23 = vector.broadcast %22 : vector<1x128xf32> to vector<48x128xf32>
    %24 = arith.addf %21, %23 : vector<48x128xf32>
    %25 = vector.extract_strided_slice %0 {offsets = [0, 0], sizes = [48, 16], strides = [1, 1]} : vector<48x128xbf16> to vector<48x16xbf16>
    %26 = arith.truncf %16 : vector<16x256xf32> to vector<16x256xbf16>
    %cst_15 = arith.constant dense<0.000000e+00> : vector<48x256xf32>
    %27 = tpu.matmul %25, %26, %cst_15 {dimension_numbers = #tpu.dot_dimension_numbers<[1], [0], [0], [1], [0, 0, 1, 1], [], []>} : vector<48x16xbf16>, vector<16x256xbf16>, vector<48x256xf32> -> vector<48x256xf32>
    %28 = vector.extract_strided_slice %1 {offsets = [0, 0], sizes = [48, 16], strides = [1, 1]} : vector<48x128xbf16> to vector<48x16xbf16>
    %29 = arith.truncf %15 : vector<16x128xf32> to vector<16x128xbf16>
    %cst_16 = arith.constant dense<0.000000e+00> : vector<48x128xf32>
    %30 = tpu.matmul %28, %29, %cst_16 {dimension_numbers = #tpu.dot_dimension_numbers<[1], [0], [0], [1], [0, 0, 1, 1], [], []>} : vector<48x16xbf16>, vector<16x128xbf16>, vector<48x128xf32> -> vector<48x128xf32>
    %31 = vector.extract_strided_slice %27 {offsets = [0, 0], sizes = [48, 128], strides = [1, 1]} : vector<48x256xf32> to vector<48x128xf32>
    %32 = vector.extract_strided_slice %27 {offsets = [0, 128], sizes = [48, 128], strides = [1, 1]} : vector<48x256xf32> to vector<48x128xf32>
    %33 = arith.mulf %31, %30 : vector<48x128xf32>
    %34 = arith.mulf %33, %20 : vector<48x128xf32>
    %35 = arith.truncf %34 : vector<48x128xf32> to vector<48x128xbf16>
    %cst_17 = arith.constant dense<0.000000e+00> : vector<48x128xf32>
    %36 = tpu.matmul %35, %3, %cst_17 {dimension_numbers = #tpu.dot_dimension_numbers<[1], [0], [0], [1], [0, 0, 1, 1], [], []>} : vector<48x128xbf16>, vector<128x128xbf16>, vector<48x128xf32> -> vector<48x128xf32>
    %cst_18 = arith.constant -5.000000e+00 : f32
    %cst_19 = arith.constant 5.000000e+00 : f32
    %37 = vector.broadcast %cst_18 : f32 to vector<48x128xf32>
    %38 = arith.maximumf %37, %36 : vector<48x128xf32>
    %39 = vector.broadcast %cst_19 : f32 to vector<48x128xf32>
    %40 = arith.minimumf %39, %38 : vector<48x128xf32>
    %41 = math.exp %40 : vector<48x128xf32>
    %42 = arith.mulf %32, %41 : vector<48x128xf32>
    %43 = vector.extract_strided_slice %2 {offsets = [0, 0], sizes = [16, 48], strides = [1, 1]} : vector<16x128xbf16> to vector<16x48xbf16>
    %44 = arith.truncf %42 : vector<48x128xf32> to vector<48x128xbf16>
    %c0_20 = arith.constant 0 : index
    %c0_21 = arith.constant 0 : index
    %45 = vector.load %arg3[%c0_20, %c0_21] : memref<48x256xbf16, #tpu.memory_space<vmem>>, vector<48x128xbf16>
    tpu.vector_store %arg3[%c0_20, %c0_21], %44 {strides = array<i32>} : memref<48x256xbf16, #tpu.memory_space<vmem>>, vector<48x128xbf16>,
    %46 = arith.truncf %41 : vector<48x128xf32> to vector<48x128xbf16>
    %c0_22 = arith.constant 0 : index
    %c128_23 = arith.constant 128 : index
    %47 = vector.load %arg3[%c0_22, %c128_23] : memref<48x256xbf16, #tpu.memory_space<vmem>>, vector<48x128xbf16>
    tpu.vector_store %arg3[%c0_22, %c128_23], %46 {strides = array<i32>} : memref<48x256xbf16, #tpu.memory_space<vmem>>, vector<48x128xbf16>,
    %c0_24 = arith.constant 0 : index
    %c0_25 = arith.constant 0 : index
    %48 = vector.load %arg3[%c0_24, %c0_25] : memref<48x256xbf16, #tpu.memory_space<vmem>>, vector<48x256xbf16>
    %cst_26 = arith.constant dense<0.000000e+00> : vector<16x256xf32>
    %49 = tpu.matmul %43, %48, %cst_26 {dimension_numbers = #tpu.dot_dimension_numbers<[1], [0], [0], [1], [0, 0, 1, 1], [], []>} : vector<16x48xbf16>, vector<48x256xbf16>, vector<16x256xf32> -> vector<16x256xf32>
    %50 = vector.extract_strided_slice %49 {offsets = [0, 0], sizes = [16, 128], strides = [1, 1]} : vector<16x256xf32> to vector<16x128xf32>
    %51 = vector.extract_strided_slice %49 {offsets = [0, 128], sizes = [16, 128], strides = [1, 1]} : vector<16x256xf32> to vector<16x128xf32>
    %cst_27 = arith.constant 9.99999997E-7 : f32
    %52 = vector.broadcast %cst_27 : f32 to vector<16x128xf32>
    %53 = arith.addf %51, %52 : vector<16x128xf32>
    %54 = arith.divf %50, %53 : vector<16x128xf32>
    %55 = arith.truncf %54 : vector<16x128xf32> to vector<16x128xbf16>
    %c448 = arith.constant 448 : index
    %c0_28 = arith.constant 0 : index
    %56 = vector.load %arg0[%c448, %c0_28] : memref<1216x384xbf16, #tpu.memory_space<vmem>>, vector<128x128xbf16>
    %cst_29 = arith.constant dense<0.000000e+00> : vector<16x128xf32>
    %57 = tpu.matmul %55, %56, %cst_29 {dimension_numbers = #tpu.dot_dimension_numbers<[1], [0], [0], [1], [0, 0, 1, 1], [], []>} : vector<16x128xbf16>, vector<128x128xbf16>, vector<16x128xf32> -> vector<16x128xf32>
    %c88 = arith.constant 88 : index
    %c0_30 = arith.constant 0 : index
    %58 = vector.load %arg1[%c88, %c0_30] : memref<320x128xf32, #tpu.memory_space<vmem>>, vector<1x128xf32>
    %59 = vector.broadcast %58 : vector<1x128xf32> to vector<16x128xf32>
    %60 = arith.addf %57, %59 : vector<16x128xf32>
    %61 = arith.truncf %20 : vector<48x128xf32> to vector<48x128xbf16>
    %c320_31 = arith.constant 320 : index
    %c256_32 = arith.constant 256 : index
    %62 = vector.load %arg0[%c320_31, %c256_32] : memref<1216x384xbf16, #tpu.memory_space<vmem>>, vector<128x128xbf16>
    %cst_33 = arith.constant dense<0.000000e+00> : vector<48x128xf32>
    %63 = tpu.matmul %61, %62, %cst_33 {dimension_numbers = #tpu.dot_dimension_numbers<[1], [0], [0], [1], [0, 0, 1, 1], [], []>} : vector<48x128xbf16>, vector<128x128xbf16>, vector<48x128xf32> -> vector<48x128xf32>
    %c96 = arith.constant 96 : index
    %c0_34 = arith.constant 0 : index
    %64 = vector.load %arg1[%c96, %c0_34] : memref<320x128xf32, #tpu.memory_space<vmem>>, vector<1x128xf32>
    %65 = vector.broadcast %64 : vector<1x128xf32> to vector<48x128xf32>
    %66 = arith.addf %63, %65 : vector<48x128xf32>
    %67 = arith.addf %10, %60 : vector<16x128xf32>
    %c136 = arith.constant 136 : index
    %c0_35 = arith.constant 0 : index
    %68 = vector.load %arg1[%c136, %c0_35] : memref<320x128xf32, #tpu.memory_space<vmem>>, vector<1x128xf32>
    %69 = vector.broadcast %68 : vector<1x128xf32> to vector<16x128xf32>
    %70 = arith.mulf %67, %69 : vector<16x128xf32>
    %c144 = arith.constant 144 : index
    %c0_36 = arith.constant 0 : index
    %71 = vector.load %arg1[%c144, %c0_36] : memref<320x128xf32, #tpu.memory_space<vmem>>, vector<1x128xf32>
    %72 = vector.broadcast %71 : vector<1x128xf32> to vector<16x128xf32>
    %73 = arith.addf %70, %72 : vector<16x128xf32>
    %74 = arith.addf %24, %66 : vector<48x128xf32>
    %c152 = arith.constant 152 : index
    %c0_37 = arith.constant 0 : index
    %75 = vector.load %arg1[%c152, %c0_37] : memref<320x128xf32, #tpu.memory_space<vmem>>, vector<1x128xf32>
    %76 = vector.broadcast %75 : vector<1x128xf32> to vector<48x128xf32>
    %77 = arith.mulf %74, %76 : vector<48x128xf32>
    %c160 = arith.constant 160 : index
    %c0_38 = arith.constant 0 : index
    %78 = vector.load %arg1[%c160, %c0_38] : memref<320x128xf32, #tpu.memory_space<vmem>>, vector<1x128xf32>
    %79 = vector.broadcast %78 : vector<1x128xf32> to vector<48x128xf32>
    %80 = arith.addf %77, %79 : vector<48x128xf32>
    %81 = arith.truncf %73 : vector<16x128xf32> to vector<16x128xbf16>
    %c448_39 = arith.constant 448 : index
    %c128_40 = arith.constant 128 : index
    %82 = vector.load %arg0[%c448_39, %c128_40] : memref<1216x384xbf16, #tpu.memory_space<vmem>>, vector<128x128xbf16>
    %cst_41 = arith.constant dense<0.000000e+00> : vector<16x128xf32>
    %83 = tpu.matmul %81, %82, %cst_41 {dimension_numbers = #tpu.dot_dimension_numbers<[1], [0], [0], [1], [0, 0, 1, 1], [], []>} : vector<16x128xbf16>, vector<128x128xbf16>, vector<16x128xf32> -> vector<16x128xf32>
    %c104 = arith.constant 104 : index
    %c0_42 = arith.constant 0 : index
    %84 = vector.load %arg1[%c104, %c0_42] : memref<320x128xf32, #tpu.memory_space<vmem>>, vector<1x128xf32>
    %85 = vector.broadcast %84 : vector<1x128xf32> to vector<16x128xf32>
    %86 = arith.addf %83, %85 : vector<16x128xf32>
    %cst_43 = arith.constant 0.000000e+00 : f32
    %87 = vector.broadcast %cst_43 : f32 to vector<16x128xf32>
    %88 = arith.maximumf %86, %87 : vector<16x128xf32>
    %89 = arith.truncf %88 : vector<16x128xf32> to vector<16x128xbf16>
    %c448_44 = arith.constant 448 : index
    %c256_45 = arith.constant 256 : index
    %90 = vector.load %arg0[%c448_44, %c256_45] : memref<1216x384xbf16, #tpu.memory_space<vmem>>, vector<128x128xbf16>
    %cst_46 = arith.constant dense<0.000000e+00> : vector<16x128xf32>
    %91 = tpu.matmul %89, %90, %cst_46 {dimension_numbers = #tpu.dot_dimension_numbers<[1], [0], [0], [1], [0, 0, 1, 1], [], []>} : vector<16x128xbf16>, vector<128x128xbf16>, vector<16x128xf32> -> vector<16x128xf32>
    %c112 = arith.constant 112 : index
    %c0_47 = arith.constant 0 : index
    %92 = vector.load %arg1[%c112, %c0_47] : memref<320x128xf32, #tpu.memory_space<vmem>>, vector<1x128xf32>
    %93 = vector.broadcast %92 : vector<1x128xf32> to vector<16x128xf32>
    %94 = arith.addf %91, %93 : vector<16x128xf32>
    %95 = arith.addf %73, %94 : vector<16x128xf32>
    %c168 = arith.constant 168 : index
    %c0_48 = arith.constant 0 : index
    %96 = vector.load %arg1[%c168, %c0_48] : memref<320x128xf32, #tpu.memory_space<vmem>>, vector<1x128xf32>
    %97 = vector.broadcast %96 : vector<1x128xf32> to vector<16x128xf32>
    %98 = arith.mulf %95, %97 : vector<16x128xf32>
    %c176_49 = arith.constant 176 : index
    %c0_50 = arith.constant 0 : index
    %99 = vector.load %arg1[%c176_49, %c0_50] : memref<320x128xf32, #tpu.memory_space<vmem>>, vector<1x128xf32>
    %100 = vector.broadcast %99 : vector<1x128xf32> to vector<16x128xf32>
    %101 = arith.addf %98, %100 : vector<16x128xf32>
    %102 = arith.truncf %80 : vector<48x128xf32> to vector<48x128xbf16>
    %c576 = arith.constant 576 : index
    %c0_51 = arith.constant 0 : index
    %103 = vector.load %arg0[%c576, %c0_51] : memref<1216x384xbf16, #tpu.memory_space<vmem>>, vector<128x128xbf16>
    %cst_52 = arith.constant dense<0.000000e+00> : vector<48x128xf32>
    %104 = tpu.matmul %102, %103, %cst_52 {dimension_numbers = #tpu.dot_dimension_numbers<[1], [0], [0], [1], [0, 0, 1, 1], [], []>} : vector<48x128xbf16>, vector<128x128xbf16>, vector<48x128xf32> -> vector<48x128xf32>
    %c120 = arith.constant 120 : index
    %c0_53 = arith.constant 0 : index
    %105 = vector.load %arg1[%c120, %c0_53] : memref<320x128xf32, #tpu.memory_space<vmem>>, vector<1x128xf32>
    %106 = vector.broadcast %105 : vector<1x128xf32> to vector<48x128xf32>
    %107 = arith.addf %104, %106 : vector<48x128xf32>
    %cst_54 = arith.constant 0.000000e+00 : f32
    %108 = vector.broadcast %cst_54 : f32 to vector<48x128xf32>
    %109 = arith.maximumf %107, %108 : vector<48x128xf32>
    %110 = arith.truncf %109 : vector<48x128xf32> to vector<48x128xbf16>
    %c576_55 = arith.constant 576 : index
    %c128_56 = arith.constant 128 : index
    %111 = vector.load %arg0[%c576_55, %c128_56] : memref<1216x384xbf16, #tpu.memory_space<vmem>>, vector<128x128xbf16>
    %cst_57 = arith.constant dense<0.000000e+00> : vector<48x128xf32>
    %112 = tpu.matmul %110, %111, %cst_57 {dimension_numbers = #tpu.dot_dimension_numbers<[1], [0], [0], [1], [0, 0, 1, 1], [], []>} : vector<48x128xbf16>, vector<128x128xbf16>, vector<48x128xf32> -> vector<48x128xf32>
    %c128_58 = arith.constant 128 : index
    %c0_59 = arith.constant 0 : index
    %113 = vector.load %arg1[%c128_58, %c0_59] : memref<320x128xf32, #tpu.memory_space<vmem>>, vector<1x128xf32>
    %114 = vector.broadcast %113 : vector<1x128xf32> to vector<48x128xf32>
    %115 = arith.addf %112, %114 : vector<48x128xf32>
    %116 = arith.addf %80, %115 : vector<48x128xf32>
    %c184 = arith.constant 184 : index
    %c0_60 = arith.constant 0 : index
    %117 = vector.load %arg1[%c184, %c0_60] : memref<320x128xf32, #tpu.memory_space<vmem>>, vector<1x128xf32>
    %118 = vector.broadcast %117 : vector<1x128xf32> to vector<48x128xf32>
    %119 = arith.mulf %116, %118 : vector<48x128xf32>
    %c192_61 = arith.constant 192 : index
    %c0_62 = arith.constant 0 : index
    %120 = vector.load %arg1[%c192_61, %c0_62] : memref<320x128xf32, #tpu.memory_space<vmem>>, vector<1x128xf32>
    %121 = vector.broadcast %120 : vector<1x128xf32> to vector<48x128xf32>
    %122 = arith.addf %119, %121 : vector<48x128xf32>
    %123 = arith.truncf %101 : vector<16x128xf32> to vector<16x128xbf16>
    %c704 = arith.constant 704 : index
    %c0_63 = arith.constant 0 : index
    %124 = vector.load %arg0[%c704, %c0_63] : memref<1216x384xbf16, #tpu.memory_space<vmem>>, vector<128x384xbf16>
    %cst_64 = arith.constant dense<0.000000e+00> : vector<16x384xf32>
    %125 = tpu.matmul %123, %124, %cst_64 {dimension_numbers = #tpu.dot_dimension_numbers<[1], [0], [0], [1], [0, 0, 1, 1], [], []>} : vector<16x128xbf16>, vector<128x384xbf16>, vector<16x384xf32> -> vector<16x384xf32>
    %126 = vector.extract_strided_slice %125 {offsets = [0, 0], sizes = [16, 128], strides = [1, 1]} : vector<16x384xf32> to vector<16x128xf32>
    %127 = vector.extract_strided_slice %125 {offsets = [0, 128], sizes = [16, 256], strides = [1, 1]} : vector<16x384xf32> to vector<16x256xf32>
    %128 = arith.truncf %122 : vector<48x128xf32> to vector<48x128xbf16>
    %c832 = arith.constant 832 : index
    %c0_65 = arith.constant 0 : index
    %129 = vector.load %arg0[%c832, %c0_65] : memref<1216x384xbf16, #tpu.memory_space<vmem>>, vector<128x256xbf16>
    %cst_66 = arith.constant dense<0.000000e+00> : vector<48x256xf32>
    %130 = tpu.matmul %128, %129, %cst_66 {dimension_numbers = #tpu.dot_dimension_numbers<[1], [0], [0], [1], [0, 0, 1, 1], [], []>} : vector<48x128xbf16>, vector<128x256xbf16>, vector<48x256xf32> -> vector<48x256xf32>
    %131 = vector.extract_strided_slice %130 {offsets = [0, 0], sizes = [48, 128], strides = [1, 1]} : vector<48x256xf32> to vector<48x128xf32>
    %132 = vector.extract_strided_slice %0 {offsets = [0, 0], sizes = [48, 16], strides = [1, 1]} : vector<48x128xbf16> to vector<48x16xbf16>
    %133 = arith.truncf %127 : vector<16x256xf32> to vector<16x256xbf16>
    %cst_67 = arith.constant dense<0.000000e+00> : vector<48x256xf32>
    %134 = tpu.matmul %132, %133, %cst_67 {dimension_numbers = #tpu.dot_dimension_numbers<[1], [0], [0], [1], [0, 0, 1, 1], [], []>} : vector<48x16xbf16>, vector<16x256xbf16>, vector<48x256xf32> -> vector<48x256xf32>
    %135 = vector.extract_strided_slice %1 {offsets = [0, 0], sizes = [48, 16], strides = [1, 1]} : vector<48x128xbf16> to vector<48x16xbf16>
    %136 = arith.truncf %126 : vector<16x128xf32> to vector<16x128xbf16>
    %cst_68 = arith.constant dense<0.000000e+00> : vector<48x128xf32>
    %137 = tpu.matmul %135, %136, %cst_68 {dimension_numbers = #tpu.dot_dimension_numbers<[1], [0], [0], [1], [0, 0, 1, 1], [], []>} : vector<48x16xbf16>, vector<16x128xbf16>, vector<48x128xf32> -> vector<48x128xf32>
    %138 = vector.extract_strided_slice %134 {offsets = [0, 0], sizes = [48, 128], strides = [1, 1]} : vector<48x256xf32> to vector<48x128xf32>
    %139 = vector.extract_strided_slice %134 {offsets = [0, 128], sizes = [48, 128], strides = [1, 1]} : vector<48x256xf32> to vector<48x128xf32>
    %140 = arith.mulf %138, %137 : vector<48x128xf32>
    %141 = arith.mulf %140, %131 : vector<48x128xf32>
    %142 = arith.truncf %141 : vector<48x128xf32> to vector<48x128xbf16>
    %cst_69 = arith.constant dense<0.000000e+00> : vector<48x128xf32>
    %143 = tpu.matmul %142, %3, %cst_69 {dimension_numbers = #tpu.dot_dimension_numbers<[1], [0], [0], [1], [0, 0, 1, 1], [], []>} : vector<48x128xbf16>, vector<128x128xbf16>, vector<48x128xf32> -> vector<48x128xf32>
    %cst_70 = arith.constant -5.000000e+00 : f32
    %cst_71 = arith.constant 5.000000e+00 : f32
    %144 = vector.broadcast %cst_70 : f32 to vector<48x128xf32>
    %145 = arith.maximumf %144, %143 : vector<48x128xf32>
    %146 = vector.broadcast %cst_71 : f32 to vector<48x128xf32>
    %147 = arith.minimumf %146, %145 : vector<48x128xf32>
    %148 = math.exp %147 : vector<48x128xf32>
    %149 = arith.mulf %139, %148 : vector<48x128xf32>
    %150 = vector.extract_strided_slice %2 {offsets = [0, 0], sizes = [16, 48], strides = [1, 1]} : vector<16x128xbf16> to vector<16x48xbf16>
    %151 = arith.truncf %149 : vector<48x128xf32> to vector<48x128xbf16>
    %c0_72 = arith.constant 0 : index
    %c0_73 = arith.constant 0 : index
    %152 = vector.load %arg3[%c0_72, %c0_73] : memref<48x256xbf16, #tpu.memory_space<vmem>>, vector<48x128xbf16>
    tpu.vector_store %arg3[%c0_72, %c0_73], %151 {strides = array<i32>} : memref<48x256xbf16, #tpu.memory_space<vmem>>, vector<48x128xbf16>,
    %153 = arith.truncf %148 : vector<48x128xf32> to vector<48x128xbf16>
    %c0_74 = arith.constant 0 : index
    %c128_75 = arith.constant 128 : index
    %154 = vector.load %arg3[%c0_74, %c128_75] : memref<48x256xbf16, #tpu.memory_space<vmem>>, vector<48x128xbf16>
    tpu.vector_store %arg3[%c0_74, %c128_75], %153 {strides = array<i32>} : memref<48x256xbf16, #tpu.memory_space<vmem>>, vector<48x128xbf16>,
    %c0_76 = arith.constant 0 : index
    %c0_77 = arith.constant 0 : index
    %155 = vector.load %arg3[%c0_76, %c0_77] : memref<48x256xbf16, #tpu.memory_space<vmem>>, vector<48x256xbf16>
    %cst_78 = arith.constant dense<0.000000e+00> : vector<16x256xf32>
    %156 = tpu.matmul %150, %155, %cst_78 {dimension_numbers = #tpu.dot_dimension_numbers<[1], [0], [0], [1], [0, 0, 1, 1], [], []>} : vector<16x48xbf16>, vector<48x256xbf16>, vector<16x256xf32> -> vector<16x256xf32>
    %157 = vector.extract_strided_slice %156 {offsets = [0, 0], sizes = [16, 128], strides = [1, 1]} : vector<16x256xf32> to vector<16x128xf32>
    %158 = vector.extract_strided_slice %156 {offsets = [0, 128], sizes = [16, 128], strides = [1, 1]} : vector<16x256xf32> to vector<16x128xf32>
    %cst_79 = arith.constant 9.99999997E-7 : f32
    %159 = vector.broadcast %cst_79 : f32 to vector<16x128xf32>
    %160 = arith.addf %158, %159 : vector<16x128xf32>
    %161 = arith.divf %157, %160 : vector<16x128xf32>
    %162 = arith.truncf %161 : vector<16x128xf32> to vector<16x128xbf16>
    %c960 = arith.constant 960 : index
    %c0_80 = arith.constant 0 : index
    %163 = vector.load %arg0[%c960, %c0_80] : memref<1216x384xbf16, #tpu.memory_space<vmem>>, vector<128x128xbf16>
    %cst_81 = arith.constant dense<0.000000e+00> : vector<16x128xf32>
    %164 = tpu.matmul %162, %163, %cst_81 {dimension_numbers = #tpu.dot_dimension_numbers<[1], [0], [0], [1], [0, 0, 1, 1], [], []>} : vector<16x128xbf16>, vector<128x128xbf16>, vector<16x128xf32> -> vector<16x128xf32>
    %c208 = arith.constant 208 : index
    %c0_82 = arith.constant 0 : index
    %165 = vector.load %arg1[%c208, %c0_82] : memref<320x128xf32, #tpu.memory_space<vmem>>, vector<1x128xf32>
    %166 = vector.broadcast %165 : vector<1x128xf32> to vector<16x128xf32>
    %167 = arith.addf %164, %166 : vector<16x128xf32>
    %168 = arith.addf %101, %167 : vector<16x128xf32>
    %c256_83 = arith.constant 256 : index
    %c0_84 = arith.constant 0 : index
    %169 = vector.load %arg1[%c256_83, %c0_84] : memref<320x128xf32, #tpu.memory_space<vmem>>, vector<1x128xf32>
    %170 = vector.broadcast %169 : vector<1x128xf32> to vector<16x128xf32>
    %171 = arith.mulf %168, %170 : vector<16x128xf32>
    %c264 = arith.constant 264 : index
    %c0_85 = arith.constant 0 : index
    %172 = vector.load %arg1[%c264, %c0_85] : memref<320x128xf32, #tpu.memory_space<vmem>>, vector<1x128xf32>
    %173 = vector.broadcast %172 : vector<1x128xf32> to vector<16x128xf32>
    %174 = arith.addf %171, %173 : vector<16x128xf32>
    %175 = arith.truncf %174 : vector<16x128xf32> to vector<16x128xbf16>
    %c960_86 = arith.constant 960 : index
    %c128_87 = arith.constant 128 : index
    %176 = vector.load %arg0[%c960_86, %c128_87] : memref<1216x384xbf16, #tpu.memory_space<vmem>>, vector<128x128xbf16>
    %cst_88 = arith.constant dense<0.000000e+00> : vector<16x128xf32>
    %177 = tpu.matmul %175, %176, %cst_88 {dimension_numbers = #tpu.dot_dimension_numbers<[1], [0], [0], [1], [0, 0, 1, 1], [], []>} : vector<16x128xbf16>, vector<128x128xbf16>, vector<16x128xf32> -> vector<16x128xf32>
    %c224 = arith.constant 224 : index
    %c0_89 = arith.constant 0 : index
    %178 = vector.load %arg1[%c224, %c0_89] : memref<320x128xf32, #tpu.memory_space<vmem>>, vector<1x128xf32>
    %179 = vector.broadcast %178 : vector<1x128xf32> to vector<16x128xf32>
    %180 = arith.addf %177, %179 : vector<16x128xf32>
    %cst_90 = arith.constant 0.000000e+00 : f32
    %181 = vector.broadcast %cst_90 : f32 to vector<16x128xf32>
    %182 = arith.maximumf %180, %181 : vector<16x128xf32>
    %183 = arith.truncf %182 : vector<16x128xf32> to vector<16x128xbf16>
    %c960_91 = arith.constant 960 : index
    %c256_92 = arith.constant 256 : index
    %184 = vector.load %arg0[%c960_91, %c256_92] : memref<1216x384xbf16, #tpu.memory_space<vmem>>, vector<128x128xbf16>
    %cst_93 = arith.constant dense<0.000000e+00> : vector<16x128xf32>
    %185 = tpu.matmul %183, %184, %cst_93 {dimension_numbers = #tpu.dot_dimension_numbers<[1], [0], [0], [1], [0, 0, 1, 1], [], []>} : vector<16x128xbf16>, vector<128x128xbf16>, vector<16x128xf32> -> vector<16x128xf32>
    %c232 = arith.constant 232 : index
    %c0_94 = arith.constant 0 : index
    %186 = vector.load %arg1[%c232, %c0_94] : memref<320x128xf32, #tpu.memory_space<vmem>>, vector<1x128xf32>
    %187 = vector.broadcast %186 : vector<1x128xf32> to vector<16x128xf32>
    %188 = arith.addf %185, %187 : vector<16x128xf32>
    %189 = arith.addf %174, %188 : vector<16x128xf32>
    %c288 = arith.constant 288 : index
    %c0_95 = arith.constant 0 : index
    %190 = vector.load %arg1[%c288, %c0_95] : memref<320x128xf32, #tpu.memory_space<vmem>>, vector<1x128xf32>
    %191 = vector.broadcast %190 : vector<1x128xf32> to vector<16x128xf32>
    %192 = arith.mulf %189, %191 : vector<16x128xf32>
    %c296 = arith.constant 296 : index
    %c0_96 = arith.constant 0 : index
    %193 = vector.load %arg1[%c296, %c0_96] : memref<320x128xf32, #tpu.memory_space<vmem>>, vector<1x128xf32>
    %194 = vector.broadcast %193 : vector<1x128xf32> to vector<16x128xf32>
    %195 = arith.addf %192, %194 : vector<16x128xf32>
    %196 = arith.truncf %195 : vector<16x128xf32> to vector<16x128xbf16>
    %c0_97 = arith.constant 0 : index
    %c128_98 = arith.constant 128 : index
    %197 = vector.load %arg0[%c0_97, %c128_98] : memref<1216x384xbf16, #tpu.memory_space<vmem>>, vector<128x128xbf16>
    %cst_99 = arith.constant dense<0.000000e+00> : vector<16x128xf32>
    %198 = tpu.matmul %196, %197, %cst_99 {dimension_numbers = #tpu.dot_dimension_numbers<[1], [0], [0], [1], [0, 0, 1, 1], [], []>} : vector<16x128xbf16>, vector<128x128xbf16>, vector<16x128xf32> -> vector<16x128xf32>
    %c72 = arith.constant 72 : index
    %c0_100 = arith.constant 0 : index
    %199 = vector.load %arg1[%c72, %c0_100] : memref<320x128xf32, #tpu.memory_space<vmem>>, vector<1x128xf32>
    %200 = vector.broadcast %199 : vector<1x128xf32> to vector<16x128xf32>
    %201 = arith.addf %198, %200 : vector<16x128xf32>
    %c0_101 = arith.constant 0 : index
    %c0_102 = arith.constant 0 : index
    %202 = vector.load %arg2[%c0_101, %c0_102] : memref<16x256xf32, #tpu.memory_space<vmem>>, vector<16x128xf32>
    tpu.vector_store %arg2[%c0_101, %c0_102], %195 {strides = array<i32>} : memref<16x256xf32, #tpu.memory_space<vmem>>, vector<16x128xf32>,
    %c0_103 = arith.constant 0 : index
    %c128_104 = arith.constant 128 : index
    %203 = vector.load %arg2[%c0_103, %c128_104] : memref<16x256xf32, #tpu.memory_space<vmem>>, vector<16x128xf32>
    tpu.vector_store %arg2[%c0_103, %c128_104], %201 {strides = array<i32>} : memref<16x256xf32, #tpu.memory_space<vmem>>, vector<16x128xf32>,
    return
  }
}

</mosaic_0001>

<llo_original>
// kernel: _lambda_.1
$region0: #{_lambda_.1}
  #allocation0 [shape = 'u32[]', space=smem, size = 0x4, offset = 0x4, fixed_abs, tag = 'smem constant byte address 0x4 - core index']
  #allocation1 [shape = 'u32[144,128]{1,0:T(1,128)}', space=vmem, size = 0x12000, scoped, tag = 'internal scratch']
  #allocation2 [shape = 'bf16[48,256]{1,0:T(16,128)(2,1)}', space=vmem, size = 0x6000, scoped, tag = 'scratch operand']
  %s0 = inlined_call_operand.hbm [shape: bf16[1216,384], index: 0, kind: input, shape index: {}]
  %s1 = inlined_call_operand.hbm [shape: f32[320,128], index: 1, kind: input, shape index: {}]
  %s2 = inlined_call_operand.vmem [shape: f32[16,256], index: 2, kind: output, shape index: {}]
  %s3 = sld [smem:[#allocation0]]
  $region26: #{_lambda_.1} parent=0
    _
  %s5 = ssub.s32 1, %s3
  %s6 = scalar_select 0, %s5, %s3
  $region1: #{_lambda_.1} parent=0
    #allocation3 [shape = 'u8[933888]{0}', space=vmem, size = 0xe4000, scoped, tag = 'input window, operand 0, single buffered']
    #allocation4 [shape = 's32[1]{0}', space=sflag, size = 0x4, scoped, tag = 'scoped memory for _lambda_.1']
    #allocation5 [shape = 'u8[163840]{0}', space=vmem, size = 0x28000, scoped, tag = 'input window, operand 1, single buffered']
    #allocation6 [shape = 's32[1]{0}', space=sflag, size = 0x4, scoped, tag = 'scoped memory for _lambda_.1']
    %7 = vsyncpa [#allocation4], 0
    %8 = vsyncpa [#allocation6], 0
    // Predicated region
    $region2: #{_lambda_.1} parent=1 // pred_check
      _
    $region3: #{_lambda_.1} parent=1 // pred_check_branch
      %10 = sbr.rel (0) target = $region5
    $region4: #{_lambda_.1} parent=1 // pred_region
      %s12 = ssub.s32 29184, 29184
      %13 = vsyncadd [#allocation4], %s12
      %s14 = sshll.u32 [#allocation3], 4
      %s15 = int_to_ptr.vmem [resolvable:$true] %s14
      %20 = dma.hbm_to_vmem [thread:$0]  %s0, 29184, %s15, [#allocation4], 192, 192, 12
    $region5: #{_lambda_.1} parent=1 // pred_fallthru
      _
    // Predicated region
    $region6: #{_lambda_.1} parent=1 // pred_check
      _
    $region7: #{_lambda_.1} parent=1 // pred_check_branch
      %22 = sbr.rel (0) target = $region9
    $region8: #{_lambda_.1} parent=1 // pred_region
      %s24 = ssub.s32 5120, 5120
      %25 = vsyncadd [#allocation6], %s24
      %s26 = sshll.u32 [#allocation5], 4
      %s27 = int_to_ptr.vmem [resolvable:$true] %s26
      %32 = dma.hbm_to_vmem [thread:$0]  %s1, 5120, %s27, [#allocation6], 128, 128, 8
    $region9: #{_lambda_.1} parent=1 // pred_fallthru
      _
    // Predicated region
    $region10: #{_lambda_.1} parent=1 // pred_check
      _
    $region11: #{_lambda_.1} parent=1 // pred_check_branch
      %34 = sbr.rel (0) target = $region13
    $region12: #{_lambda_.1} parent=1 // pred_region
      %35 = dma.done [#allocation4], 29184
    $region13: #{_lambda_.1} parent=1 // pred_fallthru
      _
    // Predicated region
    $region14: #{_lambda_.1} parent=1 // pred_check
      _
    $region15: #{_lambda_.1} parent=1 // pred_check_branch
      %37 = sbr.rel (0) target = $region17
    $region16: #{_lambda_.1} parent=1 // pred_region
      %38 = dma.done [#allocation6], 5120
    $region17: #{_lambda_.1} parent=1 // pred_fallthru
      _
    %v40 = vld [vmem:[#allocation3 + $0xc0] sm:$0xf]
    %v41 = vld [vmem:[#allocation3 + $0xcc] sm:$0xf]
    %v42 = vld [vmem:[#allocation3 + $0xd8] sm:$0xf]
    %v43 = vld [vmem:[#allocation3 + $0xe4] sm:$0xf]
    %v44 = vld [vmem:[#allocation3 + $0xf0] sm:$0xf]
    %v45 = vld [vmem:[#allocation3 + $0xfc] sm:$0xf]
    %v46 = vld [vmem:[#allocation3 + $0xc4] sm:$0xf]
    %v47 = vld [vmem:[#allocation3 + $0xd0] sm:$0xf]
    %v48 = vld [vmem:[#allocation3 + $0xdc] sm:$0xf]
    %v49 = vld [vmem:[#allocation3 + $0xe8] sm:$0xf]
    %v50 = vld [vmem:[#allocation3 + $0xf4] sm:$0xf]
    %v51 = vld [vmem:[#allocation3 + $0x100] sm:$0xf]
    %v52 = vld [vmem:[#allocation3 + $0x108] sm:$0xf]
    %v53 = vld [vmem:[#allocation3 + $0x114] sm:$0xf]
    %v54 = vld [vmem:[#allocation3 + $0x8] sm:$0xf]
    %v55 = vld [vmem:[#allocation3 + $0x14] sm:$0xf]
    %v56 = vld [vmem:[#allocation3 + $0x20] sm:$0xf]
    %v57 = vld [vmem:[#allocation3 + $0x2c] sm:$0xf]
    %v58 = vld [vmem:[#allocation3 + $0x38] sm:$0xf]
    %v59 = vld [vmem:[#allocation3 + $0x44] sm:$0xf]
    %v60 = vld [vmem:[#allocation3 + $0x50] sm:$0xf]
    %v61 = vld [vmem:[#allocation3 + $0x5c] sm:$0xf]
    %v62 = vld [vmem:[#allocation3 + $0x68] sm:$0xf]
    %v63 = vld [vmem:[#allocation3 + $0x74] sm:$0xf]
    %v64 = vld [vmem:[#allocation3 + $0x80] sm:$0xf]
    %v65 = vld [vmem:[#allocation3 + $0x8c] sm:$0xf]
    %v66 = vld [vmem:[#allocation3 + $0x98] sm:$0xf]
    %v67 = vld [vmem:[#allocation3 + $0xa4] sm:$0xf]
    %v68 = vld [vmem:[#allocation3 + $0xb0] sm:$0xf]
    %v69 = vld [vmem:[#allocation3 + $0xbc] sm:$0xf]
    %v70 = vld [vmem:[#allocation5] sm:$0xff]
    %v71 = vld [vmem:[#allocation5 + $0x8] sm:$0xff]
    %v72 = vpack.c.bf16 %v71, %v70
    %v73 = vld [vmem:[#allocation3] sm:$0xf]
    %v74 = vld [vmem:[#allocation3 + $0xc] sm:$0xf]
    %v75 = vld [vmem:[#allocation3 + $0x18] sm:$0xf]
    %v76 = vld [vmem:[#allocation3 + $0x24] sm:$0xf]
    %v77 = vld [vmem:[#allocation3 + $0x30] sm:$0xf]
    %v78 = vld [vmem:[#allocation3 + $0x3c] sm:$0xf]
    %v79 = vld [vmem:[#allocation3 + $0x48] sm:$0xf]
    %v80 = vld [vmem:[#allocation3 + $0x54] sm:$0xf]
    %v81 = vld [vmem:[#allocation3 + $0x60] sm:$0xf]
    %v82 = vld [vmem:[#allocation3 + $0x6c] sm:$0xf]
    %v83 = vld [vmem:[#allocation3 + $0x78] sm:$0xf]
    %v84 = vld [vmem:[#allocation3 + $0x84] sm:$0xf]
    %v85 = vld [vmem:[#allocation3 + $0x90] sm:$0xf]
    %v86 = vld [vmem:[#allocation3 + $0x9c] sm:$0xf]
    %v87 = vld [vmem:[#allocation3 + $0xa8] sm:$0xf]
    %v88 = vld [vmem:[#allocation3 + $0xb4] sm:$0xf]
    %v89 = vld [vmem:[#allocation5 + $0x40] sm:$0x1]
    %v90 = vlaneseq
    %v91 = vshrl.u32 %v90, 7
    %v92 = vsub.s32 0, %v91
    %v93 = vrot.slane %v89, %v92
    %v110 = vunpack.c.l.b16 %v73
    %v111 = vunpack.c.l.b16 %v74
    %v112 = vunpack.c.l.b16 %v75
    %v113 = vunpack.c.l.b16 %v76
    %v114 = vunpack.c.l.b16 %v77
    %v115 = vunpack.c.l.b16 %v78
    %v116 = vunpack.c.l.b16 %v79
    %v117 = vunpack.c.l.b16 %v80
    %v118 = vunpack.c.l.b16 %v81
    %v119 = vunpack.c.l.b16 %v82
    %v120 = vunpack.c.l.b16 %v83
    %v121 = vunpack.c.l.b16 %v84
    %v122 = vunpack.c.l.b16 %v85
    %v123 = vunpack.c.l.b16 %v86
    %v124 = vunpack.c.l.b16 %v87
    %v125 = vunpack.c.l.b16 %v88
    %v126 = vpack.c.b16 %v111, %v110
    %v127 = vpack.c.b16 %v113, %v112
    %v128 = vpack.c.b16 %v115, %v114
    %v129 = vpack.c.b16 %v117, %v116
    %v130 = vpack.c.b16 %v119, %v118
    %v131 = vpack.c.b16 %v121, %v120
    %v132 = vpack.c.b16 %v123, %v122
    %v133 = vpack.c.b16 %v125, %v124
    %142 = vmatprep.subr.bf16.mxu0 0
    %143 = vmatpush1.bf16.msra.mxu0 %v126
    %144 = vmatprep.subr.bf16.mxu0 0
    %145 = vmatpush1.bf16.msra.mxu0 %v127
    %146 = vmatprep.subr.bf16.mxu0 0
    %147 = vmatpush1.bf16.msra.mxu0 %v128
    %148 = vmatprep.subr.bf16.mxu0 0
    %149 = vmatpush1.bf16.msra.mxu0 %v129
    %150 = vmatprep.subr.bf16.mxu0 0
    %151 = vmatpush1.bf16.msra.mxu0 %v130
    %152 = vmatprep.subr.bf16.mxu0 0
    %153 = vmatpush1.bf16.msra.mxu0 %v131
    %154 = vmatprep.subr.bf16.mxu0 0
    %155 = vmatpush1.bf16.msra.mxu0 %v132
    %156 = vmatprep.subr.bf16.mxu0 0
    %157 = vmatpush1.bf16.msra.mxu0 %v133
    %158 = vmatprep.subr.bf16.mxu0 0
    %159 = vmatpush1.bf16.msra.mxu0 0
    %160 = vmatprep.subr.bf16.mxu0 0
    %161 = vmatpush1.bf16.msra.mxu0 0
    %162 = vmatprep.subr.bf16.mxu0 0
    %163 = vmatpush1.bf16.msra.mxu0 0
    %164 = vmatprep.subr.bf16.mxu0 0
    %165 = vmatpush1.bf16.msra.mxu0 0
    %166 = vmatprep.subr.bf16.mxu0 0
    %167 = vmatpush1.bf16.msra.mxu0 0
    %168 = vmatprep.subr.bf16.mxu0 0
    %169 = vmatpush1.bf16.msra.mxu0 0
    %170 = vmatprep.subr.bf16.mxu0 0
    %171 = vmatpush1.bf16.msra.mxu0 0
    %172 = vmatprep.subr.bf16.mxu0 0
    %173 = vmatpush1.bf16.msra.mxu0 0
    %174 = vmatprep.mubr.bf16.mxu0 0
    %175 = vmatmul.mubr.bf16.gmra.mrb[0].mxu0 %v72
    %v176 = vpop.f32.mrb[0].mxu0
    %v177 = vadd.f32 %v93, %v176
    %v178 = vpop.f32.mrb[0].mxu0
    %v179 = vpop.f32.mrb[0].mxu0
    %v180 = vadd.f32 %v93, %v179
    %v181 = vpop.f32.mrb[0].mxu0
    %182 = vdwg.mxu0
    %v183 = vld [vmem:[#allocation5 + $0x10] sm:$0xff]
    %v184 = vld [vmem:[#allocation5 + $0x18] sm:$0xff]
    %v185 = vld [vmem:[#allocation5 + $0x20] sm:$0xff]
    %v186 = vld [vmem:[#allocation5 + $0x28] sm:$0xff]
    %v187 = vld [vmem:[#allocation5 + $0x30] sm:$0xff]
    %v188 = vld [vmem:[#allocation5 + $0x38] sm:$0xff]
    %v189 = vpack.c.bf16 %v180, %v177
    %v190 = vld [vmem:[#allocation3 + $0x120] sm:$0xff]
    %v191 = vld [vmem:[#allocation3 + $0x128] sm:$0xf]
    %v192 = vld [vmem:[#allocation3 + $0x12c] sm:$0xff]
    %v193 = vld [vmem:[#allocation3 + $0x134] sm:$0xf]
    %v194 = vld [vmem:[#allocation3 + $0x138] sm:$0xff]
    %v195 = vld [vmem:[#allocation3 + $0x140] sm:$0xf]
    %v196 = vld [vmem:[#allocation3 + $0x144] sm:$0xff]
    %v197 = vld [vmem:[#allocation3 + $0x14c] sm:$0xf]
    %v198 = vld [vmem:[#allocation3 + $0x150] sm:$0xff]
    %v199 = vld [vmem:[#allocation3 + $0x158] sm:$0xf]
    %v200 = vld [vmem:[#allocation3 + $0x15c] sm:$0xff]
    %v201 = vld [vmem:[#allocation3 + $0x164] sm:$0xf]
    %v202 = vld [vmem:[#allocation3 + $0x168] sm:$0xff]
    %v203 = vld [vmem:[#allocation3 + $0x170] sm:$0xf]
    %v204 = vld [vmem:[#allocation3 + $0x174] sm:$0xff]
    %v205 = vld [vmem:[#allocation3 + $0x17c] sm:$0xf]
    %v206 = vld [vmem:[#allocation3 + $0x180] sm:$0xff]
    %v207 = vld [vmem:[#allocation3 + $0x188] sm:$0xf]
    %v208 = vld [vmem:[#allocation3 + $0x18c] sm:$0xff]
    %v209 = vld [vmem:[#allocation3 + $0x194] sm:$0xf]
    %v210 = vld [vmem:[#allocation3 + $0x198] sm:$0xff]
    %v211 = vld [vmem:[#allocation3 + $0x1a0] sm:$0xf]
    %v212 = vld [vmem:[#allocation3 + $0x1a4] sm:$0xff]
    %v213 = vld [vmem:[#allocation3 + $0x1ac] sm:$0xf]
    %v214 = vld [vmem:[#allocation3 + $0x1b0] sm:$0xff]
    %v215 = vld [vmem:[#allocation3 + $0x1b8] sm:$0xf]
    %v216 = vld [vmem:[#allocation3 + $0x1bc] sm:$0xff]
    %v217 = vld [vmem:[#allocation3 + $0x1c4] sm:$0xf]
    %v218 = vld [vmem:[#allocation3 + $0x1c8] sm:$0xff]
    %v219 = vld [vmem:[#allocation3 + $0x1d0] sm:$0xf]
    %v220 = vld [vmem:[#allocation3 + $0x1d4] sm:$0xff]
    %v221 = vld [vmem:[#allocation3 + $0x1dc] sm:$0xf]
    %v254 = vunpack.c.l.b16 %v190
    %v255 = vunpack.c.h.b16 %v190
    %v256 = vunpack.c.l.b16 %v191
    %v257 = vunpack.c.l.b16 %v192
    %v258 = vunpack.c.h.b16 %v192
    %v259 = vunpack.c.l.b16 %v193
    %v260 = vunpack.c.l.b16 %v194
    %v261 = vunpack.c.h.b16 %v194
    %v262 = vunpack.c.l.b16 %v195
    %v263 = vunpack.c.l.b16 %v196
    %v264 = vunpack.c.h.b16 %v196
    %v265 = vunpack.c.l.b16 %v197
    %v266 = vunpack.c.l.b16 %v198
    %v267 = vunpack.c.h.b16 %v198
    %v268 = vunpack.c.l.b16 %v199
    %v269 = vunpack.c.l.b16 %v200
    %v270 = vunpack.c.h.b16 %v200
    %v271 = vunpack.c.l.b16 %v201
    %v272 = vunpack.c.l.b16 %v202
    %v273 = vunpack.c.h.b16 %v202
    %v274 = vunpack.c.l.b16 %v203
    %v275 = vunpack.c.l.b16 %v204
    %v276 = vunpack.c.h.b16 %v204
    %v277 = vunpack.c.l.b16 %v205
    %v278 = vunpack.c.l.b16 %v206
    %v279 = vunpack.c.h.b16 %v206
    %v280 = vunpack.c.l.b16 %v207
    %v281 = vunpack.c.l.b16 %v208
    %v282 = vunpack.c.h.b16 %v208
    %v283 = vunpack.c.l.b16 %v209
    %v284 = vunpack.c.l.b16 %v210
    %v285 = vunpack.c.h.b16 %v210
    %v286 = vunpack.c.l.b16 %v211
    %v287 = vunpack.c.l.b16 %v212
    %v288 = vunpack.c.h.b16 %v212
    %v289 = vunpack.c.l.b16 %v213
    %v290 = vunpack.c.l.b16 %v214
    %v291 = vunpack.c.h.b16 %v214
    %v292 = vunpack.c.l.b16 %v215
    %v293 = vunpack.c.l.b16 %v216
    %v294 = vunpack.c.h.b16 %v216
    %v295 = vunpack.c.l.b16 %v217
    %v296 = vunpack.c.l.b16 %v218
    %v297 = vunpack.c.h.b16 %v218
    %v298 = vunpack.c.l.b16 %v219
    %v299 = vunpack.c.l.b16 %v220
    %v300 = vunpack.c.h.b16 %v220
    %v301 = vunpack.c.l.b16 %v221
    %v302 = vpack.c.b16 %v257, %v254
    %v303 = vpack.c.b16 %v258, %v255
    %v304 = vpack.c.b16 %v259, %v256
    %v305 = vpack.c.b16 %v263, %v260
    %v306 = vpack.c.b16 %v264, %v261
    %v307 = vpack.c.b16 %v265, %v262
    %v308 = vpack.c.b16 %v269, %v266
    %v309 = vpack.c.b16 %v270, %v267
    %v310 = vpack.c.b16 %v271, %v268
    %v311 = vpack.c.b16 %v275, %v272
    %v312 = vpack.c.b16 %v276, %v273
    %v313 = vpack.c.b16 %v277, %v274
    %v314 = vpack.c.b16 %v281, %v278
    %v315 = vpack.c.b16 %v282, %v279
    %v316 = vpack.c.b16 %v283, %v280
    %v317 = vpack.c.b16 %v287, %v284
    %v318 = vpack.c.b16 %v288, %v285
    %v319 = vpack.c.b16 %v289, %v286
    %v320 = vpack.c.b16 %v293, %v290
    %v321 = vpack.c.b16 %v294, %v291
    %v322 = vpack.c.b16 %v295, %v292
    %v323 = vpack.c.b16 %v299, %v296
    %v324 = vpack.c.b16 %v300, %v297
    %v325 = vpack.c.b16 %v301, %v298
    %350 = vmatprep.subr.bf16.mxu0 %v303
    %351 = vmatpush1.bf16.msra.mxu0 %v302
    %352 = vmatprep.subr.bf16.mxu0 %v306
    %353 = vmatpush1.bf16.msra.mxu0 %v305
    %354 = vmatprep.subr.bf16.mxu0 %v309
    %355 = vmatpush1.bf16.msra.mxu0 %v308
    %356 = vmatprep.subr.bf16.mxu0 %v312
    %357 = vmatpush1.bf16.msra.mxu0 %v311
    %358 = vmatprep.subr.bf16.mxu0 %v315
    %359 = vmatpush1.bf16.msra.mxu0 %v314
    %360 = vmatprep.subr.bf16.mxu0 %v318
    %361 = vmatpush1.bf16.msra.mxu0 %v317
    %362 = vmatprep.subr.bf16.mxu0 %v321
    %363 = vmatpush1.bf16.msra.mxu0 %v320
    %364 = vmatprep.subr.bf16.mxu0 %v324
    %365 = vmatpush1.bf16.msra.mxu0 %v323
    %366 = vmatprep.subr.bf16.mxu0 0
    %367 = vmatpush1.bf16.msra.mxu0 0
    %368 = vmatprep.subr.bf16.mxu0 0
    %369 = vmatpush1.bf16.msra.mxu0 0
    %370 = vmatprep.subr.bf16.mxu0 0
    %371 = vmatpush1.bf16.msra.mxu0 0
    %372 = vmatprep.subr.bf16.mxu0 0
    %373 = vmatpush1.bf16.msra.mxu0 0
    %374 = vmatprep.subr.bf16.mxu0 0
    %375 = vmatpush1.bf16.msra.mxu0 0
    %376 = vmatprep.subr.bf16.mxu0 0
    %377 = vmatpush1.bf16.msra.mxu0 0
    %378 = vmatprep.subr.bf16.mxu0 0
    %379 = vmatpush1.bf16.msra.mxu0 0
    %380 = vmatprep.subr.bf16.mxu0 0
    %381 = vmatpush1.bf16.msra.mxu0 0
    %382 = vmatprep.mubr.bf16.mxu0 0
    %383 = vmatmul.mubr.bf16.gmra.mrb[0].mxu0 %v189
    %v384 = vpop.f32.mrb[0].mxu0
    %v385 = vadd.f32 0.0, %v384
    %v386 = vpop.f32.mrb[0].mxu0
    %v387 = vadd.f32 0.0, %v386
    %v388 = vpop.f32.mrb[0].mxu0
    %v389 = vadd.f32 0.0, %v388
    %v390 = vpop.f32.mrb[0].mxu0
    %v391 = vadd.f32 0.0, %v390
    %392 = vdwg.mxu0
    %393 = vmatprep.subr.bf16.mxu0 0
    %394 = vmatpush1.bf16.msra.mxu0 %v304
    %395 = vmatprep.subr.bf16.mxu0 0
    %396 = vmatpush1.bf16.msra.mxu0 %v307
    %397 = vmatprep.subr.bf16.mxu0 0
    %398 = vmatpush1.bf16.msra.mxu0 %v310
    %399 = vmatprep.subr.bf16.mxu0 0
    %400 = vmatpush1.bf16.msra.mxu0 %v313
    %401 = vmatprep.subr.bf16.mxu0 0
    %402 = vmatpush1.bf16.msra.mxu0 %v316
    %403 = vmatprep.subr.bf16.mxu0 0
    %404 = vmatpush1.bf16.msra.mxu0 %v319
    %405 = vmatprep.subr.bf16.mxu0 0
    %406 = vmatpush1.bf16.msra.mxu0 %v322
    %407 = vmatprep.subr.bf16.mxu0 0
    %408 = vmatpush1.bf16.msra.mxu0 %v325
    %409 = vmatprep.subr.bf16.mxu0 0
    %410 = vmatpush1.bf16.msra.mxu0 0
    %411 = vmatprep.subr.bf16.mxu0 0
    %412 = vmatpush1.bf16.msra.mxu0 0
    %413 = vmatprep.subr.bf16.mxu0 0
    %414 = vmatpush1.bf16.msra.mxu0 0
    %415 = vmatprep.subr.bf16.mxu0 0
    %416 = vmatpush1.bf16.msra.mxu0 0
    %417 = vmatprep.subr.bf16.mxu0 0
    %418 = vmatpush1.bf16.msra.mxu0 0
    %419 = vmatprep.subr.bf16.mxu0 0
    %420 = vmatpush1.bf16.msra.mxu0 0
    %421 = vmatprep.subr.bf16.mxu0 0
    %422 = vmatpush1.bf16.msra.mxu0 0
    %423 = vmatprep.subr.bf16.mxu0 0
    %424 = vmatpush1.bf16.msra.mxu0 0
    %425 = vmatprep.mubr.bf16.mxu0 0
    %426 = vmatmul.mubr.bf16.gmra.mrb[0].mxu0 %v189
    %v427 = vpop.f32.mrb[0].mxu0
    %v428 = vadd.f32 0.0, %v427
    %v429 = vpop.f32.mrb[0].mxu0
    %v430 = vpop.f32.mrb[0].mxu0
    %v431 = vadd.f32 0.0, %v430
    %v432 = vpop.f32.mrb[0].mxu0
    %433 = vdwg.mxu0
    %v434 = vpack.c.bf16 %v184, %v183
    %v435 = vpack.c.bf16 %v186, %v185
    %v436 = vpack.c.bf16 %v188, %v187
    %v437 = vld [vmem:[#allocation3 + $0x1e0] sm:$0xff]
    %v438 = vld [vmem:[#allocation3 + $0x1ec] sm:$0xff]
    %v439 = vld [vmem:[#allocation3 + $0x1f8] sm:$0xff]
    %v440 = vld [vmem:[#allocation3 + $0x204] sm:$0xff]
    %v441 = vld [vmem:[#allocation3 + $0x210] sm:$0xff]
    %v442 = vld [vmem:[#allocation3 + $0x21c] sm:$0xff]
    %v443 = vld [vmem:[#allocation3 + $0x228] sm:$0xff]
    %v444 = vld [vmem:[#allocation3 + $0x234] sm:$0xff]
    %v445 = vld [vmem:[#allocation3 + $0x240] sm:$0xff]
    %v446 = vld [vmem:[#allocation3 + $0x24c] sm:$0xff]
    %v447 = vld [vmem:[#allocation3 + $0x258] sm:$0xff]
    %v448 = vld [vmem:[#allocation3 + $0x264] sm:$0xff]
    %v449 = vld [vmem:[#allocation3 + $0x270] sm:$0xff]
    %v450 = vld [vmem:[#allocation3 + $0x27c] sm:$0xff]
    %v451 = vld [vmem:[#allocation3 + $0x288] sm:$0xff]
    %v452 = vld [vmem:[#allocation3 + $0x294] sm:$0xff]
    %v469 = vunpack.c.l.b16 %v437
    %v470 = vunpack.c.h.b16 %v437
    %v471 = vunpack.c.l.b16 %v438
    %v472 = vunpack.c.h.b16 %v438
    %v473 = vunpack.c.l.b16 %v439
    %v474 = vunpack.c.h.b16 %v439
    %v475 = vunpack.c.l.b16 %v440
    %v476 = vunpack.c.h.b16 %v440
    %v477 = vunpack.c.l.b16 %v441
    %v478 = vunpack.c.h.b16 %v441
    %v479 = vunpack.c.l.b16 %v442
    %v480 = vunpack.c.h.b16 %v442
    %v481 = vunpack.c.l.b16 %v443
    %v482 = vunpack.c.h.b16 %v443
    %v483 = vunpack.c.l.b16 %v444
    %v484 = vunpack.c.h.b16 %v444
    %v485 = vunpack.c.l.b16 %v445
    %v486 = vunpack.c.h.b16 %v445
    %v487 = vunpack.c.l.b16 %v446
    %v488 = vunpack.c.h.b16 %v446
    %v489 = vunpack.c.l.b16 %v447
    %v490 = vunpack.c.h.b16 %v447
    %v491 = vunpack.c.l.b16 %v448
    %v492 = vunpack.c.h.b16 %v448
    %v493 = vunpack.c.l.b16 %v449
    %v494 = vunpack.c.h.b16 %v449
    %v495 = vunpack.c.l.b16 %v450
    %v496 = vunpack.c.h.b16 %v450
    %v497 = vunpack.c.l.b16 %v451
    %v498 = vunpack.c.h.b16 %v451
    %v499 = vunpack.c.l.b16 %v452
    %v500 = vunpack.c.h.b16 %v452
    %v501 = vpack.c.b16 %v471, %v469
    %v502 = vpack.c.b16 %v472, %v470
    %v503 = vpack.c.b16 %v475, %v473
    %v504 = vpack.c.b16 %v476, %v474
    %v505 = vpack.c.b16 %v479, %v477
    %v506 = vpack.c.b16 %v480, %v478
    %v507 = vpack.c.b16 %v483, %v481
    %v508 = vpack.c.b16 %v484, %v482
    %v509 = vpack.c.b16 %v487, %v485
    %v510 = vpack.c.b16 %v488, %v486
    %v511 = vpack.c.b16 %v491, %v489
    %v512 = vpack.c.b16 %v492, %v490
    %v513 = vpack.c.b16 %v495, %v493
    %v514 = vpack.c.b16 %v496, %v494
    %v515 = vpack.c.b16 %v499, %v497
    %v516 = vpack.c.b16 %v500, %v498
    %533 = vmatprep.subr.bf16.mxu0 %v502
    %534 = vmatpush1.bf16.msra.mxu0 %v501
    %535 = vmatprep.subr.bf16.mxu0 %v504
    %536 = vmatpush1.bf16.msra.mxu0 %v503
    %537 = vmatprep.subr.bf16.mxu0 %v506
    %538 = vmatpush1.bf16.msra.mxu0 %v505
    %539 = vmatprep.subr.bf16.mxu0 %v508
    %540 = vmatpush1.bf16.msra.mxu0 %v507
    %541 = vmatprep.subr.bf16.mxu0 %v510
    %542 = vmatpush1.bf16.msra.mxu0 %v509
    %543 = vmatprep.subr.bf16.mxu0 %v512
    %544 = vmatpush1.bf16.msra.mxu0 %v511
    %545 = vmatprep.subr.bf16.mxu0 %v514
    %546 = vmatpush1.bf16.msra.mxu0 %v513
    %547 = vmatprep.subr.bf16.mxu0 %v516
    %548 = vmatpush1.bf16.msra.mxu0 %v515
    %549 = vmatprep.subr.bf16.mxu0 0
    %550 = vmatpush1.bf16.msra.mxu0 0
    %551 = vmatprep.subr.bf16.mxu0 0
    %552 = vmatpush1.bf16.msra.mxu0 0
    %553 = vmatprep.subr.bf16.mxu0 0
    %554 = vmatpush1.bf16.msra.mxu0 0
    %555 = vmatprep.subr.bf16.mxu0 0
    %556 = vmatpush1.bf16.msra.mxu0 0
    %557 = vmatprep.subr.bf16.mxu0 0
    %558 = vmatpush1.bf16.msra.mxu0 0
    %559 = vmatprep.subr.bf16.mxu0 0
    %560 = vmatpush1.bf16.msra.mxu0 0
    %561 = vmatprep.subr.bf16.mxu0 0
    %562 = vmatpush1.bf16.msra.mxu0 0
    %563 = vmatprep.subr.bf16.mxu0 0
    %564 = vmatpush1.bf16.msra.mxu0 0
    %565 = vmatprep.mubr.bf16.mxu0 0
    %566 = vmatmul.mubr.bf16.gmra.mrb[0].mxu0 %v434
    %v567 = vpop.f32.mrb[0].mxu0
    %v568 = vadd.f32 0.0, %v567
    %v569 = vpop.f32.mrb[0].mxu0
    %v570 = vadd.f32 0.0, %v569
    %v571 = vpop.f32.mrb[0].mxu0
    %v572 = vadd.f32 0.0, %v571
    %v573 = vpop.f32.mrb[0].mxu0
    %v574 = vadd.f32 0.0, %v573
    %575 = vmatprep.mubr.bf16.mxu0 0
    %576 = vmatmul.mubr.bf16.gmra.mrb[0].mxu0 %v435
    %v577 = vpop.f32.mrb[0].mxu0
    %v578 = vadd.f32 0.0, %v577
    %v579 = vpop.f32.mrb[0].mxu0
    %v580 = vadd.f32 0.0, %v579
    %v581 = vpop.f32.mrb[0].mxu0
    %v582 = vadd.f32 0.0, %v581
    %v583 = vpop.f32.mrb[0].mxu0
    %v584 = vadd.f32 0.0, %v583
    %585 = vmatprep.mubr.bf16.mxu0 0
    %586 = vmatmul.mubr.bf16.gmra.mrb[0].mxu0 %v436
    %v587 = vpop.f32.mrb[0].mxu0
    %v588 = vadd.f32 0.0, %v587
    %v589 = vpop.f32.mrb[0].mxu0
    %v590 = vadd.f32 0.0, %v589
    %v591 = vpop.f32.mrb[0].mxu0
    %v592 = vadd.f32 0.0, %v591
    %v593 = vpop.f32.mrb[0].mxu0
    %v594 = vadd.f32 0.0, %v593
    %595 = vdwg.mxu0
    %v596 = vld [vmem:[#allocation5 + $0x50] sm:$0x1]
    %v597 = vlaneseq
    %v598 = vshrl.u32 %v597, 7
    %v599 = vsub.s32 0, %v598
    %v600 = vrot.slane %v596, %v599
    %v601 = vadd.f32 %v570, %v600
    %v602 = vadd.f32 %v574, %v600
    %v603 = vadd.f32 %v580, %v600
    %v604 = vadd.f32 %v584, %v600
    %v605 = vadd.f32 %v590, %v600
    %v606 = vadd.f32 %v594, %v600
    %v607 = vpack.c.bf16 %v391, %v387
    %v608 = vpack.c.bf16 %v431, %v428
    %v615 = vunpack.c.l.b16 %v40
    %v616 = vunpack.c.l.b16 %v41
    %v617 = vunpack.c.l.b16 %v42
    %v618 = vunpack.c.l.b16 %v43
    %v619 = vunpack.c.l.b16 %v44
    %v620 = vunpack.c.l.b16 %v45
    %v621 = vpack.c.b16 %v616, %v615
    %v622 = vpack.c.b16 %v618, %v617
    %v623 = vpack.c.b16 %v620, %v619
    %vm624 = vcmask 130048
    %v626 = vsel %vm624, %v621, 0
    %v629 = vsel %vm624, %v622, 0
    %v632 = vsel %vm624, %v623, 0
    %634 = vmatprep.subr.bf16.mxu0 %v608
    %635 = vmatpush1.bf16.msra.mxu0 %v607
    %636 = vmatprep.subr.bf16.mxu0 0
    %637 = vmatpush1.bf16.msra.mxu0 0
    %638 = vmatprep.subr.bf16.mxu0 0
    %639 = vmatpush1.bf16.msra.mxu0 0
    %640 = vmatprep.subr.bf16.mxu0 0
    %641 = vmatpush1.bf16.msra.mxu0 0
    %642 = vmatprep.subr.bf16.mxu0 0
    %643 = vmatpush1.bf16.msra.mxu0 0
    %644 = vmatprep.subr.bf16.mxu0 0
    %645 = vmatpush1.bf16.msra.mxu0 0
    %646 = vmatprep.subr.bf16.mxu0 0
    %647 = vmatpush1.bf16.msra.mxu0 0
    %648 = vmatprep.subr.bf16.mxu0 0
    %649 = vmatpush1.bf16.msra.mxu0 0
    %650 = vmatprep.subr.bf16.mxu0 0
    %651 = vmatpush1.bf16.msra.mxu0 0
    %652 = vmatprep.subr.bf16.mxu0 0
    %653 = vmatpush1.bf16.msra.mxu0 0
    %654 = vmatprep.subr.bf16.mxu0 0
    %655 = vmatpush1.bf16.msra.mxu0 0
    %656 = vmatprep.subr.bf16.mxu0 0
    %657 = vmatpush1.bf16.msra.mxu0 0
    %658 = vmatprep.subr.bf16.mxu0 0
    %659 = vmatpush1.bf16.msra.mxu0 0
    %660 = vmatprep.subr.bf16.mxu0 0
    %661 = vmatpush1.bf16.msra.mxu0 0
    %662 = vmatprep.subr.bf16.mxu0 0
    %663 = vmatpush1.bf16.msra.mxu0 0
    %664 = vmatprep.subr.bf16.mxu0 0
    %665 = vmatpush1.bf16.msra.mxu0 0
    %666 = vmatprep.mubr.bf16.mxu0 0
    %667 = vmatmul.mubr.bf16.gmra.mrb[0].mxu0 %v626
    %v668 = vpop.f32.mrb[0].mxu0
    %v669 = vadd.f32 0.0, %v668
    %v670 = vpop.f32.mrb[0].mxu0
    %v671 = vadd.f32 0.0, %v670
    %v672 = vpop.f32.mrb[0].mxu0
    %v673 = vadd.f32 0.0, %v672
    %v674 = vpop.f32.mrb[0].mxu0
    %v675 = vadd.f32 0.0, %v674
    %676 = vmatprep.mubr.bf16.mxu0 0
    %677 = vmatmul.mubr.bf16.gmra.mrb[0].mxu0 %v629
    %v678 = vpop.f32.mrb[0].mxu0
    %v679 = vadd.f32 0.0, %v678
    %v680 = vpop.f32.mrb[0].mxu0
    %v681 = vadd.f32 0.0, %v680
    %v682 = vpop.f32.mrb[0].mxu0
    %v683 = vadd.f32 0.0, %v682
    %v684 = vpop.f32.mrb[0].mxu0
    %v685 = vadd.f32 0.0, %v684
    %686 = vmatprep.mubr.bf16.mxu0 0
    %687 = vmatmul.mubr.bf16.gmra.mrb[0].mxu0 %v632
    %v688 = vpop.f32.mrb[0].mxu0
    %v689 = vadd.f32 0.0, %v688
    %v690 = vpop.f32.mrb[0].mxu0
    %v691 = vadd.f32 0.0, %v690
    %v692 = vpop.f32.mrb[0].mxu0
    %v693 = vadd.f32 0.0, %v692
    %v694 = vpop.f32.mrb[0].mxu0
    %v695 = vadd.f32 0.0, %v694
    %696 = vdwg.mxu0
    %v697 = vpack.c.bf16 %v389, %v385
    %v704 = vunpack.c.l.b16 %v46
    %v705 = vunpack.c.l.b16 %v47
    %v706 = vunpack.c.l.b16 %v48
    %v707 = vunpack.c.l.b16 %v49
    %v708 = vunpack.c.l.b16 %v50
    %v709 = vunpack.c.l.b16 %v51
    %v710 = vpack.c.b16 %v705, %v704
    %v711 = vpack.c.b16 %v707, %v706
    %v712 = vpack.c.b16 %v709, %v708
    %v714 = vsel %vm624, %v710, 0
    %v717 = vsel %vm624, %v711, 0
    %v720 = vsel %vm624, %v712, 0
    %722 = vmatprep.subr.bf16.mxu0 0
    %723 = vmatpush1.bf16.msra.mxu0 %v697
    %724 = vmatprep.subr.bf16.mxu0 0
    %725 = vmatpush1.bf16.msra.mxu0 0
    %726 = vmatprep.subr.bf16.mxu0 0
    %727 = vmatpush1.bf16.msra.mxu0 0
    %728 = vmatprep.subr.bf16.mxu0 0
    %729 = vmatpush1.bf16.msra.mxu0 0
    %730 = vmatprep.subr.bf16.mxu0 0
    %731 = vmatpush1.bf16.msra.mxu0 0
    %732 = vmatprep.subr.bf16.mxu0 0
    %733 = vmatpush1.bf16.msra.mxu0 0
    %734 = vmatprep.subr.bf16.mxu0 0
    %735 = vmatpush1.bf16.msra.mxu0 0
    %736 = vmatprep.subr.bf16.mxu0 0
    %737 = vmatpush1.bf16.msra.mxu0 0
    %738 = vmatprep.subr.bf16.mxu0 0
    %739 = vmatpush1.bf16.msra.mxu0 0
    %740 = vmatprep.subr.bf16.mxu0 0
    %741 = vmatpush1.bf16.msra.mxu0 0
    %742 = vmatprep.subr.bf16.mxu0 0
    %743 = vmatpush1.bf16.msra.mxu0 0
    %744 = vmatprep.subr.bf16.mxu0 0
    %745 = vmatpush1.bf16.msra.mxu0 0
    %746 = vmatprep.subr.bf16.mxu0 0
    %747 = vmatpush1.bf16.msra.mxu0 0
    %748 = vmatprep.subr.bf16.mxu0 0
    %749 = vmatpush1.bf16.msra.mxu0 0
    %750 = vmatprep.subr.bf16.mxu0 0
    %751 = vmatpush1.bf16.msra.mxu0 0
    %752 = vmatprep.subr.bf16.mxu0 0
    %753 = vmatpush1.bf16.msra.mxu0 0
    %754 = vmatprep.mubr.bf16.mxu0 0
    %755 = vmatmul.mubr.bf16.gmra.mrb[0].mxu0 %v714
    %v756 = vpop.f32.mrb[0].mxu0
    %v757 = vadd.f32 0.0, %v756
    %v758 = vpop.f32.mrb[0].mxu0
    %v759 = vpop.f32.mrb[0].mxu0
    %v760 = vadd.f32 0.0, %v759
    %v761 = vpop.f32.mrb[0].mxu0
    %762 = vmatprep.mubr.bf16.mxu0 0
    %763 = vmatmul.mubr.bf16.gmra.mrb[0].mxu0 %v717
    %v764 = vpop.f32.mrb[0].mxu0
    %v765 = vadd.f32 0.0, %v764
    %v766 = vpop.f32.mrb[0].mxu0
    %v767 = vpop.f32.mrb[0].mxu0
    %v768 = vadd.f32 0.0, %v767
    %v769 = vpop.f32.mrb[0].mxu0
    %770 = vmatprep.mubr.bf16.mxu0 0
    %771 = vmatmul.mubr.bf16.gmra.mrb[0].mxu0 %v720
    %v772 = vpop.f32.mrb[0].mxu0
    %v773 = vadd.f32 0.0, %v772
    %v774 = vpop.f32.mrb[0].mxu0
    %v775 = vpop.f32.mrb[0].mxu0
    %v776 = vadd.f32 0.0, %v775
    %v777 = vpop.f32.mrb[0].mxu0
    %778 = vdwg.mxu0
    %v779 = vmul.f32 %v669, %v757
    %v780 = vmul.f32 %v673, %v760
    %v781 = vmul.f32 %v679, %v765
    %v782 = vmul.f32 %v683, %v768
    %v783 = vmul.f32 %v689, %v773
    %v784 = vmul.f32 %v693, %v776
    %v785 = vmul.f32 %v779, %v568
    %v786 = vmul.f32 %v780, %v572
    %v787 = vmul.f32 %v781, %v578
    %v788 = vmul.f32 %v782, %v582
    %v789 = vmul.f32 %v783, %v588
    %v790 = vmul.f32 %v784, %v592
    %v791 = vpack.c.bf16 %v786, %v785
    %v792 = vpack.c.bf16 %v788, %v787
    %v793 = vpack.c.bf16 %v790, %v789
    %v810 = vunpack.c.l.b16 %v54
    %v811 = vunpack.c.l.b16 %v55
    %v812 = vunpack.c.l.b16 %v56
    %v813 = vunpack.c.l.b16 %v57
    %v814 = vunpack.c.l.b16 %v58
    %v815 = vunpack.c.l.b16 %v59
    %v816 = vunpack.c.l.b16 %v60
    %v817 = vunpack.c.l.b16 %v61
    %v818 = vunpack.c.l.b16 %v62
    %v819 = vunpack.c.l.b16 %v63
    %v820 = vunpack.c.l.b16 %v64
    %v821 = vunpack.c.l.b16 %v65
    %v822 = vunpack.c.l.b16 %v66
    %v823 = vunpack.c.l.b16 %v67
    %v824 = vunpack.c.l.b16 %v68
    %v825 = vunpack.c.l.b16 %v69
    %v826 = vpack.c.b16 %v811, %v810
    %v827 = vpack.c.b16 %v813, %v812
    %v828 = vpack.c.b16 %v815, %v814
    %v829 = vpack.c.b16 %v817, %v816
    %v830 = vpack.c.b16 %v819, %v818
    %v831 = vpack.c.b16 %v821, %v820
    %v832 = vpack.c.b16 %v823, %v822
    %v833 = vpack.c.b16 %v825, %v824
    %842 = vmatprep.subr.bf16.mxu0 0
    %843 = vmatpush1.bf16.msra.mxu0 %v826
    %844 = vmatprep.subr.bf16.mxu0 0
    %845 = vmatpush1.bf16.msra.mxu0 %v827
    %846 = vmatprep.subr.bf16.mxu0 0
    %847 = vmatpush1.bf16.msra.mxu0 %v828
    %848 = vmatprep.subr.bf16.mxu0 0
    %849 = vmatpush1.bf16.msra.mxu0 %v829
    %850 = vmatprep.subr.bf16.mxu0 0
    %851 = vmatpush1.bf16.msra.mxu0 %v830
    %852 = vmatprep.subr.bf16.mxu0 0
    %853 = vmatpush1.bf16.msra.mxu0 %v831
    %854 = vmatprep.subr.bf16.mxu0 0
    %855 = vmatpush1.bf16.msra.mxu0 %v832
    %856 = vmatprep.subr.bf16.mxu0 0
    %857 = vmatpush1.bf16.msra.mxu0 %v833
    %858 = vmatprep.subr.bf16.mxu0 0
    %859 = vmatpush1.bf16.msra.mxu0 0
    %860 = vmatprep.subr.bf16.mxu0 0
    %861 = vmatpush1.bf16.msra.mxu0 0
    %862 = vmatprep.subr.bf16.mxu0 0
    %863 = vmatpush1.bf16.msra.mxu0 0
    %864 = vmatprep.subr.bf16.mxu0 0
    %865 = vmatpush1.bf16.msra.mxu0 0
    %866 = vmatprep.subr.bf16.mxu0 0
    %867 = vmatpush1.bf16.msra.mxu0 0
    %868 = vmatprep.subr.bf16.mxu0 0
    %869 = vmatpush1.bf16.msra.mxu0 0
    %870 = vmatprep.subr.bf16.mxu0 0
    %871 = vmatpush1.bf16.msra.mxu0 0
    %872 = vmatprep.subr.bf16.mxu0 0
    %873 = vmatpush1.bf16.msra.mxu0 0
    %874 = vmatprep.mubr.bf16.mxu0 0
    %875 = vmatmul.mubr.bf16.gmra.mrb[0].mxu0 %v791
    %v876 = vpop.f32.mrb[0].mxu0
    %v877 = vadd.f32 0.0, %v876
    %v878 = vpop.f32.mrb[0].mxu0
    %v879 = vpop.f32.mrb[0].mxu0
    %v880 = vadd.f32 0.0, %v879
    %v881 = vpop.f32.mrb[0].mxu0
    %882 = vmatprep.mubr.bf16.mxu0 0
    %883 = vmatmul.mubr.bf16.gmra.mrb[0].mxu0 %v792
    %v884 = vpop.f32.mrb[0].mxu0
    %v885 = vadd.f32 0.0, %v884
    %v886 = vpop.f32.mrb[0].mxu0
    %v887 = vpop.f32.mrb[0].mxu0
    %v888 = vadd.f32 0.0, %v887
    %v889 = vpop.f32.mrb[0].mxu0
    %890 = vmatprep.mubr.bf16.mxu0 0
    %891 = vmatmul.mubr.bf16.gmra.mrb[0].mxu0 %v793
    %v892 = vpop.f32.mrb[0].mxu0
    %v893 = vadd.f32 0.0, %v892
    %v894 = vpop.f32.mrb[0].mxu0
    %v895 = vpop.f32.mrb[0].mxu0
    %v896 = vadd.f32 0.0, %v895
    %v897 = vpop.f32.mrb[0].mxu0
    %898 = vdwg.mxu0
    %v899 = vmax.f32 %v877, -5.0
    %v900 = vmax.f32 %v880, -5.0
    %v901 = vmax.f32 %v885, -5.0
    %v902 = vmax.f32 %v888, -5.0
    %v903 = vmax.f32 %v893, -5.0
    %v904 = vmax.f32 %v896, -5.0
    %v905 = vmin.f32 %v899, 5.0
    %v906 = vmin.f32 %v900, 5.0
    %v907 = vmin.f32 %v901, 5.0
    %v908 = vmin.f32 %v902, 5.0
    %v909 = vmin.f32 %v903, 5.0
    %v910 = vmin.f32 %v904, 5.0
    %v911 = vmul.f32 %v905, 1.442695
    %v912 = vpow.pop %v911
    %v913 = vmul.f32 %v906, 1.442695
    %v914 = vpow.pop %v913
    %v915 = vmul.f32 %v907, 1.442695
    %v916 = vpow.pop %v915
    %v917 = vmul.f32 %v908, 1.442695
    %v918 = vpow.pop %v917
    %v919 = vmul.f32 %v909, 1.442695
    %v920 = vpow.pop %v919
    %v921 = vmul.f32 %v910, 1.442695
    %v922 = vpow.pop %v921
    %v923 = vmul.f32 %v671, %v912
    %v924 = vmul.f32 %v675, %v914
    %v925 = vmul.f32 %v681, %v916
    %v926 = vmul.f32 %v685, %v918
    %v927 = vmul.f32 %v691, %v920
    %v928 = vmul.f32 %v695, %v922
    %v929 = vpack.c.bf16 %v924, %v923
    %v930 = vpack.c.bf16 %v926, %v925
    %v931 = vpack.c.bf16 %v928, %v927
    %932 = vst [vmem:[#allocation2] sm:$0xff] %v929
    %933 = vst [vmem:[#allocation2 + $0x10] sm:$0xff] %v930
    %934 = vst [vmem:[#allocation2 + $0x20] sm:$0xff] %v931
    %v935 = vpack.c.bf16 %v914, %v912
    %v936 = vpack.c.bf16 %v918, %v916
    %v937 = vpack.c.bf16 %v922, %v920
    %938 = vst [vmem:[#allocation2 + $0x8] sm:$0xff] %v935
    %939 = vst [vmem:[#allocation2 + $0x18] sm:$0xff] %v936
    %940 = vst [vmem:[#allocation2 + $0x28] sm:$0xff] %v937
    %v941 = vld [vmem:[#allocation2] sm:$0xff]
    %v942 = vld [vmem:[#allocation2 + $0x8] sm:$0xff]
    %v943 = vld [vmem:[#allocation2 + $0x10] sm:$0xff]
    %v944 = vld [vmem:[#allocation2 + $0x18] sm:$0xff]
    %v945 = vld [vmem:[#allocation2 + $0x20] sm:$0xff]
    %v946 = vld [vmem:[#allocation2 + $0x28] sm:$0xff]
    %v949 = vunpack.c.l.b16 %v52
    %v950 = vunpack.c.l.b16 %v53
    %v951 = vpack.c.b16 %v950, %v949
    %vm952 = vcmask 392192
    %v954 = vsel %vm952, %v951, 0
    %956 = vmatprep.subr.bf16.mxu0 %v942
    %957 = vmatpush1.bf16.msra.mxu0 %v941
    %958 = vmatprep.subr.bf16.mxu0 %v944
    %959 = vmatpush1.bf16.msra.mxu0 %v943
    %960 = vmatprep.subr.bf16.mxu0 %v946
    %961 = vmatpush1.bf16.msra.mxu0 %v945
    %962 = vmatprep.subr.bf16.mxu0 0
    %963 = vmatpush1.bf16.msra.mxu0 0
    %964 = vmatprep.subr.bf16.mxu0 0
    %965 = vmatpush1.bf16.msra.mxu0 0
    %966 = vmatprep.subr.bf16.mxu0 0
    %967 = vmatpush1.bf16.msra.mxu0 0
    %968 = vmatprep.subr.bf16.mxu0 0
    %969 = vmatpush1.bf16.msra.mxu0 0
    %970 = vmatprep.subr.bf16.mxu0 0
    %971 = vmatpush1.bf16.msra.mxu0 0
    %972 = vmatprep.subr.bf16.mxu0 0
    %973 = vmatpush1.bf16.msra.mxu0 0
    %974 = vmatprep.subr.bf16.mxu0 0
    %975 = vmatpush1.bf16.msra.mxu0 0
    %976 = vmatprep.subr.bf16.mxu0 0
    %977 = vmatpush1.bf16.msra.mxu0 0
    %978 = vmatprep.subr.bf16.mxu0 0
    %979 = vmatpush1.bf16.msra.mxu0 0
    %980 = vmatprep.subr.bf16.mxu0 0
    %981 = vmatpush1.bf16.msra.mxu0 0
    %982 = vmatprep.subr.bf16.mxu0 0
    %983 = vmatpush1.bf16.msra.mxu0 0
    %984 = vmatprep.subr.bf16.mxu0 0
    %985 = vmatpush1.bf16.msra.mxu0 0
    %986 = vmatprep.subr.bf16.mxu0 0
    %987 = vmatpush1.bf16.msra.mxu0 0
    %988 = vmatprep.mubr.bf16.mxu0 0
    %989 = vmatmul.mubr.bf16.gmra.mrb[0].mxu0 %v954
    %v990 = vpop.f32.mrb[0].mxu0
    %v991 = vadd.f32 0.0, %v990
    %v992 = vpop.f32.mrb[0].mxu0
    %v993 = vadd.f32 0.0, %v992
    %v994 = vpop.f32.mrb[0].mxu0
    %v995 = vadd.f32 0.0, %v994
    %v996 = vpop.f32.mrb[0].mxu0
    %v997 = vadd.f32 0.0, %v996
    %998 = vdwg.mxu0
    %v999 = vadd.f32 %v993, 1e-06
    %v1000 = vadd.f32 %v997, 1e-06
    %v1001 = vrcp.pop %v999
    %v1002 = vmul.f32 %v991, %v1001
    %v1003 = vrcp.pop %v1000
    %v1004 = vmul.f32 %v995, %v1003
    %v1005 = vpack.c.bf16 %v1004, %v1002
    %v1006 = vld [vmem:[#allocation3 + $0x2a0] sm:$0xf]
    %v1007 = vld [vmem:[#allocation3 + $0x2ac] sm:$0xf]
    %v1008 = vld [vmem:[#allocation3 + $0x2b8] sm:$0xf]
    %v1009 = vld [vmem:[#allocation3 + $0x2c4] sm:$0xf]
    %v1010 = vld [vmem:[#allocation3 + $0x2d0] sm:$0xf]
    %v1011 = vld [vmem:[#allocation3 + $0x2dc] sm:$0xf]
    %v1012 = vld [vmem:[#allocation3 + $0x2e8] sm:$0xf]
    %v1013 = vld [vmem:[#allocation3 + $0x2f4] sm:$0xf]
    %v1014 = vld [vmem:[#allocation3 + $0x300] sm:$0xf]
    %v1015 = vld [vmem:[#allocation3 + $0x30c] sm:$0xf]
    %v1016 = vld [vmem:[#allocation3 + $0x318] sm:$0xf]
    %v1017 = vld [vmem:[#allocation3 + $0x324] sm:$0xf]
    %v1018 = vld [vmem:[#allocation3 + $0x330] sm:$0xf]
    %v1019 = vld [vmem:[#allocation3 + $0x33c] sm:$0xf]
    %v1020 = vld [vmem:[#allocation3 + $0x348] sm:$0xf]
    %v1021 = vld [vmem:[#allocation3 + $0x354] sm:$0xf]
    %v1022 = vld [vmem:[#allocation5 + $0x58] sm:$0x1]
    %v1023 = vlaneseq
    %v1024 = vshrl.u32 %v1023, 7
    %v1025 = vsub.s32 0, %v1024
    %v1026 = vrot.slane %v1022, %v1025
    %v1043 = vunpack.c.l.b16 %v1006
    %v1044 = vunpack.c.l.b16 %v1007
    %v1045 = vunpack.c.l.b16 %v1008
    %v1046 = vunpack.c.l.b16 %v1009
    %v1047 = vunpack.c.l.b16 %v1010
    %v1048 = vunpack.c.l.b16 %v1011
    %v1049 = vunpack.c.l.b16 %v1012
    %v1050 = vunpack.c.l.b16 %v1013
    %v1051 = vunpack.c.l.b16 %v1014
    %v1052 = vunpack.c.l.b16 %v1015
    %v1053 = vunpack.c.l.b16 %v1016
    %v1054 = vunpack.c.l.b16 %v1017
    %v1055 = vunpack.c.l.b16 %v1018
    %v1056 = vunpack.c.l.b16 %v1019
    %v1057 = vunpack.c.l.b16 %v1020
    %v1058 = vunpack.c.l.b16 %v1021
    %v1059 = vpack.c.b16 %v1044, %v1043
    %v1060 = vpack.c.b16 %v1046, %v1045
    %v1061 = vpack.c.b16 %v1048, %v1047
    %v1062 = vpack.c.b16 %v1050, %v1049
    %v1063 = vpack.c.b16 %v1052, %v1051
    %v1064 = vpack.c.b16 %v1054, %v1053
    %v1065 = vpack.c.b16 %v1056, %v1055
    %v1066 = vpack.c.b16 %v1058, %v1057
    %1075 = vmatprep.subr.bf16.mxu0 0
    %1076 = vmatpush1.bf16.msra.mxu0 %v1059
    %1077 = vmatprep.subr.bf16.mxu0 0
    %1078 = vmatpush1.bf16.msra.mxu0 %v1060
    %1079 = vmatprep.subr.bf16.mxu0 0
    %1080 = vmatpush1.bf16.msra.mxu0 %v1061
    %1081 = vmatprep.subr.bf16.mxu0 0
    %1082 = vmatpush1.bf16.msra.mxu0 %v1062
    %1083 = vmatprep.subr.bf16.mxu0 0
    %1084 = vmatpush1.bf16.msra.mxu0 %v1063
    %1085 = vmatprep.subr.bf16.mxu0 0
    %1086 = vmatpush1.bf16.msra.mxu0 %v1064
    %1087 = vmatprep.subr.bf16.mxu0 0
    %1088 = vmatpush1.bf16.msra.mxu0 %v1065
    %1089 = vmatprep.subr.bf16.mxu0 0
    %1090 = vmatpush1.bf16.msra.mxu0 %v1066
    %1091 = vmatprep.subr.bf16.mxu0 0
    %1092 = vmatpush1.bf16.msra.mxu0 0
    %1093 = vmatprep.subr.bf16.mxu0 0
    %1094 = vmatpush1.bf16.msra.mxu0 0
    %1095 = vmatprep.subr.bf16.mxu0 0
    %1096 = vmatpush1.bf16.msra.mxu0 0
    %1097 = vmatprep.subr.bf16.mxu0 0
    %1098 = vmatpush1.bf16.msra.mxu0 0
    %1099 = vmatprep.subr.bf16.mxu0 0
    %1100 = vmatpush1.bf16.msra.mxu0 0
    %1101 = vmatprep.subr.bf16.mxu0 0
    %1102 = vmatpush1.bf16.msra.mxu0 0
    %1103 = vmatprep.subr.bf16.mxu0 0
    %1104 = vmatpush1.bf16.msra.mxu0 0
    %1105 = vmatprep.subr.bf16.mxu0 0
    %1106 = vmatpush1.bf16.msra.mxu0 0
    %1107 = vmatprep.mubr.bf16.mxu0 0
    %1108 = vmatmul.mubr.bf16.gmra.mrb[0].mxu0 %v1005
    %v1109 = vpop.f32.mrb[0].mxu0
    %v1110 = vadd.f32 %v1026, %v1109
    %v1111 = vpop.f32.mrb[0].mxu0
    %v1112 = vpop.f32.mrb[0].mxu0
    %v1113 = vadd.f32 %v1026, %v1112
    %v1114 = vpop.f32.mrb[0].mxu0
    %1115 = vdwg.mxu0
    %v1116 = vpack.c.bf16 %v572, %v568
    %v1117 = vpack.c.bf16 %v582, %v578
    %v1118 = vpack.c.bf16 %v592, %v588
    %v1119 = vld [vmem:[#allocation3 + $0x1e8] sm:$0xf]
    %v1120 = vld [vmem:[#allocation3 + $0x1f4] sm:$0xf]
    %v1121 = vld [vmem:[#allocation3 + $0x200] sm:$0xf]
    %v1122 = vld [vmem:[#allocation3 + $0x20c] sm:$0xf]
    %v1123 = vld [vmem:[#allocation3 + $0x218] sm:$0xf]
    %v1124 = vld [vmem:[#allocation3 + $0x224] sm:$0xf]
    %v1125 = vld [vmem:[#allocation3 + $0x230] sm:$0xf]
    %v1126 = vld [vmem:[#allocation3 + $0x23c] sm:$0xf]
    %v1127 = vld [vmem:[#allocation3 + $0x248] sm:$0xf]
    %v1128 = vld [vmem:[#allocation3 + $0x254] sm:$0xf]
    %v1129 = vld [vmem:[#allocation3 + $0x260] sm:$0xf]
    %v1130 = vld [vmem:[#allocation3 + $0x26c] sm:$0xf]
    %v1131 = vld [vmem:[#allocation3 + $0x278] sm:$0xf]
    %v1132 = vld [vmem:[#allocation3 + $0x284] sm:$0xf]
    %v1133 = vld [vmem:[#allocation3 + $0x290] sm:$0xf]
    %v1134 = vld [vmem:[#allocation3 + $0x29c] sm:$0xf]
    %v1135 = vld [vmem:[#allocation5 + $0x60] sm:$0x1]
    %v1136 = vlaneseq
    %v1137 = vshrl.u32 %v1136, 7
    %v1138 = vsub.s32 0, %v1137
    %v1139 = vrot.slane %v1135, %v1138
    %v1156 = vunpack.c.l.b16 %v1119
    %v1157 = vunpack.c.l.b16 %v1120
    %v1158 = vunpack.c.l.b16 %v1121
    %v1159 = vunpack.c.l.b16 %v1122
    %v1160 = vunpack.c.l.b16 %v1123
    %v1161 = vunpack.c.l.b16 %v1124
    %v1162 = vunpack.c.l.b16 %v1125
    %v1163 = vunpack.c.l.b16 %v1126
    %v1164 = vunpack.c.l.b16 %v1127
    %v1165 = vunpack.c.l.b16 %v1128
    %v1166 = vunpack.c.l.b16 %v1129
    %v1167 = vunpack.c.l.b16 %v1130
    %v1168 = vunpack.c.l.b16 %v1131
    %v1169 = vunpack.c.l.b16 %v1132
    %v1170 = vunpack.c.l.b16 %v1133
    %v1171 = vunpack.c.l.b16 %v1134
    %v1172 = vpack.c.b16 %v1157, %v1156
    %v1173 = vpack.c.b16 %v1159, %v1158
    %v1174 = vpack.c.b16 %v1161, %v1160
    %v1175 = vpack.c.b16 %v1163, %v1162
    %v1176 = vpack.c.b16 %v1165, %v1164
    %v1177 = vpack.c.b16 %v1167, %v1166
    %v1178 = vpack.c.b16 %v1169, %v1168
    %v1179 = vpack.c.b16 %v1171, %v1170
    %1188 = vmatprep.subr.bf16.mxu0 0
    %1189 = vmatpush1.bf16.msra.mxu0 %v1172
    %1190 = vmatprep.subr.bf16.mxu0 0
    %1191 = vmatpush1.bf16.msra.mxu0 %v1173
    %1192 = vmatprep.subr.bf16.mxu0 0
    %1193 = vmatpush1.bf16.msra.mxu0 %v1174
    %1194 = vmatprep.subr.bf16.mxu0 0
    %1195 = vmatpush1.bf16.msra.mxu0 %v1175
    %1196 = vmatprep.subr.bf16.mxu0 0
    %1197 = vmatpush1.bf16.msra.mxu0 %v1176
    %1198 = vmatprep.subr.bf16.mxu0 0
    %1199 = vmatpush1.bf16.msra.mxu0 %v1177
    %1200 = vmatprep.subr.bf16.mxu0 0
    %1201 = vmatpush1.bf16.msra.mxu0 %v1178
    %1202 = vmatprep.subr.bf16.mxu0 0
    %1203 = vmatpush1.bf16.msra.mxu0 %v1179
    %1204 = vmatprep.subr.bf16.mxu0 0
    %1205 = vmatpush1.bf16.msra.mxu0 0
    %1206 = vmatprep.subr.bf16.mxu0 0
    %1207 = vmatpush1.bf16.msra.mxu0 0
    %1208 = vmatprep.subr.bf16.mxu0 0
    %1209 = vmatpush1.bf16.msra.mxu0 0
    %1210 = vmatprep.subr.bf16.mxu0 0
    %1211 = vmatpush1.bf16.msra.mxu0 0
    %1212 = vmatprep.subr.bf16.mxu0 0
    %1213 = vmatpush1.bf16.msra.mxu0 0
    %1214 = vmatprep.subr.bf16.mxu0 0
    %1215 = vmatpush1.bf16.msra.mxu0 0
    %1216 = vmatprep.subr.bf16.mxu0 0
    %1217 = vmatpush1.bf16.msra.mxu0 0
    %1218 = vmatprep.subr.bf16.mxu0 0
    %1219 = vmatpush1.bf16.msra.mxu0 0
    %1220 = vmatprep.mubr.bf16.mxu0 0
    %1221 = vmatmul.mubr.bf16.gmra.mrb[0].mxu0 %v1116
    %v1222 = vpop.f32.mrb[0].mxu0
    %v1223 = vadd.f32 %v1139, %v1222
    %v1224 = vpop.f32.mrb[0].mxu0
    %v1225 = vpop.f32.mrb[0].mxu0
    %v1226 = vadd.f32 %v1139, %v1225
    %v1227 = vpop.f32.mrb[0].mxu0
    %1228 = vmatprep.mubr.bf16.mxu0 0
    %1229 = vmatmul.mubr.bf16.gmra.mrb[0].mxu0 %v1117
    %v1230 = vpop.f32.mrb[0].mxu0
    %v1231 = vadd.f32 %v1139, %v1230
    %v1232 = vpop.f32.mrb[0].mxu0
    %v1233 = vpop.f32.mrb[0].mxu0
    %v1234 = vadd.f32 %v1139, %v1233
    %v1235 = vpop.f32.mrb[0].mxu0
    %1236 = vmatprep.mubr.bf16.mxu0 0
    %1237 = vmatmul.mubr.bf16.gmra.mrb[0].mxu0 %v1118
    %v1238 = vpop.f32.mrb[0].mxu0
    %v1239 = vadd.f32 %v1139, %v1238
    %v1240 = vpop.f32.mrb[0].mxu0
    %v1241 = vpop.f32.mrb[0].mxu0
    %v1242 = vadd.f32 %v1139, %v1241
    %v1243 = vpop.f32.mrb[0].mxu0
    %1244 = vdwg.mxu0
    %v1245 = vadd.f32 %v177, %v1110
    %v1246 = vadd.f32 %v180, %v1113
    %v1247 = vld [vmem:[#allocation5 + $0x88] sm:$0x1]
    %v1248 = vlaneseq
    %v1249 = vshrl.u32 %v1248, 7
    %v1250 = vsub.s32 0, %v1249
    %v1251 = vrot.slane %v1247, %v1250
    %v1252 = vmul.f32 %v1245, %v1251
    %v1253 = vmul.f32 %v1246, %v1251
    %v1254 = vld [vmem:[#allocation5 + $0x90] sm:$0x1]
    %v1255 = vlaneseq
    %v1256 = vshrl.u32 %v1255, 7
    %v1257 = vsub.s32 0, %v1256
    %v1258 = vrot.slane %v1254, %v1257
    %v1259 = vadd.f32 %v1252, %v1258
    %v1260 = vadd.f32 %v1253, %v1258
    %v1261 = vadd.f32 %v601, %v1223
    %v1262 = vadd.f32 %v602, %v1226
    %v1263 = vadd.f32 %v603, %v1231
    %v1264 = vadd.f32 %v604, %v1234
    %v1265 = vadd.f32 %v605, %v1239
    %v1266 = vadd.f32 %v606, %v1242
    %v1267 = vld [vmem:[#allocation5 + $0x98] sm:$0x1]
    %v1268 = vlaneseq
    %v1269 = vshrl.u32 %v1268, 7
    %v1270 = vsub.s32 0, %v1269
    %v1271 = vrot.slane %v1267, %v1270
    %v1272 = vmul.f32 %v1261, %v1271
    %v1273 = vmul.f32 %v1262, %v1271
    %v1274 = vmul.f32 %v1263, %v1271
    %v1275 = vmul.f32 %v1264, %v1271
    %v1276 = vmul.f32 %v1265, %v1271
    %v1277 = vmul.f32 %v1266, %v1271
    %v1278 = vld [vmem:[#allocation5 + $0xa0] sm:$0x1]
    %v1279 = vlaneseq
    %v1280 = vshrl.u32 %v1279, 7
    %v1281 = vsub.s32 0, %v1280
    %v1282 = vrot.slane %v1278, %v1281
    %v1283 = vadd.f32 %v1272, %v1282
    %v1284 = vadd.f32 %v1273, %v1282
    %v1285 = vadd.f32 %v1274, %v1282
    %v1286 = vadd.f32 %v1275, %v1282
    %v1287 = vadd.f32 %v1276, %v1282
    %v1288 = vadd.f32 %v1277, %v1282
    %v1289 = vpack.c.bf16 %v1260, %v1259
    %v1290 = vld [vmem:[#allocation3 + $0x2a4] sm:$0xf]
    %v1291 = vld [vmem:[#allocation3 + $0x2b0] sm:$0xf]
    %v1292 = vld [vmem:[#allocation3 + $0x2bc] sm:$0xf]
    %v1293 = vld [vmem:[#allocation3 + $0x2c8] sm:$0xf]
    %v1294 = vld [vmem:[#allocation3 + $0x2d4] sm:$0xf]
    %v1295 = vld [vmem:[#allocation3 + $0x2e0] sm:$0xf]
    %v1296 = vld [vmem:[#allocation3 + $0x2ec] sm:$0xf]
    %v1297 = vld [vmem:[#allocation3 + $0x2f8] sm:$0xf]
    %v1298 = vld [vmem:[#allocation3 + $0x304] sm:$0xf]
    %v1299 = vld [vmem:[#allocation3 + $0x310] sm:$0xf]
    %v1300 = vld [vmem:[#allocation3 + $0x31c] sm:$0xf]
    %v1301 = vld [vmem:[#allocation3 + $0x328] sm:$0xf]
    %v1302 = vld [vmem:[#allocation3 + $0x334] sm:$0xf]
    %v1303 = vld [vmem:[#allocation3 + $0x340] sm:$0xf]
    %v1304 = vld [vmem:[#allocation3 + $0x34c] sm:$0xf]
    %v1305 = vld [vmem:[#allocation3 + $0x358] sm:$0xf]
    %v1306 = vld [vmem:[#allocation5 + $0x68] sm:$0x1]
    %v1307 = vlaneseq
    %v1308 = vshrl.u32 %v1307, 7
    %v1309 = vsub.s32 0, %v1308
    %v1310 = vrot.slane %v1306, %v1309
    %v1327 = vunpack.c.l.b16 %v1290
    %v1328 = vunpack.c.l.b16 %v1291
    %v1329 = vunpack.c.l.b16 %v1292
    %v1330 = vunpack.c.l.b16 %v1293
    %v1331 = vunpack.c.l.b16 %v1294
    %v1332 = vunpack.c.l.b16 %v1295
    %v1333 = vunpack.c.l.b16 %v1296
    %v1334 = vunpack.c.l.b16 %v1297
    %v1335 = vunpack.c.l.b16 %v1298
    %v1336 = vunpack.c.l.b16 %v1299
    %v1337 = vunpack.c.l.b16 %v1300
    %v1338 = vunpack.c.l.b16 %v1301
    %v1339 = vunpack.c.l.b16 %v1302
    %v1340 = vunpack.c.l.b16 %v1303
    %v1341 = vunpack.c.l.b16 %v1304
    %v1342 = vunpack.c.l.b16 %v1305
    %v1343 = vpack.c.b16 %v1328, %v1327
    %v1344 = vpack.c.b16 %v1330, %v1329
    %v1345 = vpack.c.b16 %v1332, %v1331
    %v1346 = vpack.c.b16 %v1334, %v1333
    %v1347 = vpack.c.b16 %v1336, %v1335
    %v1348 = vpack.c.b16 %v1338, %v1337
    %v1349 = vpack.c.b16 %v1340, %v1339
    %v1350 = vpack.c.b16 %v1342, %v1341
    %1359 = vmatprep.subr.bf16.mxu0 0
    %1360 = vmatpush1.bf16.msra.mxu0 %v1343
    %1361 = vmatprep.subr.bf16.mxu0 0
    %1362 = vmatpush1.bf16.msra.mxu0 %v1344
    %1363 = vmatprep.subr.bf16.mxu0 0
    %1364 = vmatpush1.bf16.msra.mxu0 %v1345
    %1365 = vmatprep.subr.bf16.mxu0 0
    %1366 = vmatpush1.bf16.msra.mxu0 %v1346
    %1367 = vmatprep.subr.bf16.mxu0 0
    %1368 = vmatpush1.bf16.msra.mxu0 %v1347
    %1369 = vmatprep.subr.bf16.mxu0 0
    %1370 = vmatpush1.bf16.msra.mxu0 %v1348
    %1371 = vmatprep.subr.bf16.mxu0 0
    %1372 = vmatpush1.bf16.msra.mxu0 %v1349
    %1373 = vmatprep.subr.bf16.mxu0 0
    %1374 = vmatpush1.bf16.msra.mxu0 %v1350
    %1375 = vmatprep.subr.bf16.mxu0 0
    %1376 = vmatpush1.bf16.msra.mxu0 0
    %1377 = vmatprep.subr.bf16.mxu0 0
    %1378 = vmatpush1.bf16.msra.mxu0 0
    %1379 = vmatprep.subr.bf16.mxu0 0
    %1380 = vmatpush1.bf16.msra.mxu0 0
    %1381 = vmatprep.subr.bf16.mxu0 0
    %1382 = vmatpush1.bf16.msra.mxu0 0
    %1383 = vmatprep.subr.bf16.mxu0 0
    %1384 = vmatpush1.bf16.msra.mxu0 0
    %1385 = vmatprep.subr.bf16.mxu0 0
    %1386 = vmatpush1.bf16.msra.mxu0 0
    %1387 = vmatprep.subr.bf16.mxu0 0
    %1388 = vmatpush1.bf16.msra.mxu0 0
    %1389 = vmatprep.subr.bf16.mxu0 0
    %1390 = vmatpush1.bf16.msra.mxu0 0
    %1391 = vmatprep.mubr.bf16.mxu0 0
    %1392 = vmatmul.mubr.bf16.gmra.mrb[0].mxu0 %v1289
    %v1393 = vpop.f32.mrb[0].mxu0
    %v1394 = vadd.f32 %v1310, %v1393
    %v1395 = vpop.f32.mrb[0].mxu0
    %v1396 = vpop.f32.mrb[0].mxu0
    %v1397 = vadd.f32 %v1310, %v1396
    %v1398 = vpop.f32.mrb[0].mxu0
    %1399 = vdwg.mxu0
    %v1400 = vmax.f32 %v1394, 0.0
    %v1401 = vmax.f32 %v1397, 0.0
    %v1402 = vpack.c.bf16 %v1401, %v1400
    %v1403 = vld [vmem:[#allocation3 + $0x2a8] sm:$0xf]
    %v1404 = vld [vmem:[#allocation3 + $0x2b4] sm:$0xf]
    %v1405 = vld [vmem:[#allocation3 + $0x2c0] sm:$0xf]
    %v1406 = vld [vmem:[#allocation3 + $0x2cc] sm:$0xf]
    %v1407 = vld [vmem:[#allocation3 + $0x2d8] sm:$0xf]
    %v1408 = vld [vmem:[#allocation3 + $0x2e4] sm:$0xf]
    %v1409 = vld [vmem:[#allocation3 + $0x2f0] sm:$0xf]
    %v1410 = vld [vmem:[#allocation3 + $0x2fc] sm:$0xf]
    %v1411 = vld [vmem:[#allocation3 + $0x308] sm:$0xf]
    %v1412 = vld [vmem:[#allocation3 + $0x314] sm:$0xf]
    %v1413 = vld [vmem:[#allocation3 + $0x320] sm:$0xf]
    %v1414 = vld [vmem:[#allocation3 + $0x32c] sm:$0xf]
    %v1415 = vld [vmem:[#allocation3 + $0x338] sm:$0xf]
    %v1416 = vld [vmem:[#allocation3 + $0x344] sm:$0xf]
    %v1417 = vld [vmem:[#allocation3 + $0x350] sm:$0xf]
    %v1418 = vld [vmem:[#allocation3 + $0x35c] sm:$0xf]
    %v1419 = vld [vmem:[#allocation5 + $0x70] sm:$0x1]
    %v1420 = vlaneseq
    %v1421 = vshrl.u32 %v1420, 7
    %v1422 = vsub.s32 0, %v1421
    %v1423 = vrot.slane %v1419, %v1422
    %v1440 = vunpack.c.l.b16 %v1403
    %v1441 = vunpack.c.l.b16 %v1404
    %v1442 = vunpack.c.l.b16 %v1405
    %v1443 = vunpack.c.l.b16 %v1406
    %v1444 = vunpack.c.l.b16 %v1407
    %v1445 = vunpack.c.l.b16 %v1408
    %v1446 = vunpack.c.l.b16 %v1409
    %v1447 = vunpack.c.l.b16 %v1410
    %v1448 = vunpack.c.l.b16 %v1411
    %v1449 = vunpack.c.l.b16 %v1412
    %v1450 = vunpack.c.l.b16 %v1413
    %v1451 = vunpack.c.l.b16 %v1414
    %v1452 = vunpack.c.l.b16 %v1415
    %v1453 = vunpack.c.l.b16 %v1416
    %v1454 = vunpack.c.l.b16 %v1417
    %v1455 = vunpack.c.l.b16 %v1418
    %v1456 = vpack.c.b16 %v1441, %v1440
    %v1457 = vpack.c.b16 %v1443, %v1442
    %v1458 = vpack.c.b16 %v1445, %v1444
    %v1459 = vpack.c.b16 %v1447, %v1446
    %v1460 = vpack.c.b16 %v1449, %v1448
    %v1461 = vpack.c.b16 %v1451, %v1450
    %v1462 = vpack.c.b16 %v1453, %v1452
    %v1463 = vpack.c.b16 %v1455, %v1454
    %1472 = vmatprep.subr.bf16.mxu0 0
    %1473 = vmatpush1.bf16.msra.mxu0 %v1456
    %1474 = vmatprep.subr.bf16.mxu0 0
    %1475 = vmatpush1.bf16.msra.mxu0 %v1457
    %1476 = vmatprep.subr.bf16.mxu0 0
    %1477 = vmatpush1.bf16.msra.mxu0 %v1458
    %1478 = vmatprep.subr.bf16.mxu0 0
    %1479 = vmatpush1.bf16.msra.mxu0 %v1459
    %1480 = vmatprep.subr.bf16.mxu0 0
    %1481 = vmatpush1.bf16.msra.mxu0 %v1460
    %1482 = vmatprep.subr.bf16.mxu0 0
    %1483 = vmatpush1.bf16.msra.mxu0 %v1461
    %1484 = vmatprep.subr.bf16.mxu0 0
    %1485 = vmatpush1.bf16.msra.mxu0 %v1462
    %1486 = vmatprep.subr.bf16.mxu0 0
    %1487 = vmatpush1.bf16.msra.mxu0 %v1463
    %1488 = vmatprep.subr.bf16.mxu0 0
    %1489 = vmatpush1.bf16.msra.mxu0 0
    %1490 = vmatprep.subr.bf16.mxu0 0
    %1491 = vmatpush1.bf16.msra.mxu0 0
    %1492 = vmatprep.subr.bf16.mxu0 0
    %1493 = vmatpush1.bf16.msra.mxu0 0
    %1494 = vmatprep.subr.bf16.mxu0 0
    %1495 = vmatpush1.bf16.msra.mxu0 0
    %1496 = vmatprep.subr.bf16.mxu0 0
    %1497 = vmatpush1.bf16.msra.mxu0 0
    %1498 = vmatprep.subr.bf16.mxu0 0
    %1499 = vmatpush1.bf16.msra.mxu0 0
    %1500 = vmatprep.subr.bf16.mxu0 0
    %1501 = vmatpush1.bf16.msra.mxu0 0
    %1502 = vmatprep.subr.bf16.mxu0 0
    %1503 = vmatpush1.bf16.msra.mxu0 0
    %1504 = vmatprep.mubr.bf16.mxu0 0
    %1505 = vmatmul.mubr.bf16.gmra.mrb[0].mxu0 %v1402
    %v1506 = vpop.f32.mrb[0].mxu0
    %v1507 = vadd.f32 %v1423, %v1506
    %v1508 = vpop.f32.mrb[0].mxu0
    %v1509 = vpop.f32.mrb[0].mxu0
    %v1510 = vadd.f32 %v1423, %v1509
    %v1511 = vpop.f32.mrb[0].mxu0
    %1512 = vdwg.mxu0
    %v1513 = vadd.f32 %v1259, %v1507
    %v1514 = vadd.f32 %v1260, %v1510
    %v1515 = vld [vmem:[#allocation5 + $0xa8] sm:$0x1]
    %v1516 = vlaneseq
    %v1517 = vshrl.u32 %v1516, 7
    %v1518 = vsub.s32 0, %v1517
    %v1519 = vrot.slane %v1515, %v1518
    %v1520 = vmul.f32 %v1513, %v1519
    %v1521 = vmul.f32 %v1514, %v1519
    %v1522 = vld [vmem:[#allocation5 + $0xb0] sm:$0x1]
    %v1523 = vlaneseq
    %v1524 = vshrl.u32 %v1523, 7
    %v1525 = vsub.s32 0, %v1524
    %v1526 = vrot.slane %v1522, %v1525
    %v1527 = vadd.f32 %v1520, %v1526
    %v1528 = vadd.f32 %v1521, %v1526
    %v1529 = vpack.c.bf16 %v1284, %v1283
    %v1530 = vpack.c.bf16 %v1286, %v1285
    %v1531 = vpack.c.bf16 %v1288, %v1287
    %v1532 = vld [vmem:[#allocation3 + $0x360] sm:$0xf]
    %v1533 = vld [vmem:[#allocation3 + $0x36c] sm:$0xf]
    %v1534 = vld [vmem:[#allocation3 + $0x378] sm:$0xf]
    %v1535 = vld [vmem:[#allocation3 + $0x384] sm:$0xf]
    %v1536 = vld [vmem:[#allocation3 + $0x390] sm:$0xf]
    %v1537 = vld [vmem:[#allocation3 + $0x39c] sm:$0xf]
    %v1538 = vld [vmem:[#allocation3 + $0x3a8] sm:$0xf]
    %v1539 = vld [vmem:[#allocation3 + $0x3b4] sm:$0xf]
    %v1540 = vld [vmem:[#allocation3 + $0x3c0] sm:$0xf]
    %v1541 = vld [vmem:[#allocation3 + $0x3cc] sm:$0xf]
    %v1542 = vld [vmem:[#allocation3 + $0x3d8] sm:$0xf]
    %v1543 = vld [vmem:[#allocation3 + $0x3e4] sm:$0xf]
    %v1544 = vld [vmem:[#allocation3 + $0x3f0] sm:$0xf]
    %v1545 = vld [vmem:[#allocation3 + $0x3fc] sm:$0xf]
    %v1546 = vld [vmem:[#allocation3 + $0x408] sm:$0xf]
    %v1547 = vld [vmem:[#allocation3 + $0x414] sm:$0xf]
    %v1548 = vld [vmem:[#allocation5 + $0x78] sm:$0x1]
    %v1549 = vlaneseq
    %v1550 = vshrl.u32 %v1549, 7
    %v1551 = vsub.s32 0, %v1550
    %v1552 = vrot.slane %v1548, %v1551
    %v1569 = vunpack.c.l.b16 %v1532
    %v1570 = vunpack.c.l.b16 %v1533
    %v1571 = vunpack.c.l.b16 %v1534
    %v1572 = vunpack.c.l.b16 %v1535
    %v1573 = vunpack.c.l.b16 %v1536
    %v1574 = vunpack.c.l.b16 %v1537
    %v1575 = vunpack.c.l.b16 %v1538
    %v1576 = vunpack.c.l.b16 %v1539
    %v1577 = vunpack.c.l.b16 %v1540
    %v1578 = vunpack.c.l.b16 %v1541
    %v1579 = vunpack.c.l.b16 %v1542
    %v1580 = vunpack.c.l.b16 %v1543
    %v1581 = vunpack.c.l.b16 %v1544
    %v1582 = vunpack.c.l.b16 %v1545
    %v1583 = vunpack.c.l.b16 %v1546
    %v1584 = vunpack.c.l.b16 %v1547
    %v1585 = vpack.c.b16 %v1570, %v1569
    %v1586 = vpack.c.b16 %v1572, %v1571
    %v1587 = vpack.c.b16 %v1574, %v1573
    %v1588 = vpack.c.b16 %v1576, %v1575
    %v1589 = vpack.c.b16 %v1578, %v1577
    %v1590 = vpack.c.b16 %v1580, %v1579
    %v1591 = vpack.c.b16 %v1582, %v1581
    %v1592 = vpack.c.b16 %v1584, %v1583
    %1601 = vmatprep.subr.bf16.mxu0 0
    %1602 = vmatpush1.bf16.msra.mxu0 %v1585
    %1603 = vmatprep.subr.bf16.mxu0 0
    %1604 = vmatpush1.bf16.msra.mxu0 %v1586
    %1605 = vmatprep.subr.bf16.mxu0 0
    %1606 = vmatpush1.bf16.msra.mxu0 %v1587
    %1607 = vmatprep.subr.bf16.mxu0 0
    %1608 = vmatpush1.bf16.msra.mxu0 %v1588
    %1609 = vmatprep.subr.bf16.mxu0 0
    %1610 = vmatpush1.bf16.msra.mxu0 %v1589
    %1611 = vmatprep.subr.bf16.mxu0 0
    %1612 = vmatpush1.bf16.msra.mxu0 %v1590
    %1613 = vmatprep.subr.bf16.mxu0 0
    %1614 = vmatpush1.bf16.msra.mxu0 %v1591
    %1615 = vmatprep.subr.bf16.mxu0 0
    %1616 = vmatpush1.bf16.msra.mxu0 %v1592
    %1617 = vmatprep.subr.bf16.mxu0 0
    %1618 = vmatpush1.bf16.msra.mxu0 0
    %1619 = vmatprep.subr.bf16.mxu0 0
    %1620 = vmatpush1.bf16.msra.mxu0 0
    %1621 = vmatprep.subr.bf16.mxu0 0
    %1622 = vmatpush1.bf16.msra.mxu0 0
    %1623 = vmatprep.subr.bf16.mxu0 0
    %1624 = vmatpush1.bf16.msra.mxu0 0
    %1625 = vmatprep.subr.bf16.mxu0 0
    %1626 = vmatpush1.bf16.msra.mxu0 0
    %1627 = vmatprep.subr.bf16.mxu0 0
    %1628 = vmatpush1.bf16.msra.mxu0 0
    %1629 = vmatprep.subr.bf16.mxu0 0
    %1630 = vmatpush1.bf16.msra.mxu0 0
    %1631 = vmatprep.subr.bf16.mxu0 0
    %1632 = vmatpush1.bf16.msra.mxu0 0
    %1633 = vmatprep.mubr.bf16.mxu0 0
    %1634 = vmatmul.mubr.bf16.gmra.mrb[0].mxu0 %v1529
    %v1635 = vpop.f32.mrb[0].mxu0
    %v1636 = vadd.f32 %v1552, %v1635
    %v1637 = vpop.f32.mrb[0].mxu0
    %v1638 = vpop.f32.mrb[0].mxu0
    %v1639 = vadd.f32 %v1552, %v1638
    %v1640 = vpop.f32.mrb[0].mxu0
    %1641 = vmatprep.mubr.bf16.mxu0 0
    %1642 = vmatmul.mubr.bf16.gmra.mrb[0].mxu0 %v1530
    %v1643 = vpop.f32.mrb[0].mxu0
    %v1644 = vadd.f32 %v1552, %v1643
    %v1645 = vpop.f32.mrb[0].mxu0
    %v1646 = vpop.f32.mrb[0].mxu0
    %v1647 = vadd.f32 %v1552, %v1646
    %v1648 = vpop.f32.mrb[0].mxu0
    %1649 = vmatprep.mubr.bf16.mxu0 0
    %1650 = vmatmul.mubr.bf16.gmra.mrb[0].mxu0 %v1531
    %v1651 = vpop.f32.mrb[0].mxu0
    %v1652 = vadd.f32 %v1552, %v1651
    %v1653 = vpop.f32.mrb[0].mxu0
    %v1654 = vpop.f32.mrb[0].mxu0
    %v1655 = vadd.f32 %v1552, %v1654
    %v1656 = vpop.f32.mrb[0].mxu0
    %1657 = vdwg.mxu0
    %v1658 = vmax.f32 %v1636, 0.0
    %v1659 = vmax.f32 %v1639, 0.0
    %v1660 = vmax.f32 %v1644, 0.0
    %v1661 = vmax.f32 %v1647, 0.0
    %v1662 = vmax.f32 %v1652, 0.0
    %v1663 = vmax.f32 %v1655, 0.0
    %v1664 = vpack.c.bf16 %v1659, %v1658
    %v1665 = vpack.c.bf16 %v1661, %v1660
    %v1666 = vpack.c.bf16 %v1663, %v1662
    %v1667 = vld [vmem:[#allocation3 + $0x364] sm:$0xf]
    %v1668 = vld [vmem:[#allocation3 + $0x370] sm:$0xf]
    %v1669 = vld [vmem:[#allocation3 + $0x37c] sm:$0xf]
    %v1670 = vld [vmem:[#allocation3 + $0x388] sm:$0xf]
    %v1671 = vld [vmem:[#allocation3 + $0x394] sm:$0xf]
    %v1672 = vld [vmem:[#allocation3 + $0x3a0] sm:$0xf]
    %v1673 = vld [vmem:[#allocation3 + $0x3ac] sm:$0xf]
    %v1674 = vld [vmem:[#allocation3 + $0x3b8] sm:$0xf]
    %v1675 = vld [vmem:[#allocation3 + $0x3c4] sm:$0xf]
    %v1676 = vld [vmem:[#allocation3 + $0x3d0] sm:$0xf]
    %v1677 = vld [vmem:[#allocation3 + $0x3dc] sm:$0xf]
    %v1678 = vld [vmem:[#allocation3 + $0x3e8] sm:$0xf]
    %v1679 = vld [vmem:[#allocation3 + $0x3f4] sm:$0xf]
    %v1680 = vld [vmem:[#allocation3 + $0x400] sm:$0xf]
    %v1681 = vld [vmem:[#allocation3 + $0x40c] sm:$0xf]
    %v1682 = vld [vmem:[#allocation3 + $0x418] sm:$0xf]
    %v1683 = vld [vmem:[#allocation5 + $0x80] sm:$0x1]
    %v1684 = vlaneseq
    %v1685 = vshrl.u32 %v1684, 7
    %v1686 = vsub.s32 0, %v1685
    %v1687 = vrot.slane %v1683, %v1686
    %v1704 = vunpack.c.l.b16 %v1667
    %v1705 = vunpack.c.l.b16 %v1668
    %v1706 = vunpack.c.l.b16 %v1669
    %v1707 = vunpack.c.l.b16 %v1670
    %v1708 = vunpack.c.l.b16 %v1671
    %v1709 = vunpack.c.l.b16 %v1672
    %v1710 = vunpack.c.l.b16 %v1673
    %v1711 = vunpack.c.l.b16 %v1674
    %v1712 = vunpack.c.l.b16 %v1675
    %v1713 = vunpack.c.l.b16 %v1676
    %v1714 = vunpack.c.l.b16 %v1677
    %v1715 = vunpack.c.l.b16 %v1678
    %v1716 = vunpack.c.l.b16 %v1679
    %v1717 = vunpack.c.l.b16 %v1680
    %v1718 = vunpack.c.l.b16 %v1681
    %v1719 = vunpack.c.l.b16 %v1682
    %v1720 = vpack.c.b16 %v1705, %v1704
    %v1721 = vpack.c.b16 %v1707, %v1706
    %v1722 = vpack.c.b16 %v1709, %v1708
    %v1723 = vpack.c.b16 %v1711, %v1710
    %v1724 = vpack.c.b16 %v1713, %v1712
    %v1725 = vpack.c.b16 %v1715, %v1714
    %v1726 = vpack.c.b16 %v1717, %v1716
    %v1727 = vpack.c.b16 %v1719, %v1718
    %1736 = vmatprep.subr.bf16.mxu0 0
    %1737 = vmatpush1.bf16.msra.mxu0 %v1720
    %1738 = vmatprep.subr.bf16.mxu0 0
    %1739 = vmatpush1.bf16.msra.mxu0 %v1721
    %1740 = vmatprep.subr.bf16.mxu0 0
    %1741 = vmatpush1.bf16.msra.mxu0 %v1722
    %1742 = vmatprep.subr.bf16.mxu0 0
    %1743 = vmatpush1.bf16.msra.mxu0 %v1723
    %1744 = vmatprep.subr.bf16.mxu0 0
    %1745 = vmatpush1.bf16.msra.mxu0 %v1724
    %1746 = vmatprep.subr.bf16.mxu0 0
    %1747 = vmatpush1.bf16.msra.mxu0 %v1725
    %1748 = vmatprep.subr.bf16.mxu0 0
    %1749 = vmatpush1.bf16.msra.mxu0 %v1726
    %1750 = vmatprep.subr.bf16.mxu0 0
    %1751 = vmatpush1.bf16.msra.mxu0 %v1727
    %1752 = vmatprep.subr.bf16.mxu0 0
    %1753 = vmatpush1.bf16.msra.mxu0 0
    %1754 = vmatprep.subr.bf16.mxu0 0
    %1755 = vmatpush1.bf16.msra.mxu0 0
    %1756 = vmatprep.subr.bf16.mxu0 0
    %1757 = vmatpush1.bf16.msra.mxu0 0
    %1758 = vmatprep.subr.bf16.mxu0 0
    %1759 = vmatpush1.bf16.msra.mxu0 0
    %1760 = vmatprep.subr.bf16.mxu0 0
    %1761 = vmatpush1.bf16.msra.mxu0 0
    %1762 = vmatprep.subr.bf16.mxu0 0
    %1763 = vmatpush1.bf16.msra.mxu0 0
    %1764 = vmatprep.subr.bf16.mxu0 0
    %1765 = vmatpush1.bf16.msra.mxu0 0
    %1766 = vmatprep.subr.bf16.mxu0 0
    %1767 = vmatpush1.bf16.msra.mxu0 0
    %1768 = vmatprep.mubr.bf16.mxu0 0
    %1769 = vmatmul.mubr.bf16.gmra.mrb[0].mxu0 %v1664
    %v1770 = vpop.f32.mrb[0].mxu0
    %v1771 = vadd.f32 %v1687, %v1770
    %v1772 = vpop.f32.mrb[0].mxu0
    %v1773 = vpop.f32.mrb[0].mxu0
    %v1774 = vadd.f32 %v1687, %v1773
    %v1775 = vpop.f32.mrb[0].mxu0
    %1776 = vmatprep.mubr.bf16.mxu0 0
    %1777 = vmatmul.mubr.bf16.gmra.mrb[0].mxu0 %v1665
    %v1778 = vpop.f32.mrb[0].mxu0
    %v1779 = vadd.f32 %v1687, %v1778
    %v1780 = vpop.f32.mrb[0].mxu0
    %v1781 = vpop.f32.mrb[0].mxu0
    %v1782 = vadd.f32 %v1687, %v1781
    %v1783 = vpop.f32.mrb[0].mxu0
    %1784 = vmatprep.mubr.bf16.mxu0 0
    %1785 = vmatmul.mubr.bf16.gmra.mrb[0].mxu0 %v1666
    %v1786 = vpop.f32.mrb[0].mxu0
    %v1787 = vadd.f32 %v1687, %v1786
    %v1788 = vpop.f32.mrb[0].mxu0
    %v1789 = vpop.f32.mrb[0].mxu0
    %v1790 = vadd.f32 %v1687, %v1789
    %v1791 = vpop.f32.mrb[0].mxu0
    %1792 = vdwg.mxu0
    %v1793 = vadd.f32 %v1283, %v1771
    %v1794 = vadd.f32 %v1284, %v1774
    %v1795 = vadd.f32 %v1285, %v1779
    %v1796 = vadd.f32 %v1286, %v1782
    %v1797 = vadd.f32 %v1287, %v1787
    %v1798 = vadd.f32 %v1288, %v1790
    %v1799 = vld [vmem:[#allocation5 + $0xb8] sm:$0x1]
    %v1800 = vlaneseq
    %v1801 = vshrl.u32 %v1800, 7
    %v1802 = vsub.s32 0, %v1801
    %v1803 = vrot.slane %v1799, %v1802
    %v1804 = vmul.f32 %v1793, %v1803
    %v1805 = vmul.f32 %v1794, %v1803
    %v1806 = vmul.f32 %v1795, %v1803
    %v1807 = vmul.f32 %v1796, %v1803
    %v1808 = vmul.f32 %v1797, %v1803
    %v1809 = vmul.f32 %v1798, %v1803
    %v1810 = vld [vmem:[#allocation5 + $0xc0] sm:$0x1]
    %v1811 = vlaneseq
    %v1812 = vshrl.u32 %v1811, 7
    %v1813 = vsub.s32 0, %v1812
    %v1814 = vrot.slane %v1810, %v1813
    %v1815 = vadd.f32 %v1804, %v1814
    %v1816 = vadd.f32 %v1805, %v1814
    %v1817 = vadd.f32 %v1806, %v1814
    %v1818 = vadd.f32 %v1807, %v1814
    %v1819 = vadd.f32 %v1808, %v1814
    %v1820 = vadd.f32 %v1809, %v1814
    %v1821 = vpack.c.bf16 %v1528, %v1527
    %v1822 = vld [vmem:[#allocation3 + $0x420] sm:$0xff]
    %v1823 = vld [vmem:[#allocation3 + $0x428] sm:$0xf]
    %v1824 = vld [vmem:[#allocation3 + $0x42c] sm:$0xff]
    %v1825 = vld [vmem:[#allocation3 + $0x434] sm:$0xf]
    %v1826 = vld [vmem:[#allocation3 + $0x438] sm:$0xff]
    %v1827 = vld [vmem:[#allocation3 + $0x440] sm:$0xf]
    %v1828 = vld [vmem:[#allocation3 + $0x444] sm:$0xff]
    %v1829 = vld [vmem:[#allocation3 + $0x44c] sm:$0xf]
    %v1830 = vld [vmem:[#allocation3 + $0x450] sm:$0xff]
    %v1831 = vld [vmem:[#allocation3 + $0x458] sm:$0xf]
    %v1832 = vld [vmem:[#allocation3 + $0x45c] sm:$0xff]
    %v1833 = vld [vmem:[#allocation3 + $0x464] sm:$0xf]
    %v1834 = vld [vmem:[#allocation3 + $0x468] sm:$0xff]
    %v1835 = vld [vmem:[#allocation3 + $0x470] sm:$0xf]
    %v1836 = vld [vmem:[#allocation3 + $0x474] sm:$0xff]
    %v1837 = vld [vmem:[#allocation3 + $0x47c] sm:$0xf]
    %v1838 = vld [vmem:[#allocation3 + $0x480] sm:$0xff]
    %v1839 = vld [vmem:[#allocation3 + $0x488] sm:$0xf]
    %v1840 = vld [vmem:[#allocation3 + $0x48c] sm:$0xff]
    %v1841 = vld [vmem:[#allocation3 + $0x494] sm:$0xf]
    %v1842 = vld [vmem:[#allocation3 + $0x498] sm:$0xff]
    %v1843 = vld [vmem:[#allocation3 + $0x4a0] sm:$0xf]
    %v1844 = vld [vmem:[#allocation3 + $0x4a4] sm:$0xff]
    %v1845 = vld [vmem:[#allocation3 + $0x4ac] sm:$0xf]
    %v1846 = vld [vmem:[#allocation3 + $0x4b0] sm:$0xff]
    %v1847 = vld [vmem:[#allocation3 + $0x4b8] sm:$0xf]
    %v1848 = vld [vmem:[#allocation3 + $0x4bc] sm:$0xff]
    %v1849 = vld [vmem:[#allocation3 + $0x4c4] sm:$0xf]
    %v1850 = vld [vmem:[#allocation3 + $0x4c8] sm:$0xff]
    %v1851 = vld [vmem:[#allocation3 + $0x4d0] sm:$0xf]
    %v1852 = vld [vmem:[#allocation3 + $0x4d4] sm:$0xff]
    %v1853 = vld [vmem:[#allocation3 + $0x4dc] sm:$0xf]
    %v1886 = vunpack.c.l.b16 %v1822
    %v1887 = vunpack.c.h.b16 %v1822
    %v1888 = vunpack.c.l.b16 %v1823
    %v1889 = vunpack.c.l.b16 %v1824
    %v1890 = vunpack.c.h.b16 %v1824
    %v1891 = vunpack.c.l.b16 %v1825
    %v1892 = vunpack.c.l.b16 %v1826
    %v1893 = vunpack.c.h.b16 %v1826
    %v1894 = vunpack.c.l.b16 %v1827
    %v1895 = vunpack.c.l.b16 %v1828
    %v1896 = vunpack.c.h.b16 %v1828
    %v1897 = vunpack.c.l.b16 %v1829
    %v1898 = vunpack.c.l.b16 %v1830
    %v1899 = vunpack.c.h.b16 %v1830
    %v1900 = vunpack.c.l.b16 %v1831
    %v1901 = vunpack.c.l.b16 %v1832
    %v1902 = vunpack.c.h.b16 %v1832
    %v1903 = vunpack.c.l.b16 %v1833
    %v1904 = vunpack.c.l.b16 %v1834
    %v1905 = vunpack.c.h.b16 %v1834
    %v1906 = vunpack.c.l.b16 %v1835
    %v1907 = vunpack.c.l.b16 %v1836
    %v1908 = vunpack.c.h.b16 %v1836
    %v1909 = vunpack.c.l.b16 %v1837
    %v1910 = vunpack.c.l.b16 %v1838
    %v1911 = vunpack.c.h.b16 %v1838
    %v1912 = vunpack.c.l.b16 %v1839
    %v1913 = vunpack.c.l.b16 %v1840
    %v1914 = vunpack.c.h.b16 %v1840
    %v1915 = vunpack.c.l.b16 %v1841
    %v1916 = vunpack.c.l.b16 %v1842
    %v1917 = vunpack.c.h.b16 %v1842
    %v1918 = vunpack.c.l.b16 %v1843
    %v1919 = vunpack.c.l.b16 %v1844
    %v1920 = vunpack.c.h.b16 %v1844
    %v1921 = vunpack.c.l.b16 %v1845
    %v1922 = vunpack.c.l.b16 %v1846
    %v1923 = vunpack.c.h.b16 %v1846
    %v1924 = vunpack.c.l.b16 %v1847
    %v1925 = vunpack.c.l.b16 %v1848
    %v1926 = vunpack.c.h.b16 %v1848
    %v1927 = vunpack.c.l.b16 %v1849
    %v1928 = vunpack.c.l.b16 %v1850
    %v1929 = vunpack.c.h.b16 %v1850
    %v1930 = vunpack.c.l.b16 %v1851
    %v1931 = vunpack.c.l.b16 %v1852
    %v1932 = vunpack.c.h.b16 %v1852
    %v1933 = vunpack.c.l.b16 %v1853
    %v1934 = vpack.c.b16 %v1889, %v1886
    %v1935 = vpack.c.b16 %v1890, %v1887
    %v1936 = vpack.c.b16 %v1891, %v1888
    %v1937 = vpack.c.b16 %v1895, %v1892
    %v1938 = vpack.c.b16 %v1896, %v1893
    %v1939 = vpack.c.b16 %v1897, %v1894
    %v1940 = vpack.c.b16 %v1901, %v1898
    %v1941 = vpack.c.b16 %v1902, %v1899
    %v1942 = vpack.c.b16 %v1903, %v1900
    %v1943 = vpack.c.b16 %v1907, %v1904
    %v1944 = vpack.c.b16 %v1908, %v1905
    %v1945 = vpack.c.b16 %v1909, %v1906
    %v1946 = vpack.c.b16 %v1913, %v1910
    %v1947 = vpack.c.b16 %v1914, %v1911
    %v1948 = vpack.c.b16 %v1915, %v1912
    %v1949 = vpack.c.b16 %v1919, %v1916
    %v1950 = vpack.c.b16 %v1920, %v1917
    %v1951 = vpack.c.b16 %v1921, %v1918
    %v1952 = vpack.c.b16 %v1925, %v1922
    %v1953 = vpack.c.b16 %v1926, %v1923
    %v1954 = vpack.c.b16 %v1927, %v1924
    %v1955 = vpack.c.b16 %v1931, %v1928
    %v1956 = vpack.c.b16 %v1932, %v1929
    %v1957 = vpack.c.b16 %v1933, %v1930
    %1982 = vmatprep.subr.bf16.mxu0 %v1935
    %1983 = vmatpush1.bf16.msra.mxu0 %v1934
    %1984 = vmatprep.subr.bf16.mxu0 %v1938
    %1985 = vmatpush1.bf16.msra.mxu0 %v1937
    %1986 = vmatprep.subr.bf16.mxu0 %v1941
    %1987 = vmatpush1.bf16.msra.mxu0 %v1940
    %1988 = vmatprep.subr.bf16.mxu0 %v1944
    %1989 = vmatpush1.bf16.msra.mxu0 %v1943
    %1990 = vmatprep.subr.bf16.mxu0 %v1947
    %1991 = vmatpush1.bf16.msra.mxu0 %v1946
    %1992 = vmatprep.subr.bf16.mxu0 %v1950
    %1993 = vmatpush1.bf16.msra.mxu0 %v1949
    %1994 = vmatprep.subr.bf16.mxu0 %v1953
    %1995 = vmatpush1.bf16.msra.mxu0 %v1952
    %1996 = vmatprep.subr.bf16.mxu0 %v1956
    %1997 = vmatpush1.bf16.msra.mxu0 %v1955
    %1998 = vmatprep.subr.bf16.mxu0 0
    %1999 = vmatpush1.bf16.msra.mxu0 0
    %2000 = vmatprep.subr.bf16.mxu0 0
    %2001 = vmatpush1.bf16.msra.mxu0 0
    %2002 = vmatprep.subr.bf16.mxu0 0
    %2003 = vmatpush1.bf16.msra.mxu0 0
    %2004 = vmatprep.subr.bf16.mxu0 0
    %2005 = vmatpush1.bf16.msra.mxu0 0
    %2006 = vmatprep.subr.bf16.mxu0 0
    %2007 = vmatpush1.bf16.msra.mxu0 0
    %2008 = vmatprep.subr.bf16.mxu0 0
    %2009 = vmatpush1.bf16.msra.mxu0 0
    %2010 = vmatprep.subr.bf16.mxu0 0
    %2011 = vmatpush1.bf16.msra.mxu0 0
    %2012 = vmatprep.subr.bf16.mxu0 0
    %2013 = vmatpush1.bf16.msra.mxu0 0
    %2014 = vmatprep.mubr.bf16.mxu0 0
    %2015 = vmatmul.mubr.bf16.gmra.mrb[0].mxu0 %v1821
    %v2016 = vpop.f32.mrb[0].mxu0
    %v2017 = vadd.f32 0.0, %v2016
    %v2018 = vpop.f32.mrb[0].mxu0
    %v2019 = vadd.f32 0.0, %v2018
    %v2020 = vpop.f32.mrb[0].mxu0
    %v2021 = vadd.f32 0.0, %v2020
    %v2022 = vpop.f32.mrb[0].mxu0
    %v2023 = vadd.f32 0.0, %v2022
    %2024 = vdwg.mxu0
    %2025 = vmatprep.subr.bf16.mxu0 0
    %2026 = vmatpush1.bf16.msra.mxu0 %v1936
    %2027 = vmatprep.subr.bf16.mxu0 0
    %2028 = vmatpush1.bf16.msra.mxu0 %v1939
    %2029 = vmatprep.subr.bf16.mxu0 0
    %2030 = vmatpush1.bf16.msra.mxu0 %v1942
    %2031 = vmatprep.subr.bf16.mxu0 0
    %2032 = vmatpush1.bf16.msra.mxu0 %v1945
    %2033 = vmatprep.subr.bf16.mxu0 0
    %2034 = vmatpush1.bf16.msra.mxu0 %v1948
    %2035 = vmatprep.subr.bf16.mxu0 0
    %2036 = vmatpush1.bf16.msra.mxu0 %v1951
    %2037 = vmatprep.subr.bf16.mxu0 0
    %2038 = vmatpush1.bf16.msra.mxu0 %v1954
    %2039 = vmatprep.subr.bf16.mxu0 0
    %2040 = vmatpush1.bf16.msra.mxu0 %v1957
    %2041 = vmatprep.subr.bf16.mxu0 0
    %2042 = vmatpush1.bf16.msra.mxu0 0
    %2043 = vmatprep.subr.bf16.mxu0 0
    %2044 = vmatpush1.bf16.msra.mxu0 0
    %2045 = vmatprep.subr.bf16.mxu0 0
    %2046 = vmatpush1.bf16.msra.mxu0 0
    %2047 = vmatprep.subr.bf16.mxu0 0
    %2048 = vmatpush1.bf16.msra.mxu0 0
    %2049 = vmatprep.subr.bf16.mxu0 0
    %2050 = vmatpush1.bf16.msra.mxu0 0
    %2051 = vmatprep.subr.bf16.mxu0 0
    %2052 = vmatpush1.bf16.msra.mxu0 0
    %2053 = vmatprep.subr.bf16.mxu0 0
    %2054 = vmatpush1.bf16.msra.mxu0 0
    %2055 = vmatprep.subr.bf16.mxu0 0
    %2056 = vmatpush1.bf16.msra.mxu0 0
    %2057 = vmatprep.mubr.bf16.mxu0 0
    %2058 = vmatmul.mubr.bf16.gmra.mrb[0].mxu0 %v1821
    %v2059 = vpop.f32.mrb[0].mxu0
    %v2060 = vadd.f32 0.0, %v2059
    %v2061 = vpop.f32.mrb[0].mxu0
    %v2062 = vpop.f32.mrb[0].mxu0
    %v2063 = vadd.f32 0.0, %v2062
    %v2064 = vpop.f32.mrb[0].mxu0
    %2065 = vdwg.mxu0
    %v2066 = vpack.c.bf16 %v1816, %v1815
    %v2067 = vpack.c.bf16 %v1818, %v1817
    %v2068 = vpack.c.bf16 %v1820, %v1819
    %v2069 = vld [vmem:[#allocation3 + $0x4e0] sm:$0xff]
    %v2070 = vld [vmem:[#allocation3 + $0x4ec] sm:$0xff]
    %v2071 = vld [vmem:[#allocation3 + $0x4f8] sm:$0xff]
    %v2072 = vld [vmem:[#allocation3 + $0x504] sm:$0xff]
    %v2073 = vld [vmem:[#allocation3 + $0x510] sm:$0xff]
    %v2074 = vld [vmem:[#allocation3 + $0x51c] sm:$0xff]
    %v2075 = vld [vmem:[#allocation3 + $0x528] sm:$0xff]
    %v2076 = vld [vmem:[#allocation3 + $0x534] sm:$0xff]
    %v2077 = vld [vmem:[#allocation3 + $0x540] sm:$0xff]
    %v2078 = vld [vmem:[#allocation3 + $0x54c] sm:$0xff]
    %v2079 = vld [vmem:[#allocation3 + $0x558] sm:$0xff]
    %v2080 = vld [vmem:[#allocation3 + $0x564] sm:$0xff]
    %v2081 = vld [vmem:[#allocation3 + $0x570] sm:$0xff]
    %v2082 = vld [vmem:[#allocation3 + $0x57c] sm:$0xff]
    %v2083 = vld [vmem:[#allocation3 + $0x588] sm:$0xff]
    %v2084 = vld [vmem:[#allocation3 + $0x594] sm:$0xff]
    %v2101 = vunpack.c.l.b16 %v2069
    %v2102 = vunpack.c.h.b16 %v2069
    %v2103 = vunpack.c.l.b16 %v2070
    %v2104 = vunpack.c.h.b16 %v2070
    %v2105 = vunpack.c.l.b16 %v2071
    %v2106 = vunpack.c.h.b16 %v2071
    %v2107 = vunpack.c.l.b16 %v2072
    %v2108 = vunpack.c.h.b16 %v2072
    %v2109 = vunpack.c.l.b16 %v2073
    %v2110 = vunpack.c.h.b16 %v2073
    %v2111 = vunpack.c.l.b16 %v2074
    %v2112 = vunpack.c.h.b16 %v2074
    %v2113 = vunpack.c.l.b16 %v2075
    %v2114 = vunpack.c.h.b16 %v2075
    %v2115 = vunpack.c.l.b16 %v2076
    %v2116 = vunpack.c.h.b16 %v2076
    %v2117 = vunpack.c.l.b16 %v2077
    %v2118 = vunpack.c.h.b16 %v2077
    %v2119 = vunpack.c.l.b16 %v2078
    %v2120 = vunpack.c.h.b16 %v2078
    %v2121 = vunpack.c.l.b16 %v2079
    %v2122 = vunpack.c.h.b16 %v2079
    %v2123 = vunpack.c.l.b16 %v2080
    %v2124 = vunpack.c.h.b16 %v2080
    %v2125 = vunpack.c.l.b16 %v2081
    %v2126 = vunpack.c.h.b16 %v2081
    %v2127 = vunpack.c.l.b16 %v2082
    %v2128 = vunpack.c.h.b16 %v2082
    %v2129 = vunpack.c.l.b16 %v2083
    %v2130 = vunpack.c.h.b16 %v2083
    %v2131 = vunpack.c.l.b16 %v2084
    %v2132 = vunpack.c.h.b16 %v2084
    %v2133 = vpack.c.b16 %v2103, %v2101
    %v2134 = vpack.c.b16 %v2104, %v2102
    %v2135 = vpack.c.b16 %v2107, %v2105
    %v2136 = vpack.c.b16 %v2108, %v2106
    %v2137 = vpack.c.b16 %v2111, %v2109
    %v2138 = vpack.c.b16 %v2112, %v2110
    %v2139 = vpack.c.b16 %v2115, %v2113
    %v2140 = vpack.c.b16 %v2116, %v2114
    %v2141 = vpack.c.b16 %v2119, %v2117
    %v2142 = vpack.c.b16 %v2120, %v2118
    %v2143 = vpack.c.b16 %v2123, %v2121
    %v2144 = vpack.c.b16 %v2124, %v2122
    %v2145 = vpack.c.b16 %v2127, %v2125
    %v2146 = vpack.c.b16 %v2128, %v2126
    %v2147 = vpack.c.b16 %v2131, %v2129
    %v2148 = vpack.c.b16 %v2132, %v2130
    %2165 = vmatprep.subr.bf16.mxu0 %v2134
    %2166 = vmatpush1.bf16.msra.mxu0 %v2133
    %2167 = vmatprep.subr.bf16.mxu0 %v2136
    %2168 = vmatpush1.bf16.msra.mxu0 %v2135
    %2169 = vmatprep.subr.bf16.mxu0 %v2138
    %2170 = vmatpush1.bf16.msra.mxu0 %v2137
    %2171 = vmatprep.subr.bf16.mxu0 %v2140
    %2172 = vmatpush1.bf16.msra.mxu0 %v2139
    %2173 = vmatprep.subr.bf16.mxu0 %v2142
    %2174 = vmatpush1.bf16.msra.mxu0 %v2141
    %2175 = vmatprep.subr.bf16.mxu0 %v2144
    %2176 = vmatpush1.bf16.msra.mxu0 %v2143
    %2177 = vmatprep.subr.bf16.mxu0 %v2146
    %2178 = vmatpush1.bf16.msra.mxu0 %v2145
    %2179 = vmatprep.subr.bf16.mxu0 %v2148
    %2180 = vmatpush1.bf16.msra.mxu0 %v2147
    %2181 = vmatprep.subr.bf16.mxu0 0
    %2182 = vmatpush1.bf16.msra.mxu0 0
    %2183 = vmatprep.subr.bf16.mxu0 0
    %2184 = vmatpush1.bf16.msra.mxu0 0
    %2185 = vmatprep.subr.bf16.mxu0 0
    %2186 = vmatpush1.bf16.msra.mxu0 0
    %2187 = vmatprep.subr.bf16.mxu0 0
    %2188 = vmatpush1.bf16.msra.mxu0 0
    %2189 = vmatprep.subr.bf16.mxu0 0
    %2190 = vmatpush1.bf16.msra.mxu0 0
    %2191 = vmatprep.subr.bf16.mxu0 0
    %2192 = vmatpush1.bf16.msra.mxu0 0
    %2193 = vmatprep.subr.bf16.mxu0 0
    %2194 = vmatpush1.bf16.msra.mxu0 0
    %2195 = vmatprep.subr.bf16.mxu0 0
    %2196 = vmatpush1.bf16.msra.mxu0 0
    %2197 = vmatprep.mubr.bf16.mxu0 0
    %2198 = vmatmul.mubr.bf16.gmra.mrb[0].mxu0 %v2066
    %v2199 = vpop.f32.mrb[0].mxu0
    %v2200 = vadd.f32 0.0, %v2199
    %v2201 = vpop.f32.mrb[0].mxu0
    %v2202 = vpop.f32.mrb[0].mxu0
    %v2203 = vadd.f32 0.0, %v2202
    %v2204 = vpop.f32.mrb[0].mxu0
    %2205 = vmatprep.mubr.bf16.mxu0 0
    %2206 = vmatmul.mubr.bf16.gmra.mrb[0].mxu0 %v2067
    %v2207 = vpop.f32.mrb[0].mxu0
    %v2208 = vadd.f32 0.0, %v2207
    %v2209 = vpop.f32.mrb[0].mxu0
    %v2210 = vpop.f32.mrb[0].mxu0
    %v2211 = vadd.f32 0.0, %v2210
    %v2212 = vpop.f32.mrb[0].mxu0
    %2213 = vmatprep.mubr.bf16.mxu0 0
    %2214 = vmatmul.mubr.bf16.gmra.mrb[0].mxu0 %v2068
    %v2215 = vpop.f32.mrb[0].mxu0
    %v2216 = vadd.f32 0.0, %v2215
    %v2217 = vpop.f32.mrb[0].mxu0
    %v2218 = vpop.f32.mrb[0].mxu0
    %v2219 = vadd.f32 0.0, %v2218
    %v2220 = vpop.f32.mrb[0].mxu0
    %2221 = vdwg.mxu0
    %v2222 = vpack.c.bf16 %v2023, %v2019
    %v2223 = vpack.c.bf16 %v2063, %v2060
    %2224 = vmatprep.subr.bf16.mxu0 %v2223
    %2225 = vmatpush1.bf16.msra.mxu0 %v2222
    %2226 = vmatprep.subr.bf16.mxu0 0
    %2227 = vmatpush1.bf16.msra.mxu0 0
    %2228 = vmatprep.subr.bf16.mxu0 0
    %2229 = vmatpush1.bf16.msra.mxu0 0
    %2230 = vmatprep.subr.bf16.mxu0 0
    %2231 = vmatpush1.bf16.msra.mxu0 0
    %2232 = vmatprep.subr.bf16.mxu0 0
    %2233 = vmatpush1.bf16.msra.mxu0 0
    %2234 = vmatprep.subr.bf16.mxu0 0
    %2235 = vmatpush1.bf16.msra.mxu0 0
    %2236 = vmatprep.subr.bf16.mxu0 0
    %2237 = vmatpush1.bf16.msra.mxu0 0
    %2238 = vmatprep.subr.bf16.mxu0 0
    %2239 = vmatpush1.bf16.msra.mxu0 0
    %2240 = vmatprep.subr.bf16.mxu0 0
    %2241 = vmatpush1.bf16.msra.mxu0 0
    %2242 = vmatprep.subr.bf16.mxu0 0
    %2243 = vmatpush1.bf16.msra.mxu0 0
    %2244 = vmatprep.subr.bf16.mxu0 0
    %2245 = vmatpush1.bf16.msra.mxu0 0
    %2246 = vmatprep.subr.bf16.mxu0 0
    %2247 = vmatpush1.bf16.msra.mxu0 0
    %2248 = vmatprep.subr.bf16.mxu0 0
    %2249 = vmatpush1.bf16.msra.mxu0 0
    %2250 = vmatprep.subr.bf16.mxu0 0
    %2251 = vmatpush1.bf16.msra.mxu0 0
    %2252 = vmatprep.subr.bf16.mxu0 0
    %2253 = vmatpush1.bf16.msra.mxu0 0
    %2254 = vmatprep.subr.bf16.mxu0 0
    %2255 = vmatpush1.bf16.msra.mxu0 0
    %2256 = vmatprep.mubr.bf16.mxu0 0
    %2257 = vmatmul.mubr.bf16.gmra.mrb[0].mxu0 %v626
    %v2258 = vpop.f32.mrb[0].mxu0
    %v2259 = vadd.f32 0.0, %v2258
    %v2260 = vpop.f32.mrb[0].mxu0
    %v2261 = vadd.f32 0.0, %v2260
    %v2262 = vpop.f32.mrb[0].mxu0
    %v2263 = vadd.f32 0.0, %v2262
    %v2264 = vpop.f32.mrb[0].mxu0
    %v2265 = vadd.f32 0.0, %v2264
    %2266 = vmatprep.mubr.bf16.mxu0 0
    %2267 = vmatmul.mubr.bf16.gmra.mrb[0].mxu0 %v629
    %v2268 = vpop.f32.mrb[0].mxu0
    %v2269 = vadd.f32 0.0, %v2268
    %v2270 = vpop.f32.mrb[0].mxu0
    %v2271 = vadd.f32 0.0, %v2270
    %v2272 = vpop.f32.mrb[0].mxu0
    %v2273 = vadd.f32 0.0, %v2272
    %v2274 = vpop.f32.mrb[0].mxu0
    %v2275 = vadd.f32 0.0, %v2274
    %2276 = vmatprep.mubr.bf16.mxu0 0
    %2277 = vmatmul.mubr.bf16.gmra.mrb[0].mxu0 %v632
    %v2278 = vpop.f32.mrb[0].mxu0
    %v2279 = vadd.f32 0.0, %v2278
    %v2280 = vpop.f32.mrb[0].mxu0
    %v2281 = vadd.f32 0.0, %v2280
    %v2282 = vpop.f32.mrb[0].mxu0
    %v2283 = vadd.f32 0.0, %v2282
    %v2284 = vpop.f32.mrb[0].mxu0
    %v2285 = vadd.f32 0.0, %v2284
    %2286 = vdwg.mxu0
    %v2287 = vpack.c.bf16 %v2021, %v2017
    %2288 = vmatprep.subr.bf16.mxu0 0
    %2289 = vmatpush1.bf16.msra.mxu0 %v2287
    %2290 = vmatprep.subr.bf16.mxu0 0
    %2291 = vmatpush1.bf16.msra.mxu0 0
    %2292 = vmatprep.subr.bf16.mxu0 0
    %2293 = vmatpush1.bf16.msra.mxu0 0
    %2294 = vmatprep.subr.bf16.mxu0 0
    %2295 = vmatpush1.bf16.msra.mxu0 0
    %2296 = vmatprep.subr.bf16.mxu0 0
    %2297 = vmatpush1.bf16.msra.mxu0 0
    %2298 = vmatprep.subr.bf16.mxu0 0
    %2299 = vmatpush1.bf16.msra.mxu0 0
    %2300 = vmatprep.subr.bf16.mxu0 0
    %2301 = vmatpush1.bf16.msra.mxu0 0
    %2302 = vmatprep.subr.bf16.mxu0 0
    %2303 = vmatpush1.bf16.msra.mxu0 0
    %2304 = vmatprep.subr.bf16.mxu0 0
    %2305 = vmatpush1.bf16.msra.mxu0 0
    %2306 = vmatprep.subr.bf16.mxu0 0
    %2307 = vmatpush1.bf16.msra.mxu0 0
    %2308 = vmatprep.subr.bf16.mxu0 0
    %2309 = vmatpush1.bf16.msra.mxu0 0
    %2310 = vmatprep.subr.bf16.mxu0 0
    %2311 = vmatpush1.bf16.msra.mxu0 0
    %2312 = vmatprep.subr.bf16.mxu0 0
    %2313 = vmatpush1.bf16.msra.mxu0 0
    %2314 = vmatprep.subr.bf16.mxu0 0
    %2315 = vmatpush1.bf16.msra.mxu0 0
    %2316 = vmatprep.subr.bf16.mxu0 0
    %2317 = vmatpush1.bf16.msra.mxu0 0
    %2318 = vmatprep.subr.bf16.mxu0 0
    %2319 = vmatpush1.bf16.msra.mxu0 0
    %2320 = vmatprep.mubr.bf16.mxu0 0
    %2321 = vmatmul.mubr.bf16.gmra.mrb[0].mxu0 %v714
    %v2322 = vpop.f32.mrb[0].mxu0
    %v2323 = vadd.f32 0.0, %v2322
    %v2324 = vpop.f32.mrb[0].mxu0
    %v2325 = vpop.f32.mrb[0].mxu0
    %v2326 = vadd.f32 0.0, %v2325
    %v2327 = vpop.f32.mrb[0].mxu0
    %2328 = vmatprep.mubr.bf16.mxu0 0
    %2329 = vmatmul.mubr.bf16.gmra.mrb[0].mxu0 %v717
    %v2330 = vpop.f32.mrb[0].mxu0
    %v2331 = vadd.f32 0.0, %v2330
    %v2332 = vpop.f32.mrb[0].mxu0
    %v2333 = vpop.f32.mrb[0].mxu0
    %v2334 = vadd.f32 0.0, %v2333
    %v2335 = vpop.f32.mrb[0].mxu0
    %2336 = vmatprep.mubr.bf16.mxu0 0
    %2337 = vmatmul.mubr.bf16.gmra.mrb[0].mxu0 %v720
    %v2338 = vpop.f32.mrb[0].mxu0
    %v2339 = vadd.f32 0.0, %v2338
    %v2340 = vpop.f32.mrb[0].mxu0
    %v2341 = vpop.f32.mrb[0].mxu0
    %v2342 = vadd.f32 0.0, %v2341
    %v2343 = vpop.f32.mrb[0].mxu0
    %2344 = vdwg.mxu0
    %v2345 = vmul.f32 %v2259, %v2323
    %v2346 = vmul.f32 %v2263, %v2326
    %v2347 = vmul.f32 %v2269, %v2331
    %v2348 = vmul.f32 %v2273, %v2334
    %v2349 = vmul.f32 %v2279, %v2339
    %v2350 = vmul.f32 %v2283, %v2342
    %v2351 = vmul.f32 %v2345, %v2200
    %v2352 = vmul.f32 %v2346, %v2203
    %v2353 = vmul.f32 %v2347, %v2208
    %v2354 = vmul.f32 %v2348, %v2211
    %v2355 = vmul.f32 %v2349, %v2216
    %v2356 = vmul.f32 %v2350, %v2219
    %v2357 = vpack.c.bf16 %v2352, %v2351
    %v2358 = vpack.c.bf16 %v2354, %v2353
    %v2359 = vpack.c.bf16 %v2356, %v2355
    %2360 = vmatprep.subr.bf16.mxu0 0
    %2361 = vmatpush1.bf16.msra.mxu0 %v826
    %2362 = vmatprep.subr.bf16.mxu0 0
    %2363 = vmatpush1.bf16.msra.mxu0 %v827
    %2364 = vmatprep.subr.bf16.mxu0 0
    %2365 = vmatpush1.bf16.msra.mxu0 %v828
    %2366 = vmatprep.subr.bf16.mxu0 0
    %2367 = vmatpush1.bf16.msra.mxu0 %v829
    %2368 = vmatprep.subr.bf16.mxu0 0
    %2369 = vmatpush1.bf16.msra.mxu0 %v830
    %2370 = vmatprep.subr.bf16.mxu0 0
    %2371 = vmatpush1.bf16.msra.mxu0 %v831
    %2372 = vmatprep.subr.bf16.mxu0 0
    %2373 = vmatpush1.bf16.msra.mxu0 %v832
    %2374 = vmatprep.subr.bf16.mxu0 0
    %2375 = vmatpush1.bf16.msra.mxu0 %v833
    %2376 = vmatprep.subr.bf16.mxu0 0
    %2377 = vmatpush1.bf16.msra.mxu0 0
    %2378 = vmatprep.subr.bf16.mxu0 0
    %2379 = vmatpush1.bf16.msra.mxu0 0
    %2380 = vmatprep.subr.bf16.mxu0 0
    %2381 = vmatpush1.bf16.msra.mxu0 0
    %2382 = vmatprep.subr.bf16.mxu0 0
    %2383 = vmatpush1.bf16.msra.mxu0 0
    %2384 = vmatprep.subr.bf16.mxu0 0
    %2385 = vmatpush1.bf16.msra.mxu0 0
    %2386 = vmatprep.subr.bf16.mxu0 0
    %2387 = vmatpush1.bf16.msra.mxu0 0
    %2388 = vmatprep.subr.bf16.mxu0 0
    %2389 = vmatpush1.bf16.msra.mxu0 0
    %2390 = vmatprep.subr.bf16.mxu0 0
    %2391 = vmatpush1.bf16.msra.mxu0 0
    %2392 = vmatprep.mubr.bf16.mxu0 0
    %2393 = vmatmul.mubr.bf16.gmra.mrb[0].mxu0 %v2357
    %v2394 = vpop.f32.mrb[0].mxu0
    %v2395 = vadd.f32 0.0, %v2394
    %v2396 = vpop.f32.mrb[0].mxu0
    %v2397 = vpop.f32.mrb[0].mxu0
    %v2398 = vadd.f32 0.0, %v2397
    %v2399 = vpop.f32.mrb[0].mxu0
    %2400 = vmatprep.mubr.bf16.mxu0 0
    %2401 = vmatmul.mubr.bf16.gmra.mrb[0].mxu0 %v2358
    %v2402 = vpop.f32.mrb[0].mxu0
    %v2403 = vadd.f32 0.0, %v2402
    %v2404 = vpop.f32.mrb[0].mxu0
    %v2405 = vpop.f32.mrb[0].mxu0
    %v2406 = vadd.f32 0.0, %v2405
    %v2407 = vpop.f32.mrb[0].mxu0
    %2408 = vmatprep.mubr.bf16.mxu0 0
    %2409 = vmatmul.mubr.bf16.gmra.mrb[0].mxu0 %v2359
    %v2410 = vpop.f32.mrb[0].mxu0
    %v2411 = vadd.f32 0.0, %v2410
    %v2412 = vpop.f32.mrb[0].mxu0
    %v2413 = vpop.f32.mrb[0].mxu0
    %v2414 = vadd.f32 0.0, %v2413
    %v2415 = vpop.f32.mrb[0].mxu0
    %2416 = vdwg.mxu0
    %v2417 = vmax.f32 %v2395, -5.0
    %v2418 = vmax.f32 %v2398, -5.0
    %v2419 = vmax.f32 %v2403, -5.0
    %v2420 = vmax.f32 %v2406, -5.0
    %v2421 = vmax.f32 %v2411, -5.0
    %v2422 = vmax.f32 %v2414, -5.0
    %v2423 = vmin.f32 %v2417, 5.0
    %v2424 = vmin.f32 %v2418, 5.0
    %v2425 = vmin.f32 %v2419, 5.0
    %v2426 = vmin.f32 %v2420, 5.0
    %v2427 = vmin.f32 %v2421, 5.0
    %v2428 = vmin.f32 %v2422, 5.0
    %v2429 = vmul.f32 %v2423, 1.442695
    %v2430 = vpow.pop %v2429
    %v2431 = vmul.f32 %v2424, 1.442695
    %v2432 = vpow.pop %v2431
    %v2433 = vmul.f32 %v2425, 1.442695
    %v2434 = vpow.pop %v2433
    %v2435 = vmul.f32 %v2426, 1.442695
    %v2436 = vpow.pop %v2435
    %v2437 = vmul.f32 %v2427, 1.442695
    %v2438 = vpow.pop %v2437
    %v2439 = vmul.f32 %v2428, 1.442695
    %v2440 = vpow.pop %v2439
    %v2441 = vmul.f32 %v2261, %v2430
    %v2442 = vmul.f32 %v2265, %v2432
    %v2443 = vmul.f32 %v2271, %v2434
    %v2444 = vmul.f32 %v2275, %v2436
    %v2445 = vmul.f32 %v2281, %v2438
    %v2446 = vmul.f32 %v2285, %v2440
    %v2447 = vpack.c.bf16 %v2442, %v2441
    %v2448 = vpack.c.bf16 %v2444, %v2443
    %v2449 = vpack.c.bf16 %v2446, %v2445
    %2450 = vst [vmem:[#allocation2] sm:$0xff] %v2447
    %2451 = vst [vmem:[#allocation2 + $0x10] sm:$0xff] %v2448
    %2452 = vst [vmem:[#allocation2 + $0x20] sm:$0xff] %v2449
    %v2453 = vpack.c.bf16 %v2432, %v2430
    %v2454 = vpack.c.bf16 %v2436, %v2434
    %v2455 = vpack.c.bf16 %v2440, %v2438
    %2456 = vst [vmem:[#allocation2 + $0x8] sm:$0xff] %v2453
    %2457 = vst [vmem:[#allocation2 + $0x18] sm:$0xff] %v2454
    %2458 = vst [vmem:[#allocation2 + $0x28] sm:$0xff] %v2455
    %v2459 = vld [vmem:[#allocation2] sm:$0xff]
    %v2460 = vld [vmem:[#allocation2 + $0x8] sm:$0xff]
    %v2461 = vld [vmem:[#allocation2 + $0x10] sm:$0xff]
    %v2462 = vld [vmem:[#allocation2 + $0x18] sm:$0xff]
    %v2463 = vld [vmem:[#allocation2 + $0x20] sm:$0xff]
    %v2464 = vld [vmem:[#allocation2 + $0x28] sm:$0xff]
    %2465 = vmatprep.subr.bf16.mxu0 %v2460
    %2466 = vmatpush1.bf16.msra.mxu0 %v2459
    %2467 = vmatprep.subr.bf16.mxu0 %v2462
    %2468 = vmatpush1.bf16.msra.mxu0 %v2461
    %2469 = vmatprep.subr.bf16.mxu0 %v2464
    %2470 = vmatpush1.bf16.msra.mxu0 %v2463
    %2471 = vmatprep.subr.bf16.mxu0 0
    %2472 = vmatpush1.bf16.msra.mxu0 0
    %2473 = vmatprep.subr.bf16.mxu0 0
    %2474 = vmatpush1.bf16.msra.mxu0 0
    %2475 = vmatprep.subr.bf16.mxu0 0
    %2476 = vmatpush1.bf16.msra.mxu0 0
    %2477 = vmatprep.subr.bf16.mxu0 0
    %2478 = vmatpush1.bf16.msra.mxu0 0
    %2479 = vmatprep.subr.bf16.mxu0 0
    %2480 = vmatpush1.bf16.msra.mxu0 0
    %2481 = vmatprep.subr.bf16.mxu0 0
    %2482 = vmatpush1.bf16.msra.mxu0 0
    %2483 = vmatprep.subr.bf16.mxu0 0
    %2484 = vmatpush1.bf16.msra.mxu0 0
    %2485 = vmatprep.subr.bf16.mxu0 0
    %2486 = vmatpush1.bf16.msra.mxu0 0
    %2487 = vmatprep.subr.bf16.mxu0 0
    %2488 = vmatpush1.bf16.msra.mxu0 0
    %2489 = vmatprep.subr.bf16.mxu0 0
    %2490 = vmatpush1.bf16.msra.mxu0 0
    %2491 = vmatprep.subr.bf16.mxu0 0
    %2492 = vmatpush1.bf16.msra.mxu0 0
    %2493 = vmatprep.subr.bf16.mxu0 0
    %2494 = vmatpush1.bf16.msra.mxu0 0
    %2495 = vmatprep.subr.bf16.mxu0 0
    %2496 = vmatpush1.bf16.msra.mxu0 0
    %2497 = vmatprep.mubr.bf16.mxu0 0
    %2498 = vmatmul.mubr.bf16.gmra.mrb[0].mxu0 %v954
    %v2499 = vpop.f32.mrb[0].mxu0
    %v2500 = vadd.f32 0.0, %v2499
    %v2501 = vpop.f32.mrb[0].mxu0
    %v2502 = vadd.f32 0.0, %v2501
    %v2503 = vpop.f32.mrb[0].mxu0
    %v2504 = vadd.f32 0.0, %v2503
    %v2505 = vpop.f32.mrb[0].mxu0
    %v2506 = vadd.f32 0.0, %v2505
    %2507 = vdwg.mxu0
    %v2508 = vadd.f32 %v2502, 1e-06
    %v2509 = vadd.f32 %v2506, 1e-06
    %v2510 = vrcp.pop %v2508
    %v2511 = vmul.f32 %v2500, %v2510
    %v2512 = vrcp.pop %v2509
    %v2513 = vmul.f32 %v2504, %v2512
    %v2514 = vpack.c.bf16 %v2513, %v2511
    %v2515 = vld [vmem:[#allocation3 + $0x5a0] sm:$0xf]
    %v2516 = vld [vmem:[#allocation3 + $0x5ac] sm:$0xf]
    %v2517 = vld [vmem:[#allocation3 + $0x5b8] sm:$0xf]
    %v2518 = vld [vmem:[#allocation3 + $0x5c4] sm:$0xf]
    %v2519 = vld [vmem:[#allocation3 + $0x5d0] sm:$0xf]
    %v2520 = vld [vmem:[#allocation3 + $0x5dc] sm:$0xf]
    %v2521 = vld [vmem:[#allocation3 + $0x5e8] sm:$0xf]
    %v2522 = vld [vmem:[#allocation3 + $0x5f4] sm:$0xf]
    %v2523 = vld [vmem:[#allocation3 + $0x600] sm:$0xf]
    %v2524 = vld [vmem:[#allocation3 + $0x60c] sm:$0xf]
    %v2525 = vld [vmem:[#allocation3 + $0x618] sm:$0xf]
    %v2526 = vld [vmem:[#allocation3 + $0x624] sm:$0xf]
    %v2527 = vld [vmem:[#allocation3 + $0x630] sm:$0xf]
    %v2528 = vld [vmem:[#allocation3 + $0x63c] sm:$0xf]
    %v2529 = vld [vmem:[#allocation3 + $0x648] sm:$0xf]
    %v2530 = vld [vmem:[#allocation3 + $0x654] sm:$0xf]
    %v2531 = vld [vmem:[#allocation5 + $0xd0] sm:$0x1]
    %v2532 = vlaneseq
    %v2533 = vshrl.u32 %v2532, 7
    %v2534 = vsub.s32 0, %v2533
    %v2535 = vrot.slane %v2531, %v2534
    %v2552 = vunpack.c.l.b16 %v2515
    %v2553 = vunpack.c.l.b16 %v2516
    %v2554 = vunpack.c.l.b16 %v2517
    %v2555 = vunpack.c.l.b16 %v2518
    %v2556 = vunpack.c.l.b16 %v2519
    %v2557 = vunpack.c.l.b16 %v2520
    %v2558 = vunpack.c.l.b16 %v2521
    %v2559 = vunpack.c.l.b16 %v2522
    %v2560 = vunpack.c.l.b16 %v2523
    %v2561 = vunpack.c.l.b16 %v2524
    %v2562 = vunpack.c.l.b16 %v2525
    %v2563 = vunpack.c.l.b16 %v2526
    %v2564 = vunpack.c.l.b16 %v2527
    %v2565 = vunpack.c.l.b16 %v2528
    %v2566 = vunpack.c.l.b16 %v2529
    %v2567 = vunpack.c.l.b16 %v2530
    %v2568 = vpack.c.b16 %v2553, %v2552
    %v2569 = vpack.c.b16 %v2555, %v2554
    %v2570 = vpack.c.b16 %v2557, %v2556
    %v2571 = vpack.c.b16 %v2559, %v2558
    %v2572 = vpack.c.b16 %v2561, %v2560
    %v2573 = vpack.c.b16 %v2563, %v2562
    %v2574 = vpack.c.b16 %v2565, %v2564
    %v2575 = vpack.c.b16 %v2567, %v2566
    %2584 = vmatprep.subr.bf16.mxu0 0
    %2585 = vmatpush1.bf16.msra.mxu0 %v2568
    %2586 = vmatprep.subr.bf16.mxu0 0
    %2587 = vmatpush1.bf16.msra.mxu0 %v2569
    %2588 = vmatprep.subr.bf16.mxu0 0
    %2589 = vmatpush1.bf16.msra.mxu0 %v2570
    %2590 = vmatprep.subr.bf16.mxu0 0
    %2591 = vmatpush1.bf16.msra.mxu0 %v2571
    %2592 = vmatprep.subr.bf16.mxu0 0
    %2593 = vmatpush1.bf16.msra.mxu0 %v2572
    %2594 = vmatprep.subr.bf16.mxu0 0
    %2595 = vmatpush1.bf16.msra.mxu0 %v2573
    %2596 = vmatprep.subr.bf16.mxu0 0
    %2597 = vmatpush1.bf16.msra.mxu0 %v2574
    %2598 = vmatprep.subr.bf16.mxu0 0
    %2599 = vmatpush1.bf16.msra.mxu0 %v2575
    %2600 = vmatprep.subr.bf16.mxu0 0
    %2601 = vmatpush1.bf16.msra.mxu0 0
    %2602 = vmatprep.subr.bf16.mxu0 0
    %2603 = vmatpush1.bf16.msra.mxu0 0
    %2604 = vmatprep.subr.bf16.mxu0 0
    %2605 = vmatpush1.bf16.msra.mxu0 0
    %2606 = vmatprep.subr.bf16.mxu0 0
    %2607 = vmatpush1.bf16.msra.mxu0 0
    %2608 = vmatprep.subr.bf16.mxu0 0
    %2609 = vmatpush1.bf16.msra.mxu0 0
    %2610 = vmatprep.subr.bf16.mxu0 0
    %2611 = vmatpush1.bf16.msra.mxu0 0
    %2612 = vmatprep.subr.bf16.mxu0 0
    %2613 = vmatpush1.bf16.msra.mxu0 0
    %2614 = vmatprep.subr.bf16.mxu0 0
    %2615 = vmatpush1.bf16.msra.mxu0 0
    %2616 = vmatprep.mubr.bf16.mxu0 0
    %2617 = vmatmul.mubr.bf16.gmra.mrb[0].mxu0 %v2514
    %v2618 = vpop.f32.mrb[0].mxu0
    %v2619 = vadd.f32 %v2535, %v2618
    %v2620 = vpop.f32.mrb[0].mxu0
    %v2621 = vpop.f32.mrb[0].mxu0
    %v2622 = vadd.f32 %v2535, %v2621
    %v2623 = vpop.f32.mrb[0].mxu0
    %2624 = vdwg.mxu0
    %v2625 = vadd.f32 %v1527, %v2619
    %v2626 = vadd.f32 %v1528, %v2622
    %v2627 = vld [vmem:[#allocation5 + $0x100] sm:$0x1]
    %v2628 = vlaneseq
    %v2629 = vshrl.u32 %v2628, 7
    %v2630 = vsub.s32 0, %v2629
    %v2631 = vrot.slane %v2627, %v2630
    %v2632 = vmul.f32 %v2625, %v2631
    %v2633 = vmul.f32 %v2626, %v2631
    %v2634 = vld [vmem:[#allocation5 + $0x108] sm:$0x1]
    %v2635 = vlaneseq
    %v2636 = vshrl.u32 %v2635, 7
    %v2637 = vsub.s32 0, %v2636
    %v2638 = vrot.slane %v2634, %v2637
    %v2639 = vadd.f32 %v2632, %v2638
    %v2640 = vadd.f32 %v2633, %v2638
    %v2641 = vpack.c.bf16 %v2640, %v2639
    %v2642 = vld [vmem:[#allocation3 + $0x5a4] sm:$0xf]
    %v2643 = vld [vmem:[#allocation3 + $0x5b0] sm:$0xf]
    %v2644 = vld [vmem:[#allocation3 + $0x5bc] sm:$0xf]
    %v2645 = vld [vmem:[#allocation3 + $0x5c8] sm:$0xf]
    %v2646 = vld [vmem:[#allocation3 + $0x5d4] sm:$0xf]
    %v2647 = vld [vmem:[#allocation3 + $0x5e0] sm:$0xf]
    %v2648 = vld [vmem:[#allocation3 + $0x5ec] sm:$0xf]
    %v2649 = vld [vmem:[#allocation3 + $0x5f8] sm:$0xf]
    %v2650 = vld [vmem:[#allocation3 + $0x604] sm:$0xf]
    %v2651 = vld [vmem:[#allocation3 + $0x610] sm:$0xf]
    %v2652 = vld [vmem:[#allocation3 + $0x61c] sm:$0xf]
    %v2653 = vld [vmem:[#allocation3 + $0x628] sm:$0xf]
    %v2654 = vld [vmem:[#allocation3 + $0x634] sm:$0xf]
    %v2655 = vld [vmem:[#allocation3 + $0x640] sm:$0xf]
    %v2656 = vld [vmem:[#allocation3 + $0x64c] sm:$0xf]
    %v2657 = vld [vmem:[#allocation3 + $0x658] sm:$0xf]
    %v2658 = vld [vmem:[#allocation5 + $0xe0] sm:$0x1]
    %v2659 = vlaneseq
    %v2660 = vshrl.u32 %v2659, 7
    %v2661 = vsub.s32 0, %v2660
    %v2662 = vrot.slane %v2658, %v2661
    %v2679 = vunpack.c.l.b16 %v2642
    %v2680 = vunpack.c.l.b16 %v2643
    %v2681 = vunpack.c.l.b16 %v2644
    %v2682 = vunpack.c.l.b16 %v2645
    %v2683 = vunpack.c.l.b16 %v2646
    %v2684 = vunpack.c.l.b16 %v2647
    %v2685 = vunpack.c.l.b16 %v2648
    %v2686 = vunpack.c.l.b16 %v2649
    %v2687 = vunpack.c.l.b16 %v2650
    %v2688 = vunpack.c.l.b16 %v2651
    %v2689 = vunpack.c.l.b16 %v2652
    %v2690 = vunpack.c.l.b16 %v2653
    %v2691 = vunpack.c.l.b16 %v2654
    %v2692 = vunpack.c.l.b16 %v2655
    %v2693 = vunpack.c.l.b16 %v2656
    %v2694 = vunpack.c.l.b16 %v2657
    %v2695 = vpack.c.b16 %v2680, %v2679
    %v2696 = vpack.c.b16 %v2682, %v2681
    %v2697 = vpack.c.b16 %v2684, %v2683
    %v2698 = vpack.c.b16 %v2686, %v2685
    %v2699 = vpack.c.b16 %v2688, %v2687
    %v2700 = vpack.c.b16 %v2690, %v2689
    %v2701 = vpack.c.b16 %v2692, %v2691
    %v2702 = vpack.c.b16 %v2694, %v2693
    %2711 = vmatprep.subr.bf16.mxu0 0
    %2712 = vmatpush1.bf16.msra.mxu0 %v2695
    %2713 = vmatprep.subr.bf16.mxu0 0
    %2714 = vmatpush1.bf16.msra.mxu0 %v2696
    %2715 = vmatprep.subr.bf16.mxu0 0
    %2716 = vmatpush1.bf16.msra.mxu0 %v2697
    %2717 = vmatprep.subr.bf16.mxu0 0
    %2718 = vmatpush1.bf16.msra.mxu0 %v2698
    %2719 = vmatprep.subr.bf16.mxu0 0
    %2720 = vmatpush1.bf16.msra.mxu0 %v2699
    %2721 = vmatprep.subr.bf16.mxu0 0
    %2722 = vmatpush1.bf16.msra.mxu0 %v2700
    %2723 = vmatprep.subr.bf16.mxu0 0
    %2724 = vmatpush1.bf16.msra.mxu0 %v2701
    %2725 = vmatprep.subr.bf16.mxu0 0
    %2726 = vmatpush1.bf16.msra.mxu0 %v2702
    %2727 = vmatprep.subr.bf16.mxu0 0
    %2728 = vmatpush1.bf16.msra.mxu0 0
    %2729 = vmatprep.subr.bf16.mxu0 0
    %2730 = vmatpush1.bf16.msra.mxu0 0
    %2731 = vmatprep.subr.bf16.mxu0 0
    %2732 = vmatpush1.bf16.msra.mxu0 0
    %2733 = vmatprep.subr.bf16.mxu0 0
    %2734 = vmatpush1.bf16.msra.mxu0 0
    %2735 = vmatprep.subr.bf16.mxu0 0
    %2736 = vmatpush1.bf16.msra.mxu0 0
    %2737 = vmatprep.subr.bf16.mxu0 0
    %2738 = vmatpush1.bf16.msra.mxu0 0
    %2739 = vmatprep.subr.bf16.mxu0 0
    %2740 = vmatpush1.bf16.msra.mxu0 0
    %2741 = vmatprep.subr.bf16.mxu0 0
    %2742 = vmatpush1.bf16.msra.mxu0 0
    %2743 = vmatprep.mubr.bf16.mxu0 0
    %2744 = vmatmul.mubr.bf16.gmra.mrb[0].mxu0 %v2641
    %v2745 = vpop.f32.mrb[0].mxu0
    %v2746 = vadd.f32 %v2662, %v2745
    %v2747 = vpop.f32.mrb[0].mxu0
    %v2748 = vpop.f32.mrb[0].mxu0
    %v2749 = vadd.f32 %v2662, %v2748
    %v2750 = vpop.f32.mrb[0].mxu0
    %2751 = vdwg.mxu0
    %v2752 = vmax.f32 %v2746, 0.0
    %v2753 = vmax.f32 %v2749, 0.0
    %v2754 = vpack.c.bf16 %v2753, %v2752
    %v2755 = vld [vmem:[#allocation3 + $0x5a8] sm:$0xf]
    %v2756 = vld [vmem:[#allocation3 + $0x5b4] sm:$0xf]
    %v2757 = vld [vmem:[#allocation3 + $0x5c0] sm:$0xf]
    %v2758 = vld [vmem:[#allocation3 + $0x5cc] sm:$0xf]
    %v2759 = vld [vmem:[#allocation3 + $0x5d8] sm:$0xf]
    %v2760 = vld [vmem:[#allocation3 + $0x5e4] sm:$0xf]
    %v2761 = vld [vmem:[#allocation3 + $0x5f0] sm:$0xf]
    %v2762 = vld [vmem:[#allocation3 + $0x5fc] sm:$0xf]
    %v2763 = vld [vmem:[#allocation3 + $0x608] sm:$0xf]
    %v2764 = vld [vmem:[#allocation3 + $0x614] sm:$0xf]
    %v2765 = vld [vmem:[#allocation3 + $0x620] sm:$0xf]
    %v2766 = vld [vmem:[#allocation3 + $0x62c] sm:$0xf]
    %v2767 = vld [vmem:[#allocation3 + $0x638] sm:$0xf]
    %v2768 = vld [vmem:[#allocation3 + $0x644] sm:$0xf]
    %v2769 = vld [vmem:[#allocation3 + $0x650] sm:$0xf]
    %v2770 = vld [vmem:[#allocation3 + $0x65c] sm:$0xf]
    %v2771 = vld [vmem:[#allocation5 + $0xe8] sm:$0x1]
    %v2772 = vlaneseq
    %v2773 = vshrl.u32 %v2772, 7
    %v2774 = vsub.s32 0, %v2773
    %v2775 = vrot.slane %v2771, %v2774
    %v2792 = vunpack.c.l.b16 %v2755
    %v2793 = vunpack.c.l.b16 %v2756
    %v2794 = vunpack.c.l.b16 %v2757
    %v2795 = vunpack.c.l.b16 %v2758
    %v2796 = vunpack.c.l.b16 %v2759
    %v2797 = vunpack.c.l.b16 %v2760
    %v2798 = vunpack.c.l.b16 %v2761
    %v2799 = vunpack.c.l.b16 %v2762
    %v2800 = vunpack.c.l.b16 %v2763
    %v2801 = vunpack.c.l.b16 %v2764
    %v2802 = vunpack.c.l.b16 %v2765
    %v2803 = vunpack.c.l.b16 %v2766
    %v2804 = vunpack.c.l.b16 %v2767
    %v2805 = vunpack.c.l.b16 %v2768
    %v2806 = vunpack.c.l.b16 %v2769
    %v2807 = vunpack.c.l.b16 %v2770
    %v2808 = vpack.c.b16 %v2793, %v2792
    %v2809 = vpack.c.b16 %v2795, %v2794
    %v2810 = vpack.c.b16 %v2797, %v2796
    %v2811 = vpack.c.b16 %v2799, %v2798
    %v2812 = vpack.c.b16 %v2801, %v2800
    %v2813 = vpack.c.b16 %v2803, %v2802
    %v2814 = vpack.c.b16 %v2805, %v2804
    %v2815 = vpack.c.b16 %v2807, %v2806
    %2824 = vmatprep.subr.bf16.mxu0 0
    %2825 = vmatpush1.bf16.msra.mxu0 %v2808
    %2826 = vmatprep.subr.bf16.mxu0 0
    %2827 = vmatpush1.bf16.msra.mxu0 %v2809
    %2828 = vmatprep.subr.bf16.mxu0 0
    %2829 = vmatpush1.bf16.msra.mxu0 %v2810
    %2830 = vmatprep.subr.bf16.mxu0 0
    %2831 = vmatpush1.bf16.msra.mxu0 %v2811
    %2832 = vmatprep.subr.bf16.mxu0 0
    %2833 = vmatpush1.bf16.msra.mxu0 %v2812
    %2834 = vmatprep.subr.bf16.mxu0 0
    %2835 = vmatpush1.bf16.msra.mxu0 %v2813
    %2836 = vmatprep.subr.bf16.mxu0 0
    %2837 = vmatpush1.bf16.msra.mxu0 %v2814
    %2838 = vmatprep.subr.bf16.mxu0 0
    %2839 = vmatpush1.bf16.msra.mxu0 %v2815
    %2840 = vmatprep.subr.bf16.mxu0 0
    %2841 = vmatpush1.bf16.msra.mxu0 0
    %2842 = vmatprep.subr.bf16.mxu0 0
    %2843 = vmatpush1.bf16.msra.mxu0 0
    %2844 = vmatprep.subr.bf16.mxu0 0
    %2845 = vmatpush1.bf16.msra.mxu0 0
    %2846 = vmatprep.subr.bf16.mxu0 0
    %2847 = vmatpush1.bf16.msra.mxu0 0
    %2848 = vmatprep.subr.bf16.mxu0 0
    %2849 = vmatpush1.bf16.msra.mxu0 0
    %2850 = vmatprep.subr.bf16.mxu0 0
    %2851 = vmatpush1.bf16.msra.mxu0 0
    %2852 = vmatprep.subr.bf16.mxu0 0
    %2853 = vmatpush1.bf16.msra.mxu0 0
    %2854 = vmatprep.subr.bf16.mxu0 0
    %2855 = vmatpush1.bf16.msra.mxu0 0
    %2856 = vmatprep.mubr.bf16.mxu0 0
    %2857 = vmatmul.mubr.bf16.gmra.mrb[0].mxu0 %v2754
    %v2858 = vpop.f32.mrb[0].mxu0
    %v2859 = vadd.f32 %v2775, %v2858
    %v2860 = vpop.f32.mrb[0].mxu0
    %v2861 = vpop.f32.mrb[0].mxu0
    %v2862 = vadd.f32 %v2775, %v2861
    %v2863 = vpop.f32.mrb[0].mxu0
    %2864 = vdwg.mxu0
    %v2865 = vadd.f32 %v2639, %v2859
    %v2866 = vadd.f32 %v2640, %v2862
    %v2867 = vld [vmem:[#allocation5 + $0x120] sm:$0x1]
    %v2868 = vlaneseq
    %v2869 = vshrl.u32 %v2868, 7
    %v2870 = vsub.s32 0, %v2869
    %v2871 = vrot.slane %v2867, %v2870
    %v2872 = vmul.f32 %v2865, %v2871
    %v2873 = vmul.f32 %v2866, %v2871
    %v2874 = vld [vmem:[#allocation5 + $0x128] sm:$0x1]
    %v2875 = vlaneseq
    %v2876 = vshrl.u32 %v2875, 7
    %v2877 = vsub.s32 0, %v2876
    %v2878 = vrot.slane %v2874, %v2877
    %v2879 = vadd.f32 %v2872, %v2878
    %v2880 = vadd.f32 %v2873, %v2878
    %v2881 = vpack.c.bf16 %v2880, %v2879
    %v2882 = vld [vmem:[#allocation3 + $0x4] sm:$0xf]
    %v2883 = vld [vmem:[#allocation3 + $0x10] sm:$0xf]
    %v2884 = vld [vmem:[#allocation3 + $0x1c] sm:$0xf]
    %v2885 = vld [vmem:[#allocation3 + $0x28] sm:$0xf]
    %v2886 = vld [vmem:[#allocation3 + $0x34] sm:$0xf]
    %v2887 = vld [vmem:[#allocation3 + $0x40] sm:$0xf]
    %v2888 = vld [vmem:[#allocation3 + $0x4c] sm:$0xf]
    %v2889 = vld [vmem:[#allocation3 + $0x58] sm:$0xf]
    %v2890 = vld [vmem:[#allocation3 + $0x64] sm:$0xf]
    %v2891 = vld [vmem:[#allocation3 + $0x70] sm:$0xf]
    %v2892 = vld [vmem:[#allocation3 + $0x7c] sm:$0xf]
    %v2893 = vld [vmem:[#allocation3 + $0x88] sm:$0xf]
    %v2894 = vld [vmem:[#allocation3 + $0x94] sm:$0xf]
    %v2895 = vld [vmem:[#allocation3 + $0xa0] sm:$0xf]
    %v2896 = vld [vmem:[#allocation3 + $0xac] sm:$0xf]
    %v2897 = vld [vmem:[#allocation3 + $0xb8] sm:$0xf]
    %v2898 = vld [vmem:[#allocation5 + $0x48] sm:$0x1]
    %v2899 = vlaneseq
    %v2900 = vshrl.u32 %v2899, 7
    %v2901 = vsub.s32 0, %v2900
    %v2902 = vrot.slane %v2898, %v2901
    %v2919 = vunpack.c.l.b16 %v2882
    %v2920 = vunpack.c.l.b16 %v2883
    %v2921 = vunpack.c.l.b16 %v2884
    %v2922 = vunpack.c.l.b16 %v2885
    %v2923 = vunpack.c.l.b16 %v2886
    %v2924 = vunpack.c.l.b16 %v2887
    %v2925 = vunpack.c.l.b16 %v2888
    %v2926 = vunpack.c.l.b16 %v2889
    %v2927 = vunpack.c.l.b16 %v2890
    %v2928 = vunpack.c.l.b16 %v2891
    %v2929 = vunpack.c.l.b16 %v2892
    %v2930 = vunpack.c.l.b16 %v2893
    %v2931 = vunpack.c.l.b16 %v2894
    %v2932 = vunpack.c.l.b16 %v2895
    %v2933 = vunpack.c.l.b16 %v2896
    %v2934 = vunpack.c.l.b16 %v2897
    %v2935 = vpack.c.b16 %v2920, %v2919
    %v2936 = vpack.c.b16 %v2922, %v2921
    %v2937 = vpack.c.b16 %v2924, %v2923
    %v2938 = vpack.c.b16 %v2926, %v2925
    %v2939 = vpack.c.b16 %v2928, %v2927
    %v2940 = vpack.c.b16 %v2930, %v2929
    %v2941 = vpack.c.b16 %v2932, %v2931
    %v2942 = vpack.c.b16 %v2934, %v2933
    %2951 = vmatprep.subr.bf16.mxu0 0
    %2952 = vmatpush1.bf16.msra.mxu0 %v2935
    %2953 = vmatprep.subr.bf16.mxu0 0
    %2954 = vmatpush1.bf16.msra.mxu0 %v2936
    %2955 = vmatprep.subr.bf16.mxu0 0
    %2956 = vmatpush1.bf16.msra.mxu0 %v2937
    %2957 = vmatprep.subr.bf16.mxu0 0
    %2958 = vmatpush1.bf16.msra.mxu0 %v2938
    %2959 = vmatprep.subr.bf16.mxu0 0
    %2960 = vmatpush1.bf16.msra.mxu0 %v2939
    %2961 = vmatprep.subr.bf16.mxu0 0
    %2962 = vmatpush1.bf16.msra.mxu0 %v2940
    %2963 = vmatprep.subr.bf16.mxu0 0
    %2964 = vmatpush1.bf16.msra.mxu0 %v2941
    %2965 = vmatprep.subr.bf16.mxu0 0
    %2966 = vmatpush1.bf16.msra.mxu0 %v2942
    %2967 = vmatprep.subr.bf16.mxu0 0
    %2968 = vmatpush1.bf16.msra.mxu0 0
    %2969 = vmatprep.subr.bf16.mxu0 0
    %2970 = vmatpush1.bf16.msra.mxu0 0
    %2971 = vmatprep.subr.bf16.mxu0 0
    %2972 = vmatpush1.bf16.msra.mxu0 0
    %2973 = vmatprep.subr.bf16.mxu0 0
    %2974 = vmatpush1.bf16.msra.mxu0 0
    %2975 = vmatprep.subr.bf16.mxu0 0
    %2976 = vmatpush1.bf16.msra.mxu0 0
    %2977 = vmatprep.subr.bf16.mxu0 0
    %2978 = vmatpush1.bf16.msra.mxu0 0
    %2979 = vmatprep.subr.bf16.mxu0 0
    %2980 = vmatpush1.bf16.msra.mxu0 0
    %2981 = vmatprep.subr.bf16.mxu0 0
    %2982 = vmatpush1.bf16.msra.mxu0 0
    %2983 = vmatprep.mubr.bf16.mxu0 0
    %2984 = vmatmul.mubr.bf16.gmra.mrb[0].mxu0 %v2881
    %v2985 = vpop.f32.mrb[0].mxu0
    %v2986 = vadd.f32 %v2902, %v2985
    %v2987 = vpop.f32.mrb[0].mxu0
    %v2988 = vpop.f32.mrb[0].mxu0
    %v2989 = vadd.f32 %v2902, %v2988
    %v2990 = vpop.f32.mrb[0].mxu0
    %2991 = vdwg.mxu0
    %2992 = vst [vmem:[%s2] sm:$0xff] %v2879
    %2993 = vst [vmem:[%s2 + $0x10] sm:$0xff] %v2880
    %2994 = vst [vmem:[%s2 + $0x8] sm:$0xff] %v2986
    %2995 = vst [vmem:[%s2 + $0x18] sm:$0xff] %v2989
    // Predicated region
    $region18: #{_lambda_.1} parent=1 // pred_check
      _
    $region19: #{_lambda_.1} parent=1 // pred_check_branch
      %2997 = sbr.rel (0) target = $region21
    $region20: #{_lambda_.1} parent=1 // pred_region
      _
    $region21: #{_lambda_.1} parent=1 // pred_fallthru
      _
    // Predicated region
    $region22: #{_lambda_.1} parent=1 // pred_check
      _
    $region23: #{_lambda_.1} parent=1 // pred_check_branch
      %2999 = sbr.rel (0) target = $region25
    $region24: #{_lambda_.1} parent=1 // pred_region
      _
    $region25: #{_lambda_.1} parent=1 // pred_fallthru
      _
    %3000 = vsyncpa [#allocation4], 1
    %3001 = vsyncpa [#allocation6], 1

</llo_original>
